<compile_context>
chip_gen: v6e
topology: v6e:2x2x1
jax: 0.10.0
libtpu: 0.0.40
codegen_flags: <defaults>
</compile_context>

<pallas_src>
import math

import jax
import jax.numpy as jnp
from jax import lax
from jax.experimental import pallas as pl
from jax.experimental.pallas import tpu as pltpu

# ----------------------------- config (small) --------------------------------
VOCAB_SIZE = 100
TYPE_VOCAB_SIZE = 2
MAX_POS = 16
HIDDEN = 32          # bert hidden_size
NUM_HEADS = 4
HEAD_DIM = HIDDEN // NUM_HEADS
FFN_DIM = 64         # intermediate size
NUM_LAYERS = 2
EMBEDDING_DIM = 128  # QueryDocModel default embedding_dim (lane-dense output)
SEQ = 8
BATCH = 2
LN_EPS = 1e-12       # BERT layer_norm_eps
NEG_BIAS = -10000.0  # HF BERT additive attention-mask value


# ------------------------------ fused encoder kernel --------------------------
def _encoder_kernel(we_ref, mask_ref, pos_ref, type_ref,
                    eg_ref, eb_ref,
                    wqkv_ref, bqkv_ref, wo_ref, bo_ref,
                    ln1g_ref, ln1b_ref,
                    w1_ref, b1_ref, w2_ref, b2_ref,
                    ln2g_ref, ln2b_ref,
                    fcw_ref, fcb_ref,
                    out_ref):
    """Single grid step: ALL sequences through the whole encoder + fc head."""
    H, DH, NH, S = HIDDEN, HEAD_DIM, NUM_HEADS, SEQ
    R = we_ref.shape[0]          # total rows = num_sequences * SEQ
    NB = R // S                  # number of sequences in this step

    def layernorm(h, g, b):
        mu = jnp.mean(h, axis=-1, keepdims=True)
        var = jnp.mean((h - mu) * (h - mu), axis=-1, keepdims=True)
        return (h - mu) * lax.rsqrt(var + LN_EPS) * g + b

    def mm(a, w_bf16):
        # bf16 x bf16 MXU matmul, f32 accumulation.
        return jnp.dot(a.astype(jnp.bfloat16), w_bf16,
                       preferred_element_type=jnp.float32)

    # ---- embeddings: word (gathered in XLA) + position + token-type, then LN ----
    pos_type = pos_ref[0:S, :] + type_ref[0:1, :]                  # [S, H]
    x = we_ref[...] + jnp.concatenate([pos_type] * NB, axis=0)     # [R, H]
    x = layernorm(x, eg_ref[...], eb_ref[...])

    # ---- hoisted constants (built ONCE, reused across heads / layers) --------
    # Block-diagonal additive attention bias: a row attends only to un-masked
    # keys of its own sequence; everything else gets -10000 (exp -> exactly 0).
    row_pos = lax.broadcasted_iota(jnp.int32, (R, R), 0)
    col_pos = lax.broadcasted_iota(jnp.int32, (R, R), 1)
    same_seq = None
    for n in range(NB):
        lo, hi = n * S, (n + 1) * S
        blk = ((row_pos >= lo) & (row_pos < hi) &
               (col_pos >= lo) & (col_pos < hi))
        same_seq = blk if same_seq is None else (same_seq | blk)
    key_ok = mask_ref[...] > 0                                     # [1, R]
    bias2d = jnp.where(same_seq & key_ok, 0.0, NEG_BIAS).astype(jnp.float32)

    # Per-head lane masks (avoid 8-lane-wide slices of qkv).
    lane = lax.broadcasted_iota(jnp.int32, (R, H), 1)
    head_masks = [((lane >= h * DH) & (lane < (h + 1) * DH)).astype(jnp.float32)
                  for h in range(NH)]

    # CLS-row selection matrix: sel[n, r] = 1 iff r == n * S.
    sel_col = lax.broadcasted_iota(jnp.int32, (NB, R), 1)
    sel_row = lax.broadcasted_iota(jnp.int32, (NB, R), 0)
    sel = (sel_col == sel_row * S).astype(jnp.bfloat16)            # [NB, R]

    for l in range(NUM_LAYERS):
        # ---- self-attention (fused QKV; 1/sqrt(DH) already folded into Wq) ----
        qkv = mm(x, wqkv_ref[l]) + bqkv_ref[l]                     # [R, 3H] f32
        q_all = qkv[:, 0:H]
        k_all = qkv[:, H:2 * H]
        v_all = qkv[:, 2 * H:3 * H]
        k_bf = k_all.astype(jnp.bfloat16)

        attn = jnp.zeros((R, H), jnp.float32)
        for hm in head_masks:
            # zero out non-head lanes of q -> contraction over full H is exactly
            # this head's DH-dim dot product (no narrow lane slices needed).
            qh = (q_all * hm).astype(jnp.bfloat16)
            s = lax.dot_general(qh, k_bf, (((1,), (1,)), ((), ())),
                                preferred_element_type=jnp.float32)  # [R, R]
            s = s + bias2d
            m = jnp.max(s, axis=-1, keepdims=True)
            p = jnp.exp(s - m)
            p = p * pl.reciprocal(jnp.sum(p, axis=-1, keepdims=True), approx=True)
            vh = (v_all * hm).astype(jnp.bfloat16)
            # context lands only in this head's lanes -> sum == concat over heads
            attn = attn + jnp.dot(p.astype(jnp.bfloat16), vh,
                                  preferred_element_type=jnp.float32)  # [R, H]
        attn = mm(attn, wo_ref[l]) + bo_ref[l]        # merged output projection
        x = layernorm(attn + x, ln1g_ref[l], ln1b_ref[l])

        # ---- feed-forward (erf GELU, matching HF BERT) ----
        hdn = mm(x, w1_ref[l]) + b1_ref[l]                          # [R, F]
        hdn = 0.5 * hdn * (1.0 + lax.erf(hdn * (1.0 / math.sqrt(2.0))))
        ffn = mm(hdn, w2_ref[l]) + b2_ref[l]                        # [R, H]
        x = layernorm(ffn + x, ln2g_ref[l], ln2b_ref[l])

    # ---- CLS rows only -> fc head; single lane-dense [NB, E] store ----
    cls = jnp.dot(sel, x.astype(jnp.bfloat16),
                  preferred_element_type=jnp.float32)               # [NB, H]
    out_ref[...] = mm(cls, fcw_ref[...]) + fcb_ref[...]             # [NB, E]


def encoder_forward(params, we, mask):
    """we: [R, H] f32 word embeddings (R = num_seqs*SEQ), mask: [1, R] int32
    -> [R//SEQ, EMBEDDING_DIM] f32 CLS embeddings."""
    R, H = we.shape
    NB = R // SEQ
    L, F, E = NUM_LAYERS, FFN_DIM, EMBEDDING_DIM

    def full(shape):
        n = len(shape)
        # full-array block, constant index -> DMA'd once, resident in VMEM.
        return pl.BlockSpec(shape, lambda i, _n=n: (0,) * _n)

    grid_spec = pltpu.PrefetchScalarGridSpec(
        num_scalar_prefetch=0,
        grid=(1,),                                   # whole batch in one step
        in_specs=[
            full((R, H)),                            # word embeddings (flattened)
            full((1, R)),                            # int key mask
            full((MAX_POS, H)), full((TYPE_VOCAB_SIZE, H)),
            full((1, H)), full((1, H)),              # embedding LN
            full((L, H, 3 * H)), full((L, 1, 3 * H)),    # fused QKV
            full((L, H, H)), full((L, 1, H)),            # attn out proj (merged)
            full((L, 1, H)), full((L, 1, H)),            # ln1
            full((L, H, F)), full((L, 1, F)),            # ffn up
            full((L, F, H)), full((L, 1, H)),            # ffn down
            full((L, 1, H)), full((L, 1, H)),            # ln2
            full((H, E)), full((1, E)),                  # fc head
        ],
        out_specs=pl.BlockSpec((NB, E), lambda i: (0, 0)),
    )

    return pl.pallas_call(
        _encoder_kernel,
        out_shape=jax.ShapeDtypeStruct((NB, E), jnp.float32),
        grid_spec=grid_spec,
        compiler_params=pltpu.CompilerParams(
            dimension_semantics=("arbitrary",)),
    )(we, mask,
      params["pos_emb"], params["type_emb"],
      params["emb_ln_g"], params["emb_ln_b"],
      params["wqkv"], params["bqkv"], params["wo"], params["bo"],
      params["ln1_g"], params["ln1_b"],
      params["w1"], params["b1"], params["w2"], params["b2"],
      params["ln2_g"], params["ln2_b"],
      params["fc_w"], params["fc_b"])


# ------------------------------ parameter init --------------------------------
def init_params(key):
    def normal(k, shape, scale=0.02):
        return scale * jax.random.normal(k, shape, dtype=jnp.float32)

    keys = iter(jax.random.split(key, 64))
    L, H, F, E = NUM_LAYERS, HIDDEN, FFN_DIM, EMBEDDING_DIM
    attn_scale = 1.0 / math.sqrt(HEAD_DIM)

    # fused QKV weight [L, H, 3H]; attention scale folded into the Wq block
    # (exact here because the Q bias is zero; real weights would also need the
    #  Q-bias slice scaled).
    wq = normal(next(keys), (L, H, H)) * attn_scale
    wk = normal(next(keys), (L, H, H))
    wv = normal(next(keys), (L, H, H))
    wqkv = jnp.concatenate([wq, wk, wv], axis=-1)

    return {
        "word_emb": normal(next(keys), (VOCAB_SIZE, H)),
        "pos_emb": normal(next(keys), (MAX_POS, H)),
        "type_emb": normal(next(keys), (TYPE_VOCAB_SIZE, H)),
        "emb_ln_g": jnp.ones((1, H), jnp.float32),
        "emb_ln_b": jnp.zeros((1, H), jnp.float32),
        "wqkv": wqkv.astype(jnp.bfloat16),
        "bqkv": jnp.zeros((L, 1, 3 * H), jnp.float32),
        "wo": normal(next(keys), (L, H, H)).astype(jnp.bfloat16),   # merged proj
        "bo": jnp.zeros((L, 1, H), jnp.float32),
        "ln1_g": jnp.ones((L, 1, H), jnp.float32),
        "ln1_b": jnp.zeros((L, 1, H), jnp.float32),
        "w1": normal(next(keys), (L, H, F)).astype(jnp.bfloat16),
        "b1": jnp.zeros((L, 1, F), jnp.float32),
        "w2": normal(next(keys), (L, F, H)).astype(jnp.bfloat16),
        "b2": jnp.zeros((L, 1, H), jnp.float32),
        "ln2_g": jnp.ones((L, 1, H), jnp.float32),
        "ln2_b": jnp.zeros((L, 1, H), jnp.float32),
        # fc = nn.Linear(hidden_size, embedding_dim), stored as weight.T [H, E]
        "fc_w": normal(next(keys), (H, E)).astype(jnp.bfloat16),
        "fc_b": jnp.zeros((1, E), jnp.float32),
    }


# ------------------------------ QueryDocModel ----------------------------------
def query_doc_model(params, query_input_ids, query_attention_mask,
                    doc_input_ids, doc_attention_mask):
    B, S = query_input_ids.shape
    # shared encoder -> run query and doc together as one 2B batch
    ids = jnp.concatenate([query_input_ids, doc_input_ids], axis=0)        # [2B, S]
    mask = jnp.concatenate([query_attention_mask, doc_attention_mask], 0)  # [2B, S]

    # Only the data-dependent word-embedding gather stays in XLA; the
    # pos/type-embedding adds and mask->bias conversion happen in the kernel.
    we = params["word_emb"][ids].reshape(2 * B * S, HIDDEN)                # [R, H]
    mask_flat = mask.reshape(1, 2 * B * S).astype(jnp.int32)               # [1, R]

    out = encoder_forward(params, we, mask_flat)                           # [2B, E]
    return out[:B], out[B:]
    # TODO(synk): HF BertModel also exposes a pooler output; unused by QueryDocModel.


# ---------------------------------- main ---------------------------------------
if __name__ == "__main__":
    key = jax.random.PRNGKey(0)
    k_param, k_q, k_d = jax.random.split(key, 3)

    params = init_params(k_param)

    query_input_ids = jax.random.randint(k_q, (BATCH, SEQ), 0, VOCAB_SIZE, dtype=jnp.int32)
    doc_input_ids = jax.random.randint(k_d, (BATCH, SEQ), 0, VOCAB_SIZE, dtype=jnp.int32)
    # deterministic masks: query uses 6 of 8 tokens, doc uses all 8
    query_attention_mask = jnp.broadcast_to(
        (jnp.arange(SEQ)[None, :] < 6).astype(jnp.int32), (BATCH, SEQ))
    doc_attention_mask = jnp.ones((BATCH, SEQ), jnp.int32)

    fwd = jax.jit(query_doc_model)
    q_emb, d_emb = fwd(params, query_input_ids, query_attention_mask,
                       doc_input_ids, doc_attention_mask)
    q_emb = jax.block_until_ready(q_emb)
    d_emb = jax.block_until_ready(d_emb)

    assert q_emb.shape == (BATCH, EMBEDDING_DIM) and d_emb.shape == (BATCH, EMBEDDING_DIM)
    assert q_emb.dtype == jnp.float32 and d_emb.dtype == jnp.float32
    assert bool(jnp.all(jnp.isfinite(q_emb))) and bool(jnp.all(jnp.isfinite(d_emb)))
    print("KERNEL_OK")
</pallas_src>

<mosaic_0001>
module attributes {stable_mosaic.version = 11 : i64} {
  func.func @_encoder_kernel(%arg0: i32, %arg1: memref<32x32xf32, #tpu.memory_space<vmem>>, %arg2: memref<1x32xi32, #tpu.memory_space<vmem>>, %arg3: memref<16x32xf32, #tpu.memory_space<vmem>>, %arg4: memref<2x32xf32, #tpu.memory_space<vmem>>, %arg5: memref<1x32xf32, #tpu.memory_space<vmem>>, %arg6: memref<1x32xf32, #tpu.memory_space<vmem>>, %arg7: memref<2x32x96xbf16, #tpu.memory_space<vmem>>, %arg8: memref<2x1x96xf32, #tpu.memory_space<vmem>>, %arg9: memref<2x32x32xbf16, #tpu.memory_space<vmem>>, %arg10: memref<2x1x32xf32, #tpu.memory_space<vmem>>, %arg11: memref<2x1x32xf32, #tpu.memory_space<vmem>>, %arg12: memref<2x1x32xf32, #tpu.memory_space<vmem>>, %arg13: memref<2x32x64xbf16, #tpu.memory_space<vmem>>, %arg14: memref<2x1x64xf32, #tpu.memory_space<vmem>>, %arg15: memref<2x64x32xbf16, #tpu.memory_space<vmem>>, %arg16: memref<2x1x32xf32, #tpu.memory_space<vmem>>, %arg17: memref<2x1x32xf32, #tpu.memory_space<vmem>>, %arg18: memref<2x1x32xf32, #tpu.memory_space<vmem>>, %arg19: memref<32x128xbf16, #tpu.memory_space<vmem>>, %arg20: memref<1x128xf32, #tpu.memory_space<vmem>>, %arg21: memref<4x128xf32, #tpu.memory_space<vmem>>) attributes {dimension_semantics = [#tpu.dimension_semantics<arbitrary>], iteration_bounds = array<i64: 1>, scalar_prefetch = 0 : i64, scratch_operands = 0 : i64, tpu.core_type = #tpu.core_type<tc>, window_params = [{pipeline_mode = #tpu.pipeline_mode<synchronous>, transform_indices = @transform_0, window_bounds = array<i64: 32, 32>}, {pipeline_mode = #tpu.pipeline_mode<synchronous>, transform_indices = @transform_1, window_bounds = array<i64: 1, 32>}, {pipeline_mode = #tpu.pipeline_mode<synchronous>, transform_indices = @transform_2, window_bounds = array<i64: 16, 32>}, {pipeline_mode = #tpu.pipeline_mode<synchronous>, transform_indices = @transform_3, window_bounds = array<i64: 2, 32>}, {pipeline_mode = #tpu.pipeline_mode<synchronous>, transform_indices = @transform_4, window_bounds = array<i64: 1, 32>}, {pipeline_mode = #tpu.pipeline_mode<synchronous>, transform_indices = @transform_5, window_bounds = array<i64: 1, 32>}, {pipeline_mode = #tpu.pipeline_mode<synchronous>, transform_indices = @transform_6, window_bounds = array<i64: 2, 32, 96>}, {pipeline_mode = #tpu.pipeline_mode<synchronous>, transform_indices = @transform_7, window_bounds = array<i64: 2, 1, 96>}, {pipeline_mode = #tpu.pipeline_mode<synchronous>, transform_indices = @transform_8, window_bounds = array<i64: 2, 32, 32>}, {pipeline_mode = #tpu.pipeline_mode<synchronous>, transform_indices = @transform_9, window_bounds = array<i64: 2, 1, 32>}, {pipeline_mode = #tpu.pipeline_mode<synchronous>, transform_indices = @transform_10, window_bounds = array<i64: 2, 1, 32>}, {pipeline_mode = #tpu.pipeline_mode<synchronous>, transform_indices = @transform_11, window_bounds = array<i64: 2, 1, 32>}, {pipeline_mode = #tpu.pipeline_mode<synchronous>, transform_indices = @transform_12, window_bounds = array<i64: 2, 32, 64>}, {pipeline_mode = #tpu.pipeline_mode<synchronous>, transform_indices = @transform_13, window_bounds = array<i64: 2, 1, 64>}, {pipeline_mode = #tpu.pipeline_mode<synchronous>, transform_indices = @transform_14, window_bounds = array<i64: 2, 64, 32>}, {pipeline_mode = #tpu.pipeline_mode<synchronous>, transform_indices = @transform_15, window_bounds = array<i64: 2, 1, 32>}, {pipeline_mode = #tpu.pipeline_mode<synchronous>, transform_indices = @transform_16, window_bounds = array<i64: 2, 1, 32>}, {pipeline_mode = #tpu.pipeline_mode<synchronous>, transform_indices = @transform_17, window_bounds = array<i64: 2, 1, 32>}, {pipeline_mode = #tpu.pipeline_mode<synchronous>, transform_indices = @transform_18, window_bounds = array<i64: 32, 128>}, {pipeline_mode = #tpu.pipeline_mode<synchronous>, transform_indices = @transform_19, window_bounds = array<i64: 1, 128>}, {pipeline_mode = #tpu.pipeline_mode<synchronous>, transform_indices = @transform_20, window_bounds = array<i64: 4, 128>}]} {
    %c0 = arith.constant 0 : index
    %c0_0 = arith.constant 0 : index
    %0 = vector.load %arg3[%c0, %c0_0] : memref<16x32xf32, #tpu.memory_space<vmem>>, vector<8x32xf32>
    %c0_1 = arith.constant 0 : index
    %c0_2 = arith.constant 0 : index
    %1 = vector.load %arg4[%c0_1, %c0_2] : memref<2x32xf32, #tpu.memory_space<vmem>>, vector<1x32xf32>
    %2 = vector.broadcast %1 : vector<1x32xf32> to vector<8x32xf32>
    %3 = arith.addf %0, %2 : vector<8x32xf32>
    %c0_3 = arith.constant 0 : index
    %c0_4 = arith.constant 0 : index
    %4 = vector.load %arg1[%c0_3, %c0_4] : memref<32x32xf32, #tpu.memory_space<vmem>>, vector<32x32xf32>
    %5 = tpu.concatenate %3, %3, %3, %3 in 0 : vector<8x32xf32>, vector<8x32xf32>, vector<8x32xf32>, vector<8x32xf32> -> vector<32x32xf32>
    %6 = arith.addf %4, %5 : vector<32x32xf32>
    %c0_5 = arith.constant 0 : index
    %c0_6 = arith.constant 0 : index
    %7 = vector.load %arg5[%c0_5, %c0_6] : memref<1x32xf32, #tpu.memory_space<vmem>>, vector<1x32xf32>
    %c0_7 = arith.constant 0 : index
    %c0_8 = arith.constant 0 : index
    %8 = vector.load %arg6[%c0_7, %c0_8] : memref<1x32xf32, #tpu.memory_space<vmem>>, vector<1x32xf32>
    %cst = arith.constant dense<0.000000e+00> : vector<32xf32>
    %9 = vector.multi_reduction <add>, %6, %cst [1] : vector<32x32xf32> to vector<32xf32>
    %10 = vector.shape_cast %9 : vector<32xf32> to vector<32x1xf32>
    %cst_9 = arith.constant 3.200000e+01 : f32
    %11 = vector.broadcast %cst_9 : f32 to vector<32x1xf32>
    %12 = arith.divf %10, %11 : vector<32x1xf32>
    %13 = vector.broadcast %12 : vector<32x1xf32> to vector<32x32xf32>
    %14 = arith.subf %6, %13 : vector<32x32xf32>
    %15 = vector.broadcast %12 : vector<32x1xf32> to vector<32x32xf32>
    %16 = arith.subf %6, %15 : vector<32x32xf32>
    %17 = arith.mulf %14, %16 : vector<32x32xf32>
    %cst_10 = arith.constant dense<0.000000e+00> : vector<32xf32>
    %18 = vector.multi_reduction <add>, %17, %cst_10 [1] : vector<32x32xf32> to vector<32xf32>
    %19 = vector.shape_cast %18 : vector<32xf32> to vector<32x1xf32>
    %cst_11 = arith.constant 3.200000e+01 : f32
    %20 = vector.broadcast %cst_11 : f32 to vector<32x1xf32>
    %21 = arith.divf %19, %20 : vector<32x1xf32>
    %22 = vector.broadcast %12 : vector<32x1xf32> to vector<32x32xf32>
    %23 = arith.subf %6, %22 : vector<32x32xf32>
    %cst_12 = arith.constant 9.99999996E-13 : f32
    %24 = vector.broadcast %cst_12 : f32 to vector<32x1xf32>
    %25 = arith.addf %21, %24 : vector<32x1xf32>
    %26 = math.rsqrt %25 : vector<32x1xf32>
    %27 = vector.broadcast %26 : vector<32x1xf32> to vector<32x32xf32>
    %28 = arith.mulf %23, %27 : vector<32x32xf32>
    %29 = vector.broadcast %7 : vector<1x32xf32> to vector<32x32xf32>
    %30 = arith.mulf %28, %29 : vector<32x32xf32>
    %31 = vector.broadcast %8 : vector<1x32xf32> to vector<32x32xf32>
    %32 = arith.addf %30, %31 : vector<32x32xf32>
    %33 = tpu.iota {dimensions = array<i32: 0>} : vector<32x32xi32>
    %34 = tpu.iota {dimensions = array<i32: 1>} : vector<32x32xi32>
    %c0_i32 = arith.constant 0 : i32
    %35 = vector.broadcast %c0_i32 : i32 to vector<32x32xi32>
    %36 = arith.cmpi sge, %33, %35 : vector<32x32xi32>
    %c8_i32 = arith.constant 8 : i32
    %37 = vector.broadcast %c8_i32 : i32 to vector<32x32xi32>
    %38 = arith.cmpi slt, %33, %37 : vector<32x32xi32>
    %39 = arith.andi %36, %38 : vector<32x32xi1>
    %c0_i32_13 = arith.constant 0 : i32
    %40 = vector.broadcast %c0_i32_13 : i32 to vector<32x32xi32>
    %41 = arith.cmpi sge, %34, %40 : vector<32x32xi32>
    %42 = arith.andi %39, %41 : vector<32x32xi1>
    %c8_i32_14 = arith.constant 8 : i32
    %43 = vector.broadcast %c8_i32_14 : i32 to vector<32x32xi32>
    %44 = arith.cmpi slt, %34, %43 : vector<32x32xi32>
    %45 = arith.andi %42, %44 : vector<32x32xi1>
    %c8_i32_15 = arith.constant 8 : i32
    %46 = vector.broadcast %c8_i32_15 : i32 to vector<32x32xi32>
    %47 = arith.cmpi sge, %33, %46 : vector<32x32xi32>
    %c16_i32 = arith.constant 16 : i32
    %48 = vector.broadcast %c16_i32 : i32 to vector<32x32xi32>
    %49 = arith.cmpi slt, %33, %48 : vector<32x32xi32>
    %50 = arith.andi %47, %49 : vector<32x32xi1>
    %c8_i32_16 = arith.constant 8 : i32
    %51 = vector.broadcast %c8_i32_16 : i32 to vector<32x32xi32>
    %52 = arith.cmpi sge, %34, %51 : vector<32x32xi32>
    %53 = arith.andi %50, %52 : vector<32x32xi1>
    %c16_i32_17 = arith.constant 16 : i32
    %54 = vector.broadcast %c16_i32_17 : i32 to vector<32x32xi32>
    %55 = arith.cmpi slt, %34, %54 : vector<32x32xi32>
    %56 = arith.andi %53, %55 : vector<32x32xi1>
    %57 = arith.ori %45, %56 : vector<32x32xi1>
    %c16_i32_18 = arith.constant 16 : i32
    %58 = vector.broadcast %c16_i32_18 : i32 to vector<32x32xi32>
    %59 = arith.cmpi sge, %33, %58 : vector<32x32xi32>
    %c24_i32 = arith.constant 24 : i32
    %60 = vector.broadcast %c24_i32 : i32 to vector<32x32xi32>
    %61 = arith.cmpi slt, %33, %60 : vector<32x32xi32>
    %62 = arith.andi %59, %61 : vector<32x32xi1>
    %c16_i32_19 = arith.constant 16 : i32
    %63 = vector.broadcast %c16_i32_19 : i32 to vector<32x32xi32>
    %64 = arith.cmpi sge, %34, %63 : vector<32x32xi32>
    %65 = arith.andi %62, %64 : vector<32x32xi1>
    %c24_i32_20 = arith.constant 24 : i32
    %66 = vector.broadcast %c24_i32_20 : i32 to vector<32x32xi32>
    %67 = arith.cmpi slt, %34, %66 : vector<32x32xi32>
    %68 = arith.andi %65, %67 : vector<32x32xi1>
    %69 = arith.ori %57, %68 : vector<32x32xi1>
    %c24_i32_21 = arith.constant 24 : i32
    %70 = vector.broadcast %c24_i32_21 : i32 to vector<32x32xi32>
    %71 = arith.cmpi sge, %33, %70 : vector<32x32xi32>
    %c32_i32 = arith.constant 32 : i32
    %72 = vector.broadcast %c32_i32 : i32 to vector<32x32xi32>
    %73 = arith.cmpi slt, %33, %72 : vector<32x32xi32>
    %74 = arith.andi %71, %73 : vector<32x32xi1>
    %c24_i32_22 = arith.constant 24 : i32
    %75 = vector.broadcast %c24_i32_22 : i32 to vector<32x32xi32>
    %76 = arith.cmpi sge, %34, %75 : vector<32x32xi32>
    %77 = arith.andi %74, %76 : vector<32x32xi1>
    %c32_i32_23 = arith.constant 32 : i32
    %78 = vector.broadcast %c32_i32_23 : i32 to vector<32x32xi32>
    %79 = arith.cmpi slt, %34, %78 : vector<32x32xi32>
    %80 = arith.andi %77, %79 : vector<32x32xi1>
    %81 = arith.ori %69, %80 : vector<32x32xi1>
    %c0_24 = arith.constant 0 : index
    %c0_25 = arith.constant 0 : index
    %82 = vector.load %arg2[%c0_24, %c0_25] : memref<1x32xi32, #tpu.memory_space<vmem>>, vector<1x32xi32>
    %c0_i32_26 = arith.constant 0 : i32
    %83 = vector.broadcast %c0_i32_26 : i32 to vector<1x32xi32>
    %84 = arith.cmpi sgt, %82, %83 : vector<1x32xi32>
    %85 = vector.broadcast %84 : vector<1x32xi1> to vector<32x32xi1>
    %86 = arith.andi %81, %85 : vector<32x32xi1>
    %cst_27 = arith.constant 0.000000e+00 : f32
    %cst_28 = arith.constant -1.000000e+04 : f32
    %87 = vector.broadcast %cst_27 : f32 to vector<32x32xf32>
    %88 = vector.broadcast %cst_28 : f32 to vector<32x32xf32>
    %89 = arith.select %86, %87, %88 : vector<32x32xi1>, vector<32x32xf32>
    %90 = tpu.iota {dimensions = array<i32: 1>} : vector<32x32xi32>
    %c0_i32_29 = arith.constant 0 : i32
    %91 = vector.broadcast %c0_i32_29 : i32 to vector<32x32xi32>
    %92 = arith.cmpi sge, %90, %91 : vector<32x32xi32>
    %c8_i32_30 = arith.constant 8 : i32
    %93 = vector.broadcast %c8_i32_30 : i32 to vector<32x32xi32>
    %94 = arith.cmpi slt, %90, %93 : vector<32x32xi32>
    %95 = arith.andi %92, %94 : vector<32x32xi1>
    %96 = arith.extui %95 : vector<32x32xi1> to vector<32x32xi32>
    %97 = arith.sitofp %96 : vector<32x32xi32> to vector<32x32xf32>
    %c8_i32_31 = arith.constant 8 : i32
    %98 = vector.broadcast %c8_i32_31 : i32 to vector<32x32xi32>
    %99 = arith.cmpi sge, %90, %98 : vector<32x32xi32>
    %c16_i32_32 = arith.constant 16 : i32
    %100 = vector.broadcast %c16_i32_32 : i32 to vector<32x32xi32>
    %101 = arith.cmpi slt, %90, %100 : vector<32x32xi32>
    %102 = arith.andi %99, %101 : vector<32x32xi1>
    %103 = arith.extui %102 : vector<32x32xi1> to vector<32x32xi32>
    %104 = arith.sitofp %103 : vector<32x32xi32> to vector<32x32xf32>
    %c16_i32_33 = arith.constant 16 : i32
    %105 = vector.broadcast %c16_i32_33 : i32 to vector<32x32xi32>
    %106 = arith.cmpi sge, %90, %105 : vector<32x32xi32>
    %c24_i32_34 = arith.constant 24 : i32
    %107 = vector.broadcast %c24_i32_34 : i32 to vector<32x32xi32>
    %108 = arith.cmpi slt, %90, %107 : vector<32x32xi32>
    %109 = arith.andi %106, %108 : vector<32x32xi1>
    %110 = arith.extui %109 : vector<32x32xi1> to vector<32x32xi32>
    %111 = arith.sitofp %110 : vector<32x32xi32> to vector<32x32xf32>
    %c24_i32_35 = arith.constant 24 : i32
    %112 = vector.broadcast %c24_i32_35 : i32 to vector<32x32xi32>
    %113 = arith.cmpi sge, %90, %112 : vector<32x32xi32>
    %c32_i32_36 = arith.constant 32 : i32
    %114 = vector.broadcast %c32_i32_36 : i32 to vector<32x32xi32>
    %115 = arith.cmpi slt, %90, %114 : vector<32x32xi32>
    %116 = arith.andi %113, %115 : vector<32x32xi1>
    %117 = arith.extui %116 : vector<32x32xi1> to vector<32x32xi32>
    %118 = arith.sitofp %117 : vector<32x32xi32> to vector<32x32xf32>
    %119 = tpu.iota {dimensions = array<i32: 1>} : vector<4x32xi32>
    %120 = tpu.iota {dimensions = array<i32: 0>} : vector<4x32xi32>
    %c8_i32_37 = arith.constant 8 : i32
    %121 = vector.broadcast %c8_i32_37 : i32 to vector<4x32xi32>
    %122 = arith.muli %120, %121 : vector<4x32xi32>
    %123 = arith.cmpi eq, %119, %122 : vector<4x32xi32>
    %124 = arith.extui %123 : vector<4x32xi1> to vector<4x32xi32>
    %125 = arith.sitofp %124 : vector<4x32xi32> to vector<4x32xf32>
    %126 = arith.truncf %125 : vector<4x32xf32> to vector<4x32xbf16>
    %c0_38 = arith.constant 0 : index
    %c0_39 = arith.constant 0 : index
    %c0_40 = arith.constant 0 : index
    %127 = vector.load %arg7[%c0_38, %c0_39, %c0_40] : memref<2x32x96xbf16, #tpu.memory_space<vmem>>, vector<1x32x96xbf16>
    %128 = vector.shape_cast %127 : vector<1x32x96xbf16> to vector<32x96xbf16>
    %129 = arith.truncf %32 : vector<32x32xf32> to vector<32x32xbf16>
    %cst_41 = arith.constant dense<0.000000e+00> : vector<32x96xf32>
    %130 = tpu.matmul %129, %128, %cst_41 {dimension_numbers = #tpu.dot_dimension_numbers<[1], [0], [0], [1], [0, 0, 1, 1], [], []>} : vector<32x32xbf16>, vector<32x96xbf16>, vector<32x96xf32> -> vector<32x96xf32>
    %c0_42 = arith.constant 0 : index
    %c0_43 = arith.constant 0 : index
    %c0_44 = arith.constant 0 : index
    %131 = vector.load %arg8[%c0_42, %c0_43, %c0_44] : memref<2x1x96xf32, #tpu.memory_space<vmem>>, vector<1x1x96xf32>
    %132 = vector.shape_cast %131 : vector<1x1x96xf32> to vector<1x96xf32>
    %133 = vector.broadcast %132 : vector<1x96xf32> to vector<32x96xf32>
    %134 = arith.addf %130, %133 : vector<32x96xf32>
    %135 = vector.extract_strided_slice %134 {offsets = [0, 0], sizes = [32, 32], strides = [1, 1]} : vector<32x96xf32> to vector<32x32xf32>
    %136 = vector.extract_strided_slice %134 {offsets = [0, 32], sizes = [32, 32], strides = [1, 1]} : vector<32x96xf32> to vector<32x32xf32>
    %137 = vector.extract_strided_slice %134 {offsets = [0, 64], sizes = [32, 32], strides = [1, 1]} : vector<32x96xf32> to vector<32x32xf32>
    %138 = arith.truncf %136 : vector<32x32xf32> to vector<32x32xbf16>
    %cst_45 = arith.constant 0.000000e+00 : f32
    %139 = vector.broadcast %cst_45 : f32 to vector<32x32xf32>
    %140 = arith.mulf %135, %97 : vector<32x32xf32>
    %141 = arith.truncf %140 : vector<32x32xf32> to vector<32x32xbf16>
    %cst_46 = arith.constant dense<0.000000e+00> : vector<32x32xf32>
    %142 = tpu.matmul %141, %138, %cst_46 {dimension_numbers = #tpu.dot_dimension_numbers<[1], [1], [0], [0], [0, 0, 1, 0], [], []>} : vector<32x32xbf16>, vector<32x32xbf16>, vector<32x32xf32> -> vector<32x32xf32>
    %143 = arith.addf %142, %89 : vector<32x32xf32>
    %cst_47 = arith.constant dense<0xFF800000> : vector<32xf32>
    %144 = vector.multi_reduction <maximumf>, %143, %cst_47 [1] : vector<32x32xf32> to vector<32xf32>
    %145 = vector.shape_cast %144 : vector<32xf32> to vector<32x1xf32>
    %146 = vector.broadcast %145 : vector<32x1xf32> to vector<32x32xf32>
    %147 = arith.subf %143, %146 : vector<32x32xf32>
    %148 = math.exp %147 : vector<32x32xf32>
    %cst_48 = arith.constant dense<0.000000e+00> : vector<32xf32>
    %149 = vector.multi_reduction <add>, %148, %cst_48 [1] : vector<32x32xf32> to vector<32xf32>
    %150 = vector.shape_cast %149 : vector<32xf32> to vector<32x1xf32>
    %151 = tpu.reciprocal %150 {approx = true} : vector<32x1xf32> -> vector<32x1xf32>
    %152 = vector.broadcast %151 : vector<32x1xf32> to vector<32x32xf32>
    %153 = arith.mulf %148, %152 : vector<32x32xf32>
    %154 = arith.mulf %137, %97 : vector<32x32xf32>
    %155 = arith.truncf %154 : vector<32x32xf32> to vector<32x32xbf16>
    %156 = arith.truncf %153 : vector<32x32xf32> to vector<32x32xbf16>
    %cst_49 = arith.constant dense<0.000000e+00> : vector<32x32xf32>
    %157 = tpu.matmul %156, %155, %cst_49 {dimension_numbers = #tpu.dot_dimension_numbers<[1], [0], [0], [1], [0, 0, 1, 1], [], []>} : vector<32x32xbf16>, vector<32x32xbf16>, vector<32x32xf32> -> vector<32x32xf32>
    %158 = arith.addf %139, %157 : vector<32x32xf32>
    %159 = arith.mulf %135, %104 : vector<32x32xf32>
    %160 = arith.truncf %159 : vector<32x32xf32> to vector<32x32xbf16>
    %cst_50 = arith.constant dense<0.000000e+00> : vector<32x32xf32>
    %161 = tpu.matmul %160, %138, %cst_50 {dimension_numbers = #tpu.dot_dimension_numbers<[1], [1], [0], [0], [0, 0, 1, 0], [], []>} : vector<32x32xbf16>, vector<32x32xbf16>, vector<32x32xf32> -> vector<32x32xf32>
    %162 = arith.addf %161, %89 : vector<32x32xf32>
    %cst_51 = arith.constant dense<0xFF800000> : vector<32xf32>
    %163 = vector.multi_reduction <maximumf>, %162, %cst_51 [1] : vector<32x32xf32> to vector<32xf32>
    %164 = vector.shape_cast %163 : vector<32xf32> to vector<32x1xf32>
    %165 = vector.broadcast %164 : vector<32x1xf32> to vector<32x32xf32>
    %166 = arith.subf %162, %165 : vector<32x32xf32>
    %167 = math.exp %166 : vector<32x32xf32>
    %cst_52 = arith.constant dense<0.000000e+00> : vector<32xf32>
    %168 = vector.multi_reduction <add>, %167, %cst_52 [1] : vector<32x32xf32> to vector<32xf32>
    %169 = vector.shape_cast %168 : vector<32xf32> to vector<32x1xf32>
    %170 = tpu.reciprocal %169 {approx = true} : vector<32x1xf32> -> vector<32x1xf32>
    %171 = vector.broadcast %170 : vector<32x1xf32> to vector<32x32xf32>
    %172 = arith.mulf %167, %171 : vector<32x32xf32>
    %173 = arith.mulf %137, %104 : vector<32x32xf32>
    %174 = arith.truncf %173 : vector<32x32xf32> to vector<32x32xbf16>
    %175 = arith.truncf %172 : vector<32x32xf32> to vector<32x32xbf16>
    %cst_53 = arith.constant dense<0.000000e+00> : vector<32x32xf32>
    %176 = tpu.matmul %175, %174, %cst_53 {dimension_numbers = #tpu.dot_dimension_numbers<[1], [0], [0], [1], [0, 0, 1, 1], [], []>} : vector<32x32xbf16>, vector<32x32xbf16>, vector<32x32xf32> -> vector<32x32xf32>
    %177 = arith.addf %158, %176 : vector<32x32xf32>
    %178 = arith.mulf %135, %111 : vector<32x32xf32>
    %179 = arith.truncf %178 : vector<32x32xf32> to vector<32x32xbf16>
    %cst_54 = arith.constant dense<0.000000e+00> : vector<32x32xf32>
    %180 = tpu.matmul %179, %138, %cst_54 {dimension_numbers = #tpu.dot_dimension_numbers<[1], [1], [0], [0], [0, 0, 1, 0], [], []>} : vector<32x32xbf16>, vector<32x32xbf16>, vector<32x32xf32> -> vector<32x32xf32>
    %181 = arith.addf %180, %89 : vector<32x32xf32>
    %cst_55 = arith.constant dense<0xFF800000> : vector<32xf32>
    %182 = vector.multi_reduction <maximumf>, %181, %cst_55 [1] : vector<32x32xf32> to vector<32xf32>
    %183 = vector.shape_cast %182 : vector<32xf32> to vector<32x1xf32>
    %184 = vector.broadcast %183 : vector<32x1xf32> to vector<32x32xf32>
    %185 = arith.subf %181, %184 : vector<32x32xf32>
    %186 = math.exp %185 : vector<32x32xf32>
    %cst_56 = arith.constant dense<0.000000e+00> : vector<32xf32>
    %187 = vector.multi_reduction <add>, %186, %cst_56 [1] : vector<32x32xf32> to vector<32xf32>
    %188 = vector.shape_cast %187 : vector<32xf32> to vector<32x1xf32>
    %189 = tpu.reciprocal %188 {approx = true} : vector<32x1xf32> -> vector<32x1xf32>
    %190 = vector.broadcast %189 : vector<32x1xf32> to vector<32x32xf32>
    %191 = arith.mulf %186, %190 : vector<32x32xf32>
    %192 = arith.mulf %137, %111 : vector<32x32xf32>
    %193 = arith.truncf %192 : vector<32x32xf32> to vector<32x32xbf16>
    %194 = arith.truncf %191 : vector<32x32xf32> to vector<32x32xbf16>
    %cst_57 = arith.constant dense<0.000000e+00> : vector<32x32xf32>
    %195 = tpu.matmul %194, %193, %cst_57 {dimension_numbers = #tpu.dot_dimension_numbers<[1], [0], [0], [1], [0, 0, 1, 1], [], []>} : vector<32x32xbf16>, vector<32x32xbf16>, vector<32x32xf32> -> vector<32x32xf32>
    %196 = arith.addf %177, %195 : vector<32x32xf32>
    %197 = arith.mulf %135, %118 : vector<32x32xf32>
    %198 = arith.truncf %197 : vector<32x32xf32> to vector<32x32xbf16>
    %cst_58 = arith.constant dense<0.000000e+00> : vector<32x32xf32>
    %199 = tpu.matmul %198, %138, %cst_58 {dimension_numbers = #tpu.dot_dimension_numbers<[1], [1], [0], [0], [0, 0, 1, 0], [], []>} : vector<32x32xbf16>, vector<32x32xbf16>, vector<32x32xf32> -> vector<32x32xf32>
    %200 = arith.addf %199, %89 : vector<32x32xf32>
    %cst_59 = arith.constant dense<0xFF800000> : vector<32xf32>
    %201 = vector.multi_reduction <maximumf>, %200, %cst_59 [1] : vector<32x32xf32> to vector<32xf32>
    %202 = vector.shape_cast %201 : vector<32xf32> to vector<32x1xf32>
    %203 = vector.broadcast %202 : vector<32x1xf32> to vector<32x32xf32>
    %204 = arith.subf %200, %203 : vector<32x32xf32>
    %205 = math.exp %204 : vector<32x32xf32>
    %cst_60 = arith.constant dense<0.000000e+00> : vector<32xf32>
    %206 = vector.multi_reduction <add>, %205, %cst_60 [1] : vector<32x32xf32> to vector<32xf32>
    %207 = vector.shape_cast %206 : vector<32xf32> to vector<32x1xf32>
    %208 = tpu.reciprocal %207 {approx = true} : vector<32x1xf32> -> vector<32x1xf32>
    %209 = vector.broadcast %208 : vector<32x1xf32> to vector<32x32xf32>
    %210 = arith.mulf %205, %209 : vector<32x32xf32>
    %211 = arith.mulf %137, %118 : vector<32x32xf32>
    %212 = arith.truncf %211 : vector<32x32xf32> to vector<32x32xbf16>
    %213 = arith.truncf %210 : vector<32x32xf32> to vector<32x32xbf16>
    %cst_61 = arith.constant dense<0.000000e+00> : vector<32x32xf32>
    %214 = tpu.matmul %213, %212, %cst_61 {dimension_numbers = #tpu.dot_dimension_numbers<[1], [0], [0], [1], [0, 0, 1, 1], [], []>} : vector<32x32xbf16>, vector<32x32xbf16>, vector<32x32xf32> -> vector<32x32xf32>
    %215 = arith.addf %196, %214 : vector<32x32xf32>
    %c0_62 = arith.constant 0 : index
    %c0_63 = arith.constant 0 : index
    %c0_64 = arith.constant 0 : index
    %216 = vector.load %arg9[%c0_62, %c0_63, %c0_64] : memref<2x32x32xbf16, #tpu.memory_space<vmem>>, vector<1x32x32xbf16>
    %217 = vector.shape_cast %216 : vector<1x32x32xbf16> to vector<32x32xbf16>
    %218 = arith.truncf %215 : vector<32x32xf32> to vector<32x32xbf16>
    %cst_65 = arith.constant dense<0.000000e+00> : vector<32x32xf32>
    %219 = tpu.matmul %218, %217, %cst_65 {dimension_numbers = #tpu.dot_dimension_numbers<[1], [0], [0], [1], [0, 0, 1, 1], [], []>} : vector<32x32xbf16>, vector<32x32xbf16>, vector<32x32xf32> -> vector<32x32xf32>
    %c0_66 = arith.constant 0 : index
    %c0_67 = arith.constant 0 : index
    %c0_68 = arith.constant 0 : index
    %220 = vector.load %arg10[%c0_66, %c0_67, %c0_68] : memref<2x1x32xf32, #tpu.memory_space<vmem>>, vector<1x1x32xf32>
    %221 = vector.shape_cast %220 : vector<1x1x32xf32> to vector<1x32xf32>
    %222 = vector.broadcast %221 : vector<1x32xf32> to vector<32x32xf32>
    %223 = arith.addf %219, %222 : vector<32x32xf32>
    %224 = arith.addf %223, %32 : vector<32x32xf32>
    %c0_69 = arith.constant 0 : index
    %c0_70 = arith.constant 0 : index
    %c0_71 = arith.constant 0 : index
    %225 = vector.load %arg11[%c0_69, %c0_70, %c0_71] : memref<2x1x32xf32, #tpu.memory_space<vmem>>, vector<1x1x32xf32>
    %226 = vector.shape_cast %225 : vector<1x1x32xf32> to vector<1x32xf32>
    %c0_72 = arith.constant 0 : index
    %c0_73 = arith.constant 0 : index
    %c0_74 = arith.constant 0 : index
    %227 = vector.load %arg12[%c0_72, %c0_73, %c0_74] : memref<2x1x32xf32, #tpu.memory_space<vmem>>, vector<1x1x32xf32>
    %228 = vector.shape_cast %227 : vector<1x1x32xf32> to vector<1x32xf32>
    %cst_75 = arith.constant dense<0.000000e+00> : vector<32xf32>
    %229 = vector.multi_reduction <add>, %224, %cst_75 [1] : vector<32x32xf32> to vector<32xf32>
    %230 = vector.shape_cast %229 : vector<32xf32> to vector<32x1xf32>
    %cst_76 = arith.constant 3.200000e+01 : f32
    %231 = vector.broadcast %cst_76 : f32 to vector<32x1xf32>
    %232 = arith.divf %230, %231 : vector<32x1xf32>
    %233 = vector.broadcast %232 : vector<32x1xf32> to vector<32x32xf32>
    %234 = arith.subf %224, %233 : vector<32x32xf32>
    %235 = vector.broadcast %232 : vector<32x1xf32> to vector<32x32xf32>
    %236 = arith.subf %224, %235 : vector<32x32xf32>
    %237 = arith.mulf %234, %236 : vector<32x32xf32>
    %cst_77 = arith.constant dense<0.000000e+00> : vector<32xf32>
    %238 = vector.multi_reduction <add>, %237, %cst_77 [1] : vector<32x32xf32> to vector<32xf32>
    %239 = vector.shape_cast %238 : vector<32xf32> to vector<32x1xf32>
    %cst_78 = arith.constant 3.200000e+01 : f32
    %240 = vector.broadcast %cst_78 : f32 to vector<32x1xf32>
    %241 = arith.divf %239, %240 : vector<32x1xf32>
    %242 = vector.broadcast %232 : vector<32x1xf32> to vector<32x32xf32>
    %243 = arith.subf %224, %242 : vector<32x32xf32>
    %cst_79 = arith.constant 9.99999996E-13 : f32
    %244 = vector.broadcast %cst_79 : f32 to vector<32x1xf32>
    %245 = arith.addf %241, %244 : vector<32x1xf32>
    %246 = math.rsqrt %245 : vector<32x1xf32>
    %247 = vector.broadcast %246 : vector<32x1xf32> to vector<32x32xf32>
    %248 = arith.mulf %243, %247 : vector<32x32xf32>
    %249 = vector.broadcast %226 : vector<1x32xf32> to vector<32x32xf32>
    %250 = arith.mulf %248, %249 : vector<32x32xf32>
    %251 = vector.broadcast %228 : vector<1x32xf32> to vector<32x32xf32>
    %252 = arith.addf %250, %251 : vector<32x32xf32>
    %c0_80 = arith.constant 0 : index
    %c0_81 = arith.constant 0 : index
    %c0_82 = arith.constant 0 : index
    %253 = vector.load %arg13[%c0_80, %c0_81, %c0_82] : memref<2x32x64xbf16, #tpu.memory_space<vmem>>, vector<1x32x64xbf16>
    %254 = vector.shape_cast %253 : vector<1x32x64xbf16> to vector<32x64xbf16>
    %255 = arith.truncf %252 : vector<32x32xf32> to vector<32x32xbf16>
    %cst_83 = arith.constant dense<0.000000e+00> : vector<32x64xf32>
    %256 = tpu.matmul %255, %254, %cst_83 {dimension_numbers = #tpu.dot_dimension_numbers<[1], [0], [0], [1], [0, 0, 1, 1], [], []>} : vector<32x32xbf16>, vector<32x64xbf16>, vector<32x64xf32> -> vector<32x64xf32>
    %c0_84 = arith.constant 0 : index
    %c0_85 = arith.constant 0 : index
    %c0_86 = arith.constant 0 : index
    %257 = vector.load %arg14[%c0_84, %c0_85, %c0_86] : memref<2x1x64xf32, #tpu.memory_space<vmem>>, vector<1x1x64xf32>
    %258 = vector.shape_cast %257 : vector<1x1x64xf32> to vector<1x64xf32>
    %259 = vector.broadcast %258 : vector<1x64xf32> to vector<32x64xf32>
    %260 = arith.addf %256, %259 : vector<32x64xf32>
    %cst_87 = arith.constant 5.000000e-01 : f32
    %261 = vector.broadcast %cst_87 : f32 to vector<32x64xf32>
    %262 = arith.mulf %261, %260 : vector<32x64xf32>
    %cst_88 = arith.constant 0.707106769 : f32
    %263 = vector.broadcast %cst_88 : f32 to vector<32x64xf32>
    %264 = arith.mulf %260, %263 : vector<32x64xf32>
    %265 = math.erf %264 : vector<32x64xf32>
    %cst_89 = arith.constant 1.000000e+00 : f32
    %266 = vector.broadcast %cst_89 : f32 to vector<32x64xf32>
    %267 = arith.addf %266, %265 : vector<32x64xf32>
    %268 = arith.mulf %262, %267 : vector<32x64xf32>
    %c0_90 = arith.constant 0 : index
    %c0_91 = arith.constant 0 : index
    %c0_92 = arith.constant 0 : index
    %269 = vector.load %arg15[%c0_90, %c0_91, %c0_92] : memref<2x64x32xbf16, #tpu.memory_space<vmem>>, vector<1x64x32xbf16>
    %270 = vector.shape_cast %269 : vector<1x64x32xbf16> to vector<64x32xbf16>
    %271 = arith.truncf %268 : vector<32x64xf32> to vector<32x64xbf16>
    %cst_93 = arith.constant dense<0.000000e+00> : vector<32x32xf32>
    %272 = tpu.matmul %271, %270, %cst_93 {dimension_numbers = #tpu.dot_dimension_numbers<[1], [0], [0], [1], [0, 0, 1, 1], [], []>} : vector<32x64xbf16>, vector<64x32xbf16>, vector<32x32xf32> -> vector<32x32xf32>
    %c0_94 = arith.constant 0 : index
    %c0_95 = arith.constant 0 : index
    %c0_96 = arith.constant 0 : index
    %273 = vector.load %arg16[%c0_94, %c0_95, %c0_96] : memref<2x1x32xf32, #tpu.memory_space<vmem>>, vector<1x1x32xf32>
    %274 = vector.shape_cast %273 : vector<1x1x32xf32> to vector<1x32xf32>
    %275 = vector.broadcast %274 : vector<1x32xf32> to vector<32x32xf32>
    %276 = arith.addf %272, %275 : vector<32x32xf32>
    %277 = arith.addf %276, %252 : vector<32x32xf32>
    %c0_97 = arith.constant 0 : index
    %c0_98 = arith.constant 0 : index
    %c0_99 = arith.constant 0 : index
    %278 = vector.load %arg17[%c0_97, %c0_98, %c0_99] : memref<2x1x32xf32, #tpu.memory_space<vmem>>, vector<1x1x32xf32>
    %279 = vector.shape_cast %278 : vector<1x1x32xf32> to vector<1x32xf32>
    %c0_100 = arith.constant 0 : index
    %c0_101 = arith.constant 0 : index
    %c0_102 = arith.constant 0 : index
    %280 = vector.load %arg18[%c0_100, %c0_101, %c0_102] : memref<2x1x32xf32, #tpu.memory_space<vmem>>, vector<1x1x32xf32>
    %281 = vector.shape_cast %280 : vector<1x1x32xf32> to vector<1x32xf32>
    %cst_103 = arith.constant dense<0.000000e+00> : vector<32xf32>
    %282 = vector.multi_reduction <add>, %277, %cst_103 [1] : vector<32x32xf32> to vector<32xf32>
    %283 = vector.shape_cast %282 : vector<32xf32> to vector<32x1xf32>
    %cst_104 = arith.constant 3.200000e+01 : f32
    %284 = vector.broadcast %cst_104 : f32 to vector<32x1xf32>
    %285 = arith.divf %283, %284 : vector<32x1xf32>
    %286 = vector.broadcast %285 : vector<32x1xf32> to vector<32x32xf32>
    %287 = arith.subf %277, %286 : vector<32x32xf32>
    %288 = vector.broadcast %285 : vector<32x1xf32> to vector<32x32xf32>
    %289 = arith.subf %277, %288 : vector<32x32xf32>
    %290 = arith.mulf %287, %289 : vector<32x32xf32>
    %cst_105 = arith.constant dense<0.000000e+00> : vector<32xf32>
    %291 = vector.multi_reduction <add>, %290, %cst_105 [1] : vector<32x32xf32> to vector<32xf32>
    %292 = vector.shape_cast %291 : vector<32xf32> to vector<32x1xf32>
    %cst_106 = arith.constant 3.200000e+01 : f32
    %293 = vector.broadcast %cst_106 : f32 to vector<32x1xf32>
    %294 = arith.divf %292, %293 : vector<32x1xf32>
    %295 = vector.broadcast %285 : vector<32x1xf32> to vector<32x32xf32>
    %296 = arith.subf %277, %295 : vector<32x32xf32>
    %cst_107 = arith.constant 9.99999996E-13 : f32
    %297 = vector.broadcast %cst_107 : f32 to vector<32x1xf32>
    %298 = arith.addf %294, %297 : vector<32x1xf32>
    %299 = math.rsqrt %298 : vector<32x1xf32>
    %300 = vector.broadcast %299 : vector<32x1xf32> to vector<32x32xf32>
    %301 = arith.mulf %296, %300 : vector<32x32xf32>
    %302 = vector.broadcast %279 : vector<1x32xf32> to vector<32x32xf32>
    %303 = arith.mulf %301, %302 : vector<32x32xf32>
    %304 = vector.broadcast %281 : vector<1x32xf32> to vector<32x32xf32>
    %305 = arith.addf %303, %304 : vector<32x32xf32>
    %c1 = arith.constant 1 : index
    %c0_108 = arith.constant 0 : index
    %c0_109 = arith.constant 0 : index
    %306 = vector.load %arg7[%c1, %c0_108, %c0_109] : memref<2x32x96xbf16, #tpu.memory_space<vmem>>, vector<1x32x96xbf16>
    %307 = vector.shape_cast %306 : vector<1x32x96xbf16> to vector<32x96xbf16>
    %308 = arith.truncf %305 : vector<32x32xf32> to vector<32x32xbf16>
    %cst_110 = arith.constant dense<0.000000e+00> : vector<32x96xf32>
    %309 = tpu.matmul %308, %307, %cst_110 {dimension_numbers = #tpu.dot_dimension_numbers<[1], [0], [0], [1], [0, 0, 1, 1], [], []>} : vector<32x32xbf16>, vector<32x96xbf16>, vector<32x96xf32> -> vector<32x96xf32>
    %c1_111 = arith.constant 1 : index
    %c0_112 = arith.constant 0 : index
    %c0_113 = arith.constant 0 : index
    %310 = vector.load %arg8[%c1_111, %c0_112, %c0_113] : memref<2x1x96xf32, #tpu.memory_space<vmem>>, vector<1x1x96xf32>
    %311 = vector.shape_cast %310 : vector<1x1x96xf32> to vector<1x96xf32>
    %312 = vector.broadcast %311 : vector<1x96xf32> to vector<32x96xf32>
    %313 = arith.addf %309, %312 : vector<32x96xf32>
    %314 = vector.extract_strided_slice %313 {offsets = [0, 0], sizes = [32, 32], strides = [1, 1]} : vector<32x96xf32> to vector<32x32xf32>
    %315 = vector.extract_strided_slice %313 {offsets = [0, 32], sizes = [32, 32], strides = [1, 1]} : vector<32x96xf32> to vector<32x32xf32>
    %316 = vector.extract_strided_slice %313 {offsets = [0, 64], sizes = [32, 32], strides = [1, 1]} : vector<32x96xf32> to vector<32x32xf32>
    %317 = arith.truncf %315 : vector<32x32xf32> to vector<32x32xbf16>
    %cst_114 = arith.constant 0.000000e+00 : f32
    %318 = vector.broadcast %cst_114 : f32 to vector<32x32xf32>
    %319 = arith.mulf %314, %97 : vector<32x32xf32>
    %320 = arith.truncf %319 : vector<32x32xf32> to vector<32x32xbf16>
    %cst_115 = arith.constant dense<0.000000e+00> : vector<32x32xf32>
    %321 = tpu.matmul %320, %317, %cst_115 {dimension_numbers = #tpu.dot_dimension_numbers<[1], [1], [0], [0], [0, 0, 1, 0], [], []>} : vector<32x32xbf16>, vector<32x32xbf16>, vector<32x32xf32> -> vector<32x32xf32>
    %322 = arith.addf %321, %89 : vector<32x32xf32>
    %cst_116 = arith.constant dense<0xFF800000> : vector<32xf32>
    %323 = vector.multi_reduction <maximumf>, %322, %cst_116 [1] : vector<32x32xf32> to vector<32xf32>
    %324 = vector.shape_cast %323 : vector<32xf32> to vector<32x1xf32>
    %325 = vector.broadcast %324 : vector<32x1xf32> to vector<32x32xf32>
    %326 = arith.subf %322, %325 : vector<32x32xf32>
    %327 = math.exp %326 : vector<32x32xf32>
    %cst_117 = arith.constant dense<0.000000e+00> : vector<32xf32>
    %328 = vector.multi_reduction <add>, %327, %cst_117 [1] : vector<32x32xf32> to vector<32xf32>
    %329 = vector.shape_cast %328 : vector<32xf32> to vector<32x1xf32>
    %330 = tpu.reciprocal %329 {approx = true} : vector<32x1xf32> -> vector<32x1xf32>
    %331 = vector.broadcast %330 : vector<32x1xf32> to vector<32x32xf32>
    %332 = arith.mulf %327, %331 : vector<32x32xf32>
    %333 = arith.mulf %316, %97 : vector<32x32xf32>
    %334 = arith.truncf %333 : vector<32x32xf32> to vector<32x32xbf16>
    %335 = arith.truncf %332 : vector<32x32xf32> to vector<32x32xbf16>
    %cst_118 = arith.constant dense<0.000000e+00> : vector<32x32xf32>
    %336 = tpu.matmul %335, %334, %cst_118 {dimension_numbers = #tpu.dot_dimension_numbers<[1], [0], [0], [1], [0, 0, 1, 1], [], []>} : vector<32x32xbf16>, vector<32x32xbf16>, vector<32x32xf32> -> vector<32x32xf32>
    %337 = arith.addf %318, %336 : vector<32x32xf32>
    %338 = arith.mulf %314, %104 : vector<32x32xf32>
    %339 = arith.truncf %338 : vector<32x32xf32> to vector<32x32xbf16>
    %cst_119 = arith.constant dense<0.000000e+00> : vector<32x32xf32>
    %340 = tpu.matmul %339, %317, %cst_119 {dimension_numbers = #tpu.dot_dimension_numbers<[1], [1], [0], [0], [0, 0, 1, 0], [], []>} : vector<32x32xbf16>, vector<32x32xbf16>, vector<32x32xf32> -> vector<32x32xf32>
    %341 = arith.addf %340, %89 : vector<32x32xf32>
    %cst_120 = arith.constant dense<0xFF800000> : vector<32xf32>
    %342 = vector.multi_reduction <maximumf>, %341, %cst_120 [1] : vector<32x32xf32> to vector<32xf32>
    %343 = vector.shape_cast %342 : vector<32xf32> to vector<32x1xf32>
    %344 = vector.broadcast %343 : vector<32x1xf32> to vector<32x32xf32>
    %345 = arith.subf %341, %344 : vector<32x32xf32>
    %346 = math.exp %345 : vector<32x32xf32>
    %cst_121 = arith.constant dense<0.000000e+00> : vector<32xf32>
    %347 = vector.multi_reduction <add>, %346, %cst_121 [1] : vector<32x32xf32> to vector<32xf32>
    %348 = vector.shape_cast %347 : vector<32xf32> to vector<32x1xf32>
    %349 = tpu.reciprocal %348 {approx = true} : vector<32x1xf32> -> vector<32x1xf32>
    %350 = vector.broadcast %349 : vector<32x1xf32> to vector<32x32xf32>
    %351 = arith.mulf %346, %350 : vector<32x32xf32>
    %352 = arith.mulf %316, %104 : vector<32x32xf32>
    %353 = arith.truncf %352 : vector<32x32xf32> to vector<32x32xbf16>
    %354 = arith.truncf %351 : vector<32x32xf32> to vector<32x32xbf16>
    %cst_122 = arith.constant dense<0.000000e+00> : vector<32x32xf32>
    %355 = tpu.matmul %354, %353, %cst_122 {dimension_numbers = #tpu.dot_dimension_numbers<[1], [0], [0], [1], [0, 0, 1, 1], [], []>} : vector<32x32xbf16>, vector<32x32xbf16>, vector<32x32xf32> -> vector<32x32xf32>
    %356 = arith.addf %337, %355 : vector<32x32xf32>
    %357 = arith.mulf %314, %111 : vector<32x32xf32>
    %358 = arith.truncf %357 : vector<32x32xf32> to vector<32x32xbf16>
    %cst_123 = arith.constant dense<0.000000e+00> : vector<32x32xf32>
    %359 = tpu.matmul %358, %317, %cst_123 {dimension_numbers = #tpu.dot_dimension_numbers<[1], [1], [0], [0], [0, 0, 1, 0], [], []>} : vector<32x32xbf16>, vector<32x32xbf16>, vector<32x32xf32> -> vector<32x32xf32>
    %360 = arith.addf %359, %89 : vector<32x32xf32>
    %cst_124 = arith.constant dense<0xFF800000> : vector<32xf32>
    %361 = vector.multi_reduction <maximumf>, %360, %cst_124 [1] : vector<32x32xf32> to vector<32xf32>
    %362 = vector.shape_cast %361 : vector<32xf32> to vector<32x1xf32>
    %363 = vector.broadcast %362 : vector<32x1xf32> to vector<32x32xf32>
    %364 = arith.subf %360, %363 : vector<32x32xf32>
    %365 = math.exp %364 : vector<32x32xf32>
    %cst_125 = arith.constant dense<0.000000e+00> : vector<32xf32>
    %366 = vector.multi_reduction <add>, %365, %cst_125 [1] : vector<32x32xf32> to vector<32xf32>
    %367 = vector.shape_cast %366 : vector<32xf32> to vector<32x1xf32>
    %368 = tpu.reciprocal %367 {approx = true} : vector<32x1xf32> -> vector<32x1xf32>
    %369 = vector.broadcast %368 : vector<32x1xf32> to vector<32x32xf32>
    %370 = arith.mulf %365, %369 : vector<32x32xf32>
    %371 = arith.mulf %316, %111 : vector<32x32xf32>
    %372 = arith.truncf %371 : vector<32x32xf32> to vector<32x32xbf16>
    %373 = arith.truncf %370 : vector<32x32xf32> to vector<32x32xbf16>
    %cst_126 = arith.constant dense<0.000000e+00> : vector<32x32xf32>
    %374 = tpu.matmul %373, %372, %cst_126 {dimension_numbers = #tpu.dot_dimension_numbers<[1], [0], [0], [1], [0, 0, 1, 1], [], []>} : vector<32x32xbf16>, vector<32x32xbf16>, vector<32x32xf32> -> vector<32x32xf32>
    %375 = arith.addf %356, %374 : vector<32x32xf32>
    %376 = arith.mulf %314, %118 : vector<32x32xf32>
    %377 = arith.truncf %376 : vector<32x32xf32> to vector<32x32xbf16>
    %cst_127 = arith.constant dense<0.000000e+00> : vector<32x32xf32>
    %378 = tpu.matmul %377, %317, %cst_127 {dimension_numbers = #tpu.dot_dimension_numbers<[1], [1], [0], [0], [0, 0, 1, 0], [], []>} : vector<32x32xbf16>, vector<32x32xbf16>, vector<32x32xf32> -> vector<32x32xf32>
    %379 = arith.addf %378, %89 : vector<32x32xf32>
    %cst_128 = arith.constant dense<0xFF800000> : vector<32xf32>
    %380 = vector.multi_reduction <maximumf>, %379, %cst_128 [1] : vector<32x32xf32> to vector<32xf32>
    %381 = vector.shape_cast %380 : vector<32xf32> to vector<32x1xf32>
    %382 = vector.broadcast %381 : vector<32x1xf32> to vector<32x32xf32>
    %383 = arith.subf %379, %382 : vector<32x32xf32>
    %384 = math.exp %383 : vector<32x32xf32>
    %cst_129 = arith.constant dense<0.000000e+00> : vector<32xf32>
    %385 = vector.multi_reduction <add>, %384, %cst_129 [1] : vector<32x32xf32> to vector<32xf32>
    %386 = vector.shape_cast %385 : vector<32xf32> to vector<32x1xf32>
    %387 = tpu.reciprocal %386 {approx = true} : vector<32x1xf32> -> vector<32x1xf32>
    %388 = vector.broadcast %387 : vector<32x1xf32> to vector<32x32xf32>
    %389 = arith.mulf %384, %388 : vector<32x32xf32>
    %390 = arith.mulf %316, %118 : vector<32x32xf32>
    %391 = arith.truncf %390 : vector<32x32xf32> to vector<32x32xbf16>
    %392 = arith.truncf %389 : vector<32x32xf32> to vector<32x32xbf16>
    %cst_130 = arith.constant dense<0.000000e+00> : vector<32x32xf32>
    %393 = tpu.matmul %392, %391, %cst_130 {dimension_numbers = #tpu.dot_dimension_numbers<[1], [0], [0], [1], [0, 0, 1, 1], [], []>} : vector<32x32xbf16>, vector<32x32xbf16>, vector<32x32xf32> -> vector<32x32xf32>
    %394 = arith.addf %375, %393 : vector<32x32xf32>
    %c1_131 = arith.constant 1 : index
    %c0_132 = arith.constant 0 : index
    %c0_133 = arith.constant 0 : index
    %395 = vector.load %arg9[%c1_131, %c0_132, %c0_133] : memref<2x32x32xbf16, #tpu.memory_space<vmem>>, vector<1x32x32xbf16>
    %396 = vector.shape_cast %395 : vector<1x32x32xbf16> to vector<32x32xbf16>
    %397 = arith.truncf %394 : vector<32x32xf32> to vector<32x32xbf16>
    %cst_134 = arith.constant dense<0.000000e+00> : vector<32x32xf32>
    %398 = tpu.matmul %397, %396, %cst_134 {dimension_numbers = #tpu.dot_dimension_numbers<[1], [0], [0], [1], [0, 0, 1, 1], [], []>} : vector<32x32xbf16>, vector<32x32xbf16>, vector<32x32xf32> -> vector<32x32xf32>
    %c1_135 = arith.constant 1 : index
    %c0_136 = arith.constant 0 : index
    %c0_137 = arith.constant 0 : index
    %399 = vector.load %arg10[%c1_135, %c0_136, %c0_137] : memref<2x1x32xf32, #tpu.memory_space<vmem>>, vector<1x1x32xf32>
    %400 = vector.shape_cast %399 : vector<1x1x32xf32> to vector<1x32xf32>
    %401 = vector.broadcast %400 : vector<1x32xf32> to vector<32x32xf32>
    %402 = arith.addf %398, %401 : vector<32x32xf32>
    %403 = arith.addf %402, %305 : vector<32x32xf32>
    %c1_138 = arith.constant 1 : index
    %c0_139 = arith.constant 0 : index
    %c0_140 = arith.constant 0 : index
    %404 = vector.load %arg11[%c1_138, %c0_139, %c0_140] : memref<2x1x32xf32, #tpu.memory_space<vmem>>, vector<1x1x32xf32>
    %405 = vector.shape_cast %404 : vector<1x1x32xf32> to vector<1x32xf32>
    %c1_141 = arith.constant 1 : index
    %c0_142 = arith.constant 0 : index
    %c0_143 = arith.constant 0 : index
    %406 = vector.load %arg12[%c1_141, %c0_142, %c0_143] : memref<2x1x32xf32, #tpu.memory_space<vmem>>, vector<1x1x32xf32>
    %407 = vector.shape_cast %406 : vector<1x1x32xf32> to vector<1x32xf32>
    %cst_144 = arith.constant dense<0.000000e+00> : vector<32xf32>
    %408 = vector.multi_reduction <add>, %403, %cst_144 [1] : vector<32x32xf32> to vector<32xf32>
    %409 = vector.shape_cast %408 : vector<32xf32> to vector<32x1xf32>
    %cst_145 = arith.constant 3.200000e+01 : f32
    %410 = vector.broadcast %cst_145 : f32 to vector<32x1xf32>
    %411 = arith.divf %409, %410 : vector<32x1xf32>
    %412 = vector.broadcast %411 : vector<32x1xf32> to vector<32x32xf32>
    %413 = arith.subf %403, %412 : vector<32x32xf32>
    %414 = vector.broadcast %411 : vector<32x1xf32> to vector<32x32xf32>
    %415 = arith.subf %403, %414 : vector<32x32xf32>
    %416 = arith.mulf %413, %415 : vector<32x32xf32>
    %cst_146 = arith.constant dense<0.000000e+00> : vector<32xf32>
    %417 = vector.multi_reduction <add>, %416, %cst_146 [1] : vector<32x32xf32> to vector<32xf32>
    %418 = vector.shape_cast %417 : vector<32xf32> to vector<32x1xf32>
    %cst_147 = arith.constant 3.200000e+01 : f32
    %419 = vector.broadcast %cst_147 : f32 to vector<32x1xf32>
    %420 = arith.divf %418, %419 : vector<32x1xf32>
    %421 = vector.broadcast %411 : vector<32x1xf32> to vector<32x32xf32>
    %422 = arith.subf %403, %421 : vector<32x32xf32>
    %cst_148 = arith.constant 9.99999996E-13 : f32
    %423 = vector.broadcast %cst_148 : f32 to vector<32x1xf32>
    %424 = arith.addf %420, %423 : vector<32x1xf32>
    %425 = math.rsqrt %424 : vector<32x1xf32>
    %426 = vector.broadcast %425 : vector<32x1xf32> to vector<32x32xf32>
    %427 = arith.mulf %422, %426 : vector<32x32xf32>
    %428 = vector.broadcast %405 : vector<1x32xf32> to vector<32x32xf32>
    %429 = arith.mulf %427, %428 : vector<32x32xf32>
    %430 = vector.broadcast %407 : vector<1x32xf32> to vector<32x32xf32>
    %431 = arith.addf %429, %430 : vector<32x32xf32>
    %c1_149 = arith.constant 1 : index
    %c0_150 = arith.constant 0 : index
    %c0_151 = arith.constant 0 : index
    %432 = vector.load %arg13[%c1_149, %c0_150, %c0_151] : memref<2x32x64xbf16, #tpu.memory_space<vmem>>, vector<1x32x64xbf16>
    %433 = vector.shape_cast %432 : vector<1x32x64xbf16> to vector<32x64xbf16>
    %434 = arith.truncf %431 : vector<32x32xf32> to vector<32x32xbf16>
    %cst_152 = arith.constant dense<0.000000e+00> : vector<32x64xf32>
    %435 = tpu.matmul %434, %433, %cst_152 {dimension_numbers = #tpu.dot_dimension_numbers<[1], [0], [0], [1], [0, 0, 1, 1], [], []>} : vector<32x32xbf16>, vector<32x64xbf16>, vector<32x64xf32> -> vector<32x64xf32>
    %c1_153 = arith.constant 1 : index
    %c0_154 = arith.constant 0 : index
    %c0_155 = arith.constant 0 : index
    %436 = vector.load %arg14[%c1_153, %c0_154, %c0_155] : memref<2x1x64xf32, #tpu.memory_space<vmem>>, vector<1x1x64xf32>
    %437 = vector.shape_cast %436 : vector<1x1x64xf32> to vector<1x64xf32>
    %438 = vector.broadcast %437 : vector<1x64xf32> to vector<32x64xf32>
    %439 = arith.addf %435, %438 : vector<32x64xf32>
    %cst_156 = arith.constant 5.000000e-01 : f32
    %440 = vector.broadcast %cst_156 : f32 to vector<32x64xf32>
    %441 = arith.mulf %440, %439 : vector<32x64xf32>
    %cst_157 = arith.constant 0.707106769 : f32
    %442 = vector.broadcast %cst_157 : f32 to vector<32x64xf32>
    %443 = arith.mulf %439, %442 : vector<32x64xf32>
    %444 = math.erf %443 : vector<32x64xf32>
    %cst_158 = arith.constant 1.000000e+00 : f32
    %445 = vector.broadcast %cst_158 : f32 to vector<32x64xf32>
    %446 = arith.addf %445, %444 : vector<32x64xf32>
    %447 = arith.mulf %441, %446 : vector<32x64xf32>
    %c1_159 = arith.constant 1 : index
    %c0_160 = arith.constant 0 : index
    %c0_161 = arith.constant 0 : index
    %448 = vector.load %arg15[%c1_159, %c0_160, %c0_161] : memref<2x64x32xbf16, #tpu.memory_space<vmem>>, vector<1x64x32xbf16>
    %449 = vector.shape_cast %448 : vector<1x64x32xbf16> to vector<64x32xbf16>
    %450 = arith.truncf %447 : vector<32x64xf32> to vector<32x64xbf16>
    %cst_162 = arith.constant dense<0.000000e+00> : vector<32x32xf32>
    %451 = tpu.matmul %450, %449, %cst_162 {dimension_numbers = #tpu.dot_dimension_numbers<[1], [0], [0], [1], [0, 0, 1, 1], [], []>} : vector<32x64xbf16>, vector<64x32xbf16>, vector<32x32xf32> -> vector<32x32xf32>
    %c1_163 = arith.constant 1 : index
    %c0_164 = arith.constant 0 : index
    %c0_165 = arith.constant 0 : index
    %452 = vector.load %arg16[%c1_163, %c0_164, %c0_165] : memref<2x1x32xf32, #tpu.memory_space<vmem>>, vector<1x1x32xf32>
    %453 = vector.shape_cast %452 : vector<1x1x32xf32> to vector<1x32xf32>
    %454 = vector.broadcast %453 : vector<1x32xf32> to vector<32x32xf32>
    %455 = arith.addf %451, %454 : vector<32x32xf32>
    %456 = arith.addf %455, %431 : vector<32x32xf32>
    %c1_166 = arith.constant 1 : index
    %c0_167 = arith.constant 0 : index
    %c0_168 = arith.constant 0 : index
    %457 = vector.load %arg17[%c1_166, %c0_167, %c0_168] : memref<2x1x32xf32, #tpu.memory_space<vmem>>, vector<1x1x32xf32>
    %458 = vector.shape_cast %457 : vector<1x1x32xf32> to vector<1x32xf32>
    %c1_169 = arith.constant 1 : index
    %c0_170 = arith.constant 0 : index
    %c0_171 = arith.constant 0 : index
    %459 = vector.load %arg18[%c1_169, %c0_170, %c0_171] : memref<2x1x32xf32, #tpu.memory_space<vmem>>, vector<1x1x32xf32>
    %460 = vector.shape_cast %459 : vector<1x1x32xf32> to vector<1x32xf32>
    %cst_172 = arith.constant dense<0.000000e+00> : vector<32xf32>
    %461 = vector.multi_reduction <add>, %456, %cst_172 [1] : vector<32x32xf32> to vector<32xf32>
    %462 = vector.shape_cast %461 : vector<32xf32> to vector<32x1xf32>
    %cst_173 = arith.constant 3.200000e+01 : f32
    %463 = vector.broadcast %cst_173 : f32 to vector<32x1xf32>
    %464 = arith.divf %462, %463 : vector<32x1xf32>
    %465 = vector.broadcast %464 : vector<32x1xf32> to vector<32x32xf32>
    %466 = arith.subf %456, %465 : vector<32x32xf32>
    %467 = vector.broadcast %464 : vector<32x1xf32> to vector<32x32xf32>
    %468 = arith.subf %456, %467 : vector<32x32xf32>
    %469 = arith.mulf %466, %468 : vector<32x32xf32>
    %cst_174 = arith.constant dense<0.000000e+00> : vector<32xf32>
    %470 = vector.multi_reduction <add>, %469, %cst_174 [1] : vector<32x32xf32> to vector<32xf32>
    %471 = vector.shape_cast %470 : vector<32xf32> to vector<32x1xf32>
    %cst_175 = arith.constant 3.200000e+01 : f32
    %472 = vector.broadcast %cst_175 : f32 to vector<32x1xf32>
    %473 = arith.divf %471, %472 : vector<32x1xf32>
    %474 = vector.broadcast %464 : vector<32x1xf32> to vector<32x32xf32>
    %475 = arith.subf %456, %474 : vector<32x32xf32>
    %cst_176 = arith.constant 9.99999996E-13 : f32
    %476 = vector.broadcast %cst_176 : f32 to vector<32x1xf32>
    %477 = arith.addf %473, %476 : vector<32x1xf32>
    %478 = math.rsqrt %477 : vector<32x1xf32>
    %479 = vector.broadcast %478 : vector<32x1xf32> to vector<32x32xf32>
    %480 = arith.mulf %475, %479 : vector<32x32xf32>
    %481 = vector.broadcast %458 : vector<1x32xf32> to vector<32x32xf32>
    %482 = arith.mulf %480, %481 : vector<32x32xf32>
    %483 = vector.broadcast %460 : vector<1x32xf32> to vector<32x32xf32>
    %484 = arith.addf %482, %483 : vector<32x32xf32>
    %485 = arith.truncf %484 : vector<32x32xf32> to vector<32x32xbf16>
    %cst_177 = arith.constant dense<0.000000e+00> : vector<4x32xf32>
    %486 = tpu.matmul %126, %485, %cst_177 {dimension_numbers = #tpu.dot_dimension_numbers<[1], [0], [0], [1], [0, 0, 1, 1], [], []>} : vector<4x32xbf16>, vector<32x32xbf16>, vector<4x32xf32> -> vector<4x32xf32>
    %c0_178 = arith.constant 0 : index
    %c0_179 = arith.constant 0 : index
    %487 = vector.load %arg19[%c0_178, %c0_179] : memref<32x128xbf16, #tpu.memory_space<vmem>>, vector<32x128xbf16>
    %488 = arith.truncf %486 : vector<4x32xf32> to vector<4x32xbf16>
    %cst_180 = arith.constant dense<0.000000e+00> : vector<4x128xf32>
    %489 = tpu.matmul %488, %487, %cst_180 {dimension_numbers = #tpu.dot_dimension_numbers<[1], [0], [0], [1], [0, 0, 1, 1], [], []>} : vector<4x32xbf16>, vector<32x128xbf16>, vector<4x128xf32> -> vector<4x128xf32>
    %c0_181 = arith.constant 0 : index
    %c0_182 = arith.constant 0 : index
    %490 = vector.load %arg20[%c0_181, %c0_182] : memref<1x128xf32, #tpu.memory_space<vmem>>, vector<1x128xf32>
    %491 = vector.broadcast %490 : vector<1x128xf32> to vector<4x128xf32>
    %492 = arith.addf %489, %491 : vector<4x128xf32>
    %c0_183 = arith.constant 0 : index
    %c0_184 = arith.constant 0 : index
    %493 = vector.load %arg21[%c0_183, %c0_184] : memref<4x128xf32, #tpu.memory_space<vmem>>, vector<4x128xf32>
    tpu.vector_store %arg21[%c0_183, %c0_184], %492 {strides = array<i32>} : memref<4x128xf32, #tpu.memory_space<vmem>>, vector<4x128xf32>,
    return
  }
  func.func @transform_0(%arg0: i32) -> (i32, i32) {
    %c0_i32 = arith.constant 0 : i32
    %c0_i32_0 = arith.constant 0 : i32
    %c0_i32_1 = arith.constant 0 : i32
    return %c0_i32, %c0_i32_0 : i32, i32
  }
  func.func @transform_1(%arg0: i32) -> (i32, i32) {
    %c0_i32 = arith.constant 0 : i32
    %c0_i32_0 = arith.constant 0 : i32
    %c0_i32_1 = arith.constant 0 : i32
    return %c0_i32, %c0_i32_0 : i32, i32
  }
  func.func @transform_2(%arg0: i32) -> (i32, i32) {
    %c0_i32 = arith.constant 0 : i32
    %c0_i32_0 = arith.constant 0 : i32
    %c0_i32_1 = arith.constant 0 : i32
    return %c0_i32, %c0_i32_0 : i32, i32
  }
  func.func @transform_3(%arg0: i32) -> (i32, i32) {
    %c0_i32 = arith.constant 0 : i32
    %c0_i32_0 = arith.constant 0 : i32
    %c0_i32_1 = arith.constant 0 : i32
    return %c0_i32, %c0_i32_0 : i32, i32
  }
  func.func @transform_4(%arg0: i32) -> (i32, i32) {
    %c0_i32 = arith.constant 0 : i32
    %c0_i32_0 = arith.constant 0 : i32
    %c0_i32_1 = arith.constant 0 : i32
    return %c0_i32, %c0_i32_0 : i32, i32
  }
  func.func @transform_5(%arg0: i32) -> (i32, i32) {
    %c0_i32 = arith.constant 0 : i32
    %c0_i32_0 = arith.constant 0 : i32
    %c0_i32_1 = arith.constant 0 : i32
    return %c0_i32, %c0_i32_0 : i32, i32
  }
  func.func @transform_6(%arg0: i32) -> (i32, i32, i32) {
    %c0_i32 = arith.constant 0 : i32
    %c0_i32_0 = arith.constant 0 : i32
    %c0_i32_1 = arith.constant 0 : i32
    %c0_i32_2 = arith.constant 0 : i32
    return %c0_i32, %c0_i32_0, %c0_i32_1 : i32, i32, i32
  }
  func.func @transform_7(%arg0: i32) -> (i32, i32, i32) {
    %c0_i32 = arith.constant 0 : i32
    %c0_i32_0 = arith.constant 0 : i32
    %c0_i32_1 = arith.constant 0 : i32
    %c0_i32_2 = arith.constant 0 : i32
    return %c0_i32, %c0_i32_0, %c0_i32_1 : i32, i32, i32
  }
  func.func @transform_8(%arg0: i32) -> (i32, i32, i32) {
    %c0_i32 = arith.constant 0 : i32
    %c0_i32_0 = arith.constant 0 : i32
    %c0_i32_1 = arith.constant 0 : i32
    %c0_i32_2 = arith.constant 0 : i32
    return %c0_i32, %c0_i32_0, %c0_i32_1 : i32, i32, i32
  }
  func.func @transform_9(%arg0: i32) -> (i32, i32, i32) {
    %c0_i32 = arith.constant 0 : i32
    %c0_i32_0 = arith.constant 0 : i32
    %c0_i32_1 = arith.constant 0 : i32
    %c0_i32_2 = arith.constant 0 : i32
    return %c0_i32, %c0_i32_0, %c0_i32_1 : i32, i32, i32
  }
  func.func @transform_10(%arg0: i32) -> (i32, i32, i32) {
    %c0_i32 = arith.constant 0 : i32
    %c0_i32_0 = arith.constant 0 : i32
    %c0_i32_1 = arith.constant 0 : i32
    %c0_i32_2 = arith.constant 0 : i32
    return %c0_i32, %c0_i32_0, %c0_i32_1 : i32, i32, i32
  }
  func.func @transform_11(%arg0: i32) -> (i32, i32, i32) {
    %c0_i32 = arith.constant 0 : i32
    %c0_i32_0 = arith.constant 0 : i32
    %c0_i32_1 = arith.constant 0 : i32
    %c0_i32_2 = arith.constant 0 : i32
    return %c0_i32, %c0_i32_0, %c0_i32_1 : i32, i32, i32
  }
  func.func @transform_12(%arg0: i32) -> (i32, i32, i32) {
    %c0_i32 = arith.constant 0 : i32
    %c0_i32_0 = arith.constant 0 : i32
    %c0_i32_1 = arith.constant 0 : i32
    %c0_i32_2 = arith.constant 0 : i32
    return %c0_i32, %c0_i32_0, %c0_i32_1 : i32, i32, i32
  }
  func.func @transform_13(%arg0: i32) -> (i32, i32, i32) {
    %c0_i32 = arith.constant 0 : i32
    %c0_i32_0 = arith.constant 0 : i32
    %c0_i32_1 = arith.constant 0 : i32
    %c0_i32_2 = arith.constant 0 : i32
    return %c0_i32, %c0_i32_0, %c0_i32_1 : i32, i32, i32
  }
  func.func @transform_14(%arg0: i32) -> (i32, i32, i32) {
    %c0_i32 = arith.constant 0 : i32
    %c0_i32_0 = arith.constant 0 : i32
    %c0_i32_1 = arith.constant 0 : i32
    %c0_i32_2 = arith.constant 0 : i32
    return %c0_i32, %c0_i32_0, %c0_i32_1 : i32, i32, i32
  }
  func.func @transform_15(%arg0: i32) -> (i32, i32, i32) {
    %c0_i32 = arith.constant 0 : i32
    %c0_i32_0 = arith.constant 0 : i32
    %c0_i32_1 = arith.constant 0 : i32
    %c0_i32_2 = arith.constant 0 : i32
    return %c0_i32, %c0_i32_0, %c0_i32_1 : i32, i32, i32
  }
  func.func @transform_16(%arg0: i32) -> (i32, i32, i32) {
    %c0_i32 = arith.constant 0 : i32
    %c0_i32_0 = arith.constant 0 : i32
    %c0_i32_1 = arith.constant 0 : i32
    %c0_i32_2 = arith.constant 0 : i32
    return %c0_i32, %c0_i32_0, %c0_i32_1 : i32, i32, i32
  }
  func.func @transform_17(%arg0: i32) -> (i32, i32, i32) {
    %c0_i32 = arith.constant 0 : i32
    %c0_i32_0 = arith.constant 0 : i32
    %c0_i32_1 = arith.constant 0 : i32
    %c0_i32_2 = arith.constant 0 : i32
    return %c0_i32, %c0_i32_0, %c0_i32_1 : i32, i32, i32
  }
  func.func @transform_18(%arg0: i32) -> (i32, i32) {
    %c0_i32 = arith.constant 0 : i32
    %c0_i32_0 = arith.constant 0 : i32
    %c0_i32_1 = arith.constant 0 : i32
    return %c0_i32, %c0_i32_0 : i32, i32
  }
  func.func @transform_19(%arg0: i32) -> (i32, i32) {
    %c0_i32 = arith.constant 0 : i32
    %c0_i32_0 = arith.constant 0 : i32
    %c0_i32_1 = arith.constant 0 : i32
    return %c0_i32, %c0_i32_0 : i32, i32
  }
  func.func @transform_20(%arg0: i32) -> (i32, i32) {
    %c0_i32 = arith.constant 0 : i32
    %c0_i32_0 = arith.constant 0 : i32
    %c0_i32_1 = arith.constant 0 : i32
    return %c0_i32, %c0_i32_0 : i32, i32
  }
}

</mosaic_0001>

<llo_original>
// kernel: query_doc_model.1
$region0: #{query_doc_model.1}
  #allocation0 [shape = 'u32[]', space=smem, size = 0x4, offset = 0x4, fixed_abs, tag = 'smem constant byte address 0x4 - core index']
  #allocation1 [shape = 'u32[144,128]{1,0:T(1,128)}', space=vmem, size = 0x12000, scoped, tag = 'internal scratch']
  %s0 = inlined_call_operand.vmem [shape: f32[32,32], index: 0, kind: input, shape index: {}]
  %s1 = inlined_call_operand.vmem [shape: s32[1,32], index: 1, kind: input, shape index: {}]
  %s2 = inlined_call_operand.vmem [shape: f32[16,32], index: 2, kind: input, shape index: {}]
  %s3 = inlined_call_operand.vmem [shape: f32[2,32], index: 3, kind: input, shape index: {}]
  %s4 = inlined_call_operand.vmem [shape: f32[1,32], index: 4, kind: input, shape index: {}]
  %s5 = inlined_call_operand.vmem [shape: f32[1,32], index: 5, kind: input, shape index: {}]
  %s6 = inlined_call_operand.vmem [shape: bf16[2,32,96], index: 6, kind: input, shape index: {}]
  %s7 = inlined_call_operand.vmem [shape: f32[2,1,96], index: 7, kind: input, shape index: {}]
  %s8 = inlined_call_operand.vmem [shape: bf16[2,32,32], index: 8, kind: input, shape index: {}]
  %s9 = inlined_call_operand.vmem [shape: f32[2,1,32], index: 9, kind: input, shape index: {}]
  %s10 = inlined_call_operand.vmem [shape: f32[2,1,32], index: 10, kind: input, shape index: {}]
  %s11 = inlined_call_operand.vmem [shape: f32[2,1,32], index: 11, kind: input, shape index: {}]
  %s12 = inlined_call_operand.vmem [shape: bf16[2,32,64], index: 12, kind: input, shape index: {}]
  %s13 = inlined_call_operand.vmem [shape: f32[2,1,64], index: 13, kind: input, shape index: {}]
  %s14 = inlined_call_operand.vmem [shape: bf16[2,64,32], index: 14, kind: input, shape index: {}]
  %s15 = inlined_call_operand.vmem [shape: f32[2,1,32], index: 15, kind: input, shape index: {}]
  %s16 = inlined_call_operand.vmem [shape: f32[2,1,32], index: 16, kind: input, shape index: {}]
  %s17 = inlined_call_operand.vmem [shape: f32[2,1,32], index: 17, kind: input, shape index: {}]
  %s18 = inlined_call_operand.vmem [shape: bf16[32,128], index: 18, kind: input, shape index: {}]
  %s19 = inlined_call_operand.vmem [shape: f32[1,128], index: 19, kind: input, shape index: {}]
  %s20 = inlined_call_operand.vmem [shape: f32[4,128], index: 20, kind: output, shape index: {}]
  %s21 = sld [smem:[#allocation0]]
  $region90: #{query_doc_model.1} parent=0
    _
  %s23 = ssub.s32 1, %s21
  %s24 = scalar_select 0, %s23, %s21
  // Predicated region
  $region2: #{query_doc_model.1} parent=0 // pred_check
    _
  $region3: #{query_doc_model.1} parent=0 // pred_check_branch
    %26 = sbr.rel (0) target = $region5
  $region4: #{query_doc_model.1} parent=0 // pred_region
    _
  $region5: #{query_doc_model.1} parent=0 // pred_fallthru
    _
  // Predicated region
  $region6: #{query_doc_model.1} parent=0 // pred_check
    _
  $region7: #{query_doc_model.1} parent=0 // pred_check_branch
    %28 = sbr.rel (0) target = $region9
  $region8: #{query_doc_model.1} parent=0 // pred_region
    _
  $region9: #{query_doc_model.1} parent=0 // pred_fallthru
    _
  // Predicated region
  $region10: #{query_doc_model.1} parent=0 // pred_check
    _
  $region11: #{query_doc_model.1} parent=0 // pred_check_branch
    %30 = sbr.rel (0) target = $region13
  $region12: #{query_doc_model.1} parent=0 // pred_region
    _
  $region13: #{query_doc_model.1} parent=0 // pred_fallthru
    _
  // Predicated region
  $region14: #{query_doc_model.1} parent=0 // pred_check
    _
  $region15: #{query_doc_model.1} parent=0 // pred_check_branch
    %32 = sbr.rel (0) target = $region17
  $region16: #{query_doc_model.1} parent=0 // pred_region
    _
  $region17: #{query_doc_model.1} parent=0 // pred_fallthru
    _
  // Predicated region
  $region18: #{query_doc_model.1} parent=0 // pred_check
    _
  $region19: #{query_doc_model.1} parent=0 // pred_check_branch
    %34 = sbr.rel (0) target = $region21
  $region20: #{query_doc_model.1} parent=0 // pred_region
    _
  $region21: #{query_doc_model.1} parent=0 // pred_fallthru
    _
  // Predicated region
  $region22: #{query_doc_model.1} parent=0 // pred_check
    _
  $region23: #{query_doc_model.1} parent=0 // pred_check_branch
    %36 = sbr.rel (0) target = $region25
  $region24: #{query_doc_model.1} parent=0 // pred_region
    _
  $region25: #{query_doc_model.1} parent=0 // pred_fallthru
    _
  // Predicated region
  $region26: #{query_doc_model.1} parent=0 // pred_check
    _
  $region27: #{query_doc_model.1} parent=0 // pred_check_branch
    %38 = sbr.rel (0) target = $region29
  $region28: #{query_doc_model.1} parent=0 // pred_region
    _
  $region29: #{query_doc_model.1} parent=0 // pred_fallthru
    _
  // Predicated region
  $region30: #{query_doc_model.1} parent=0 // pred_check
    _
  $region31: #{query_doc_model.1} parent=0 // pred_check_branch
    %40 = sbr.rel (0) target = $region33
  $region32: #{query_doc_model.1} parent=0 // pred_region
    _
  $region33: #{query_doc_model.1} parent=0 // pred_fallthru
    _
  // Predicated region
  $region34: #{query_doc_model.1} parent=0 // pred_check
    _
  $region35: #{query_doc_model.1} parent=0 // pred_check_branch
    %42 = sbr.rel (0) target = $region37
  $region36: #{query_doc_model.1} parent=0 // pred_region
    _
  $region37: #{query_doc_model.1} parent=0 // pred_fallthru
    _
  // Predicated region
  $region38: #{query_doc_model.1} parent=0 // pred_check
    _
  $region39: #{query_doc_model.1} parent=0 // pred_check_branch
    %44 = sbr.rel (0) target = $region41
  $region40: #{query_doc_model.1} parent=0 // pred_region
    _
  $region41: #{query_doc_model.1} parent=0 // pred_fallthru
    _
  // Predicated region
  $region42: #{query_doc_model.1} parent=0 // pred_check
    _
  $region43: #{query_doc_model.1} parent=0 // pred_check_branch
    %46 = sbr.rel (0) target = $region45
  $region44: #{query_doc_model.1} parent=0 // pred_region
    _
  $region45: #{query_doc_model.1} parent=0 // pred_fallthru
    _
  // Predicated region
  $region46: #{query_doc_model.1} parent=0 // pred_check
    _
  $region47: #{query_doc_model.1} parent=0 // pred_check_branch
    %48 = sbr.rel (0) target = $region49
  $region48: #{query_doc_model.1} parent=0 // pred_region
    _
  $region49: #{query_doc_model.1} parent=0 // pred_fallthru
    _
  // Predicated region
  $region50: #{query_doc_model.1} parent=0 // pred_check
    _
  $region51: #{query_doc_model.1} parent=0 // pred_check_branch
    %50 = sbr.rel (0) target = $region53
  $region52: #{query_doc_model.1} parent=0 // pred_region
    _
  $region53: #{query_doc_model.1} parent=0 // pred_fallthru
    _
  // Predicated region
  $region54: #{query_doc_model.1} parent=0 // pred_check
    _
  $region55: #{query_doc_model.1} parent=0 // pred_check_branch
    %52 = sbr.rel (0) target = $region57
  $region56: #{query_doc_model.1} parent=0 // pred_region
    _
  $region57: #{query_doc_model.1} parent=0 // pred_fallthru
    _
  // Predicated region
  $region58: #{query_doc_model.1} parent=0 // pred_check
    _
  $region59: #{query_doc_model.1} parent=0 // pred_check_branch
    %54 = sbr.rel (0) target = $region61
  $region60: #{query_doc_model.1} parent=0 // pred_region
    _
  $region61: #{query_doc_model.1} parent=0 // pred_fallthru
    _
  // Predicated region
  $region62: #{query_doc_model.1} parent=0 // pred_check
    _
  $region63: #{query_doc_model.1} parent=0 // pred_check_branch
    %56 = sbr.rel (0) target = $region65
  $region64: #{query_doc_model.1} parent=0 // pred_region
    _
  $region65: #{query_doc_model.1} parent=0 // pred_fallthru
    _
  // Predicated region
  $region66: #{query_doc_model.1} parent=0 // pred_check
    _
  $region67: #{query_doc_model.1} parent=0 // pred_check_branch
    %58 = sbr.rel (0) target = $region69
  $region68: #{query_doc_model.1} parent=0 // pred_region
    _
  $region69: #{query_doc_model.1} parent=0 // pred_fallthru
    _
  // Predicated region
  $region70: #{query_doc_model.1} parent=0 // pred_check
    _
  $region71: #{query_doc_model.1} parent=0 // pred_check_branch
    %60 = sbr.rel (0) target = $region73
  $region72: #{query_doc_model.1} parent=0 // pred_region
    _
  $region73: #{query_doc_model.1} parent=0 // pred_fallthru
    _
  // Predicated region
  $region74: #{query_doc_model.1} parent=0 // pred_check
    _
  $region75: #{query_doc_model.1} parent=0 // pred_check_branch
    %62 = sbr.rel (0) target = $region77
  $region76: #{query_doc_model.1} parent=0 // pred_region
    _
  $region77: #{query_doc_model.1} parent=0 // pred_fallthru
    _
  // Predicated region
  $region78: #{query_doc_model.1} parent=0 // pred_check
    _
  $region79: #{query_doc_model.1} parent=0 // pred_check_branch
    %64 = sbr.rel (0) target = $region81
  $region80: #{query_doc_model.1} parent=0 // pred_region
    _
  $region81: #{query_doc_model.1} parent=0 // pred_fallthru
    _
  %v66 = vld [vmem:[%s2] sm:$0xff]
  %v67 = vld [vmem:[%s3] sm:$0x1]
  %v68 = vlaneseq
  %v69 = vshrl.u32 %v68, 7
  %v70 = vsub.s32 0, %v69
  %v71 = vrot.slane %v67, %v70
  %v72 = vadd.f32 %v66, %v71
  %v73 = vld [vmem:[%s0] sm:$0xff]
  %v74 = vld [vmem:[%s0 + $0x8] sm:$0xff]
  %v75 = vld [vmem:[%s0 + $0x10] sm:$0xff]
  %v76 = vld [vmem:[%s0 + $0x18] sm:$0xff]
  %v77 = vadd.f32 %v73, %v72
  %v78 = vadd.f32 %v74, %v72
  %v79 = vadd.f32 %v75, %v72
  %v80 = vadd.f32 %v76, %v72
  %v81 = vld [vmem:[%s4] sm:$0x1]
  %v82 = vld [vmem:[%s5] sm:$0x1]
  %vm83 = vcmask 261120
  %v84 = vsel %vm83, %v77, 0.0
  %85 = vadd.xlane.f32.xlu0 %v84
  %v86 = vpop.xlane.xlu0 %85
  %v87 = vsel %vm83, %v78, 0.0
  %88 = vadd.xlane.f32.xlu0 %v87
  %v89 = vpop.xlane.xlu0 %88
  %v90 = vsel %vm83, %v79, 0.0
  %91 = vadd.xlane.f32.xlu0 %v90
  %v92 = vpop.xlane.xlu0 %91
  %v93 = vsel %vm83, %v80, 0.0
  %94 = vadd.xlane.f32.xlu0 %v93
  %v95 = vpop.xlane.xlu0 %94
  %v96 = vrcp.pop 32.0
  %v97 = vmul.f32 %v86, %v96
  %v98 = vmul.f32 %v89, %v96
  %v99 = vmul.f32 %v92, %v96
  %v100 = vmul.f32 %v95, %v96
  %v101 = vsub.f32 %v77, %v97
  %v102 = vsub.f32 %v78, %v98
  %v103 = vsub.f32 %v79, %v99
  %v104 = vsub.f32 %v80, %v100
  %v105 = vmul.f32 %v101, %v101
  %v106 = vmul.f32 %v102, %v102
  %v107 = vmul.f32 %v103, %v103
  %v108 = vmul.f32 %v104, %v104
  %v109 = vsel %vm83, %v105, 0.0
  %110 = vadd.xlane.f32.xlu0 %v109
  %v111 = vpop.xlane.xlu0 %110
  %v112 = vsel %vm83, %v106, 0.0
  %113 = vadd.xlane.f32.xlu0 %v112
  %v114 = vpop.xlane.xlu0 %113
  %v115 = vsel %vm83, %v107, 0.0
  %116 = vadd.xlane.f32.xlu0 %v115
  %v117 = vpop.xlane.xlu0 %116
  %v118 = vsel %vm83, %v108, 0.0
  %119 = vadd.xlane.f32.xlu0 %v118
  %v120 = vpop.xlane.xlu0 %119
  %v121 = vmul.f32 %v111, %v96
  %v122 = vmul.f32 %v114, %v96
  %v123 = vmul.f32 %v117, %v96
  %v124 = vmul.f32 %v120, %v96
  %v125 = vadd.f32 %v121, 1e-12
  %v126 = vadd.f32 %v122, 1e-12
  %v127 = vadd.f32 %v123, 1e-12
  %v128 = vadd.f32 %v124, 1e-12
  %v129 = vrsqrt.pop %v125
  %v130 = vrsqrt.pop %v126
  %v131 = vrsqrt.pop %v127
  %v132 = vrsqrt.pop %v128
  %v133 = vmul.f32 %v101, %v129
  %v134 = vmul.f32 %v102, %v130
  %v135 = vmul.f32 %v103, %v131
  %v136 = vmul.f32 %v104, %v132
  %v138 = vlaneseq
  %v139 = vshrl.u32 %v138, 7
  %v140 = vsub.s32 0, %v139
  %v141 = vrot.slane %v81, %v140
  %v143 = vmul.f32 %v133, %v141
  %v144 = vmul.f32 %v134, %v141
  %v145 = vmul.f32 %v135, %v141
  %v146 = vmul.f32 %v136, %v141
  %v148 = vlaneseq
  %v149 = vshrl.u32 %v148, 7
  %v150 = vsub.s32 0, %v149
  %v151 = vrot.slane %v82, %v150
  %v153 = vadd.f32 %v143, %v151
  %v154 = vadd.f32 %v144, %v151
  %v155 = vadd.f32 %v145, %v151
  %v156 = vadd.f32 %v146, %v151
  %v157 = vlaneseq
  %v158 = vshrl.u32 %v157, 7
  %v159 = vadd.s32 %v158, 8
  %v160 = vadd.s32 %v158, 16
  %v161 = vadd.s32 %v158, 24
  %v162 = vlaneseq
  %v163 = vand.u32 %v162, 127
  %vm164 = vcmp.ge.s32.totalorder %v158, 0
  %vm165 = vcmp.ge.s32.totalorder %v159, 0
  %vm166 = vcmp.ge.s32.totalorder %v160, 0
  %vm167 = vcmp.ge.s32.totalorder %v161, 0
  %vm168 = vcmp.lt.s32.totalorder %v158, 8
  %vm169 = vcmp.lt.s32.totalorder %v159, 8
  %vm170 = vcmp.lt.s32.totalorder %v160, 8
  %vm171 = vcmp.lt.s32.totalorder %v161, 8
  %vm172 = vmand %vm164, %vm168
  %vm173 = vmand %vm165, %vm169
  %vm174 = vmand %vm166, %vm170
  %vm175 = vmand %vm167, %vm171
  %vm176 = vcmp.ge.s32.totalorder %v163, 0
  %vm177 = vmand %vm172, %vm176
  %vm178 = vmand %vm173, %vm176
  %vm179 = vmand %vm174, %vm176
  %vm180 = vmand %vm175, %vm176
  %vm181 = vcmp.lt.s32.totalorder %v163, 8
  %vm182 = vmand %vm177, %vm181
  %vm183 = vmand %vm178, %vm181
  %vm184 = vmand %vm179, %vm181
  %vm185 = vmand %vm180, %vm181
  %vm186 = vcmp.ge.s32.totalorder %v158, 8
  %vm187 = vcmp.ge.s32.totalorder %v159, 8
  %vm188 = vcmp.ge.s32.totalorder %v160, 8
  %vm189 = vcmp.ge.s32.totalorder %v161, 8
  %vm190 = vcmp.lt.s32.totalorder %v158, 16
  %vm191 = vcmp.lt.s32.totalorder %v159, 16
  %vm192 = vcmp.lt.s32.totalorder %v160, 16
  %vm193 = vcmp.lt.s32.totalorder %v161, 16
  %vm194 = vmand %vm186, %vm190
  %vm195 = vmand %vm187, %vm191
  %vm196 = vmand %vm188, %vm192
  %vm197 = vmand %vm189, %vm193
  %vm198 = vcmp.ge.s32.totalorder %v163, 8
  %vm199 = vmand %vm194, %vm198
  %vm200 = vmand %vm195, %vm198
  %vm201 = vmand %vm196, %vm198
  %vm202 = vmand %vm197, %vm198
  %vm203 = vcmp.lt.s32.totalorder %v163, 16
  %vm204 = vmand %vm199, %vm203
  %vm205 = vmand %vm200, %vm203
  %vm206 = vmand %vm201, %vm203
  %vm207 = vmand %vm202, %vm203
  %vm208 = vmor %vm182, %vm204
  %vm209 = vmor %vm183, %vm205
  %vm210 = vmor %vm184, %vm206
  %vm211 = vmor %vm185, %vm207
  %vm212 = vcmp.ge.s32.totalorder %v158, 16
  %vm213 = vcmp.ge.s32.totalorder %v159, 16
  %vm214 = vcmp.ge.s32.totalorder %v160, 16
  %vm215 = vcmp.ge.s32.totalorder %v161, 16
  %vm216 = vcmp.lt.s32.totalorder %v158, 24
  %vm217 = vcmp.lt.s32.totalorder %v159, 24
  %vm218 = vcmp.lt.s32.totalorder %v160, 24
  %vm219 = vcmp.lt.s32.totalorder %v161, 24
  %vm220 = vmand %vm212, %vm216
  %vm221 = vmand %vm213, %vm217
  %vm222 = vmand %vm214, %vm218
  %vm223 = vmand %vm215, %vm219
  %vm224 = vcmp.ge.s32.totalorder %v163, 16
  %vm225 = vmand %vm220, %vm224
  %vm226 = vmand %vm221, %vm224
  %vm227 = vmand %vm222, %vm224
  %vm228 = vmand %vm223, %vm224
  %vm229 = vcmp.lt.s32.totalorder %v163, 24
  %vm230 = vmand %vm225, %vm229
  %vm231 = vmand %vm226, %vm229
  %vm232 = vmand %vm227, %vm229
  %vm233 = vmand %vm228, %vm229
  %vm234 = vmor %vm208, %vm230
  %vm235 = vmor %vm209, %vm231
  %vm236 = vmor %vm210, %vm232
  %vm237 = vmor %vm211, %vm233
  %vm238 = vcmp.ge.s32.totalorder %v158, 24
  %vm239 = vcmp.ge.s32.totalorder %v159, 24
  %vm240 = vcmp.ge.s32.totalorder %v160, 24
  %vm241 = vcmp.ge.s32.totalorder %v161, 24
  %vm242 = vcmp.lt.s32.totalorder %v158, 32
  %vm243 = vcmp.lt.s32.totalorder %v159, 32
  %vm244 = vcmp.lt.s32.totalorder %v160, 32
  %vm245 = vcmp.lt.s32.totalorder %v161, 32
  %vm246 = vmand %vm238, %vm242
  %vm247 = vmand %vm239, %vm243
  %vm248 = vmand %vm240, %vm244
  %vm249 = vmand %vm241, %vm245
  %vm250 = vcmp.ge.s32.totalorder %v163, 24
  %vm251 = vmand %vm246, %vm250
  %vm252 = vmand %vm247, %vm250
  %vm253 = vmand %vm248, %vm250
  %vm254 = vmand %vm249, %vm250
  %vm255 = vcmp.lt.s32.totalorder %v163, 32
  %vm256 = vmand %vm251, %vm255
  %vm257 = vmand %vm252, %vm255
  %vm258 = vmand %vm253, %vm255
  %vm259 = vmand %vm254, %vm255
  %vm260 = vmor %vm234, %vm256
  %vm261 = vmor %vm235, %vm257
  %vm262 = vmor %vm236, %vm258
  %vm263 = vmor %vm237, %vm259
  %v264 = vld [vmem:[%s1] sm:$0x1]
  %vm265 = vcmp.gt.s32.totalorder %v264, 0
  %v266 = vsel %vm265, 1, 0
  %v267 = vlaneseq
  %v268 = vshrl.u32 %v267, 7
  %v269 = vsub.s32 0, %v268
  %v270 = vrot.slane %v266, %v269
  %vm271 = vcmp.eq.s32.totalorder %v270, 1
  %vm272 = vmand %vm260, %vm271
  %vm273 = vmand %vm261, %vm271
  %vm274 = vmand %vm262, %vm271
  %vm275 = vmand %vm263, %vm271
  %v276 = vsel %vm272, 0.0, -10000.0
  %v277 = vsel %vm273, 0.0, -10000.0
  %v278 = vsel %vm274, 0.0, -10000.0
  %v279 = vsel %vm275, 0.0, -10000.0
  %vm280 = vmand %vm176, %vm181
  %v281 = vsel %vm280, 1, 0
  %v282 = vcvt.s32.f32 %v281
  %vm283 = vmand %vm198, %vm203
  %v284 = vsel %vm283, 1, 0
  %v285 = vcvt.s32.f32 %v284
  %vm286 = vmand %vm224, %vm229
  %v287 = vsel %vm286, 1, 0
  %v288 = vcvt.s32.f32 %v287
  %vm289 = vmand %vm250, %vm255
  %v290 = vsel %vm289, 1, 0
  %v291 = vcvt.s32.f32 %v290
  %v292 = vmul.u32 %v158, 8
  %vm293 = vcmp.eq.s32.totalorder %v163, %v292
  %v294 = vsel %vm293, 1, 0
  %v295 = vcvt.s32.f32 %v294
  %v296 = vpack.c.bf16 %v295, %v295
  %v297 = vld [vmem:[%s6] sm:$0xf]
  %v298 = vld [vmem:[%s6 + $0x4] sm:$0xf]
  %v299 = vld [vmem:[%s6 + $0x8] sm:$0xf]
  %v300 = vld [vmem:[%s6 + $0xc] sm:$0xf]
  %v301 = vpack.c.bf16 %v154, %v153
  %v302 = vpack.c.bf16 %v156, %v155
  %v303 = vld [vmem:[%s7] sm:$0x1]
  %v305 = vlaneseq
  %v306 = vshrl.u32 %v305, 7
  %v307 = vsub.s32 0, %v306
  %v308 = vrot.slane %v303, %v307
  %v314 = vunpack.c.l.b16 %v297
  %v315 = vunpack.c.l.b16 %v298
  %v316 = vunpack.c.l.b16 %v299
  %v317 = vunpack.c.l.b16 %v300
  %v318 = vpack.c.b16 %v315, %v314
  %v319 = vpack.c.b16 %v317, %v316
  %v323 = vsel %vm83, %v301, 0
  %v326 = vsel %vm83, %v302, 0
  %328 = vmatprep.subr.bf16.mxu0 0
  %329 = vmatpush1.bf16.msra.mxu0 0
  %330 = vmatprep.subr.bf16.mxu0 0
  %331 = vmatpush1.bf16.msra.mxu0 0
  %332 = vmatprep.subr.bf16.mxu0 0
  %333 = vmatpush1.bf16.msra.mxu0 0
  %334 = vmatprep.subr.bf16.mxu0 0
  %335 = vmatpush1.bf16.msra.mxu0 0
  %336 = vmatprep.subr.bf16.mxu0 0
  %337 = vmatpush1.bf16.msra.mxu0 0
  %338 = vmatprep.subr.bf16.mxu0 0
  %339 = vmatpush1.bf16.msra.mxu0 0
  %340 = vmatprep.subr.bf16.mxu0 0
  %341 = vmatpush1.bf16.msra.mxu0 %v319
  %342 = vmatprep.subr.bf16.mxu0 0
  %343 = vmatpush1.bf16.msra.mxu0 %v318
  %344 = vmatprep.subr.bf16.mxu0 0
  %345 = vmatpush2.bf16.msra.mxu0 0
  %346 = vmatprep.subr.bf16.mxu0 0
  %347 = vmatpush2.bf16.msra.mxu0 0
  %348 = vmatprep.subr.bf16.mxu0 0
  %349 = vmatpush2.bf16.msra.mxu0 0
  %350 = vmatprep.subr.bf16.mxu0 0
  %351 = vmatpush2.bf16.msra.mxu0 0
  %352 = vmatprep.subr.bf16.mxu0 0
  %353 = vmatpush2.bf16.msra.mxu0 0
  %354 = vmatprep.subr.bf16.mxu0 0
  %355 = vmatpush2.bf16.msra.mxu0 0
  %356 = vmatprep.subr.bf16.mxu0 0
  %357 = vmatpush2.bf16.msra.mxu0 0
  %358 = vmatprep.subr.bf16.mxu0 0
  %359 = vmatpush2.bf16.msra.mxu0 0
  %360 = vmatprep.mubr.bf16.mxu0 0
  %361 = vmatmul.mubr.bf16.gmra.mxu0 %v323
  %v362 = vpop.f32.mrf.mxu0
  %v363 = vadd.f32 %v308, %v362
  %v364 = vpop.f32.mrf.mxu0
  %v365 = vpop.f32.mrf.mxu0
  %v366 = vadd.f32 %v308, %v365
  %v367 = vpop.f32.mrf.mxu0
  %368 = vmatprep.mubr.bf16.mxu0 0
  %369 = vmatmul.mubr.bf16.gmra.mxu0 %v326
  %v370 = vpop.f32.mrf.mxu0
  %v371 = vadd.f32 %v308, %v370
  %v372 = vpop.f32.mrf.mxu0
  %v373 = vpop.f32.mrf.mxu0
  %v374 = vadd.f32 %v308, %v373
  %v375 = vpop.f32.mrf.mxu0
  %376 = vdwg.mxu0
  %v377 = vpack.c.bf16 %v366, %v363
  %v378 = vpack.c.bf16 %v374, %v371
  %v379 = vmul.f32 %v363, %v282
  %v380 = vmul.f32 %v366, %v282
  %v381 = vmul.f32 %v371, %v282
  %v382 = vmul.f32 %v374, %v282
  %v383 = vpack.c.bf16 %v380, %v379
  %v384 = vpack.c.bf16 %v382, %v381
  %387 = vrot.lane.b32.xlu0 %v377, 96
  %v388 = vpop.permute.xlu0 %387
  %389 = vrot.lane.b32.xlu0 %v378, 96
  %v390 = vpop.permute.xlu0 %389
  %v392 = vsel %vm83, %v383, 0
  %v395 = vsel %vm83, %v384, 0
  %v398 = vsel %vm83, %v388, 0
  %v401 = vsel %vm83, %v390, 0
  %403 = vmatprep.subr.bf16.mxu0 0
  %404 = vmatpush1.bf16.xpose.msra.mxu0 0
  %405 = vmatprep.subr.bf16.mxu0 0
  %406 = vmatpush1.bf16.xpose.msra.mxu0 0
  %407 = vmatprep.subr.bf16.mxu0 0
  %408 = vmatpush1.bf16.xpose.msra.mxu0 0
  %409 = vmatprep.subr.bf16.mxu0 0
  %410 = vmatpush1.bf16.xpose.msra.mxu0 0
  %411 = vmatprep.subr.bf16.mxu0 0
  %412 = vmatpush1.bf16.xpose.msra.mxu0 0
  %413 = vmatprep.subr.bf16.mxu0 0
  %414 = vmatpush1.bf16.xpose.msra.mxu0 0
  %415 = vmatprep.subr.bf16.mxu0 0
  %416 = vmatpush1.bf16.xpose.msra.mxu0 %v401
  %417 = vmatprep.subr.bf16.mxu0 0
  %418 = vmatpush1.bf16.xpose.msra.mxu0 %v398
  %419 = vmatprep.subr.bf16.mxu0 0
  %420 = vmatpush2.bf16.xpose.msra.mxu0 0
  %421 = vmatprep.subr.bf16.mxu0 0
  %422 = vmatpush2.bf16.xpose.msra.mxu0 0
  %423 = vmatprep.subr.bf16.mxu0 0
  %424 = vmatpush2.bf16.xpose.msra.mxu0 0
  %425 = vmatprep.subr.bf16.mxu0 0
  %426 = vmatpush2.bf16.xpose.msra.mxu0 0
  %427 = vmatprep.subr.bf16.mxu0 0
  %428 = vmatpush2.bf16.xpose.msra.mxu0 0
  %429 = vmatprep.subr.bf16.mxu0 0
  %430 = vmatpush2.bf16.xpose.msra.mxu0 0
  %431 = vmatprep.subr.bf16.mxu0 0
  %432 = vmatpush2.bf16.xpose.msra.mxu0 0
  %433 = vmatprep.subr.bf16.mxu0 0
  %434 = vmatpush2.bf16.xpose.msra.mxu0 0
  %435 = vmatprep.mubr.bf16.mxu0 0
  %436 = vmatmul.mubr.bf16.gmra.mxu0 %v392
  %v437 = vpop.f32.mrf.mxu0
  %v438 = vadd.f32 %v276, %v437
  %v439 = vpop.f32.mrf.mxu0
  %v440 = vpop.f32.mrf.mxu0
  %v441 = vadd.f32 %v277, %v440
  %v442 = vpop.f32.mrf.mxu0
  %443 = vmatprep.mubr.bf16.mxu0 0
  %444 = vmatmul.mubr.bf16.gmra.mxu0 %v395
  %v445 = vpop.f32.mrf.mxu0
  %v446 = vadd.f32 %v278, %v445
  %v447 = vpop.f32.mrf.mxu0
  %v448 = vpop.f32.mrf.mxu0
  %v449 = vadd.f32 %v279, %v448
  %v450 = vpop.f32.mrf.mxu0
  %451 = vdwg.mxu0
  %v452 = vsel %vm83, %v438, -inf
  %453 = vmax.xlane.f32.xlu0 %v452
  %v454 = vpop.xlane.xlu0 %453
  %v455 = vsel %vm83, %v441, -inf
  %456 = vmax.xlane.f32.xlu0 %v455
  %v457 = vpop.xlane.xlu0 %456
  %v458 = vsel %vm83, %v446, -inf
  %459 = vmax.xlane.f32.xlu0 %v458
  %v460 = vpop.xlane.xlu0 %459
  %v461 = vsel %vm83, %v449, -inf
  %462 = vmax.xlane.f32.xlu0 %v461
  %v463 = vpop.xlane.xlu0 %462
  %v464 = vsub.f32 %v438, %v454
  %v465 = vsub.f32 %v441, %v457
  %v466 = vsub.f32 %v446, %v460
  %v467 = vsub.f32 %v449, %v463
  %v468 = vmul.f32 %v464, 1.442695
  %v469 = vpow.pop %v468
  %v470 = vmul.f32 %v465, 1.442695
  %v471 = vpow.pop %v470
  %v472 = vmul.f32 %v466, 1.442695
  %v473 = vpow.pop %v472
  %v474 = vmul.f32 %v467, 1.442695
  %v475 = vpow.pop %v474
  %v476 = vsel %vm83, %v469, 0.0
  %477 = vadd.xlane.f32.xlu0 %v476
  %v478 = vpop.xlane.xlu0 %477
  %v479 = vsel %vm83, %v471, 0.0
  %480 = vadd.xlane.f32.xlu0 %v479
  %v481 = vpop.xlane.xlu0 %480
  %v482 = vsel %vm83, %v473, 0.0
  %483 = vadd.xlane.f32.xlu0 %v482
  %v484 = vpop.xlane.xlu0 %483
  %v485 = vsel %vm83, %v475, 0.0
  %486 = vadd.xlane.f32.xlu0 %v485
  %v487 = vpop.xlane.xlu0 %486
  %v488 = vrcp.pop %v478
  %v489 = vrcp.pop %v481
  %v490 = vrcp.pop %v484
  %v491 = vrcp.pop %v487
  %v492 = vmul.f32 %v469, %v488
  %v493 = vmul.f32 %v471, %v489
  %v494 = vmul.f32 %v473, %v490
  %v495 = vmul.f32 %v475, %v491
  %497 = vrot.lane.b32.xlu0 %v282, 64
  %v498 = vpop.permute.xlu0 %497
  %v500 = vmul.f32 %v363, %v498
  %v501 = vmul.f32 %v366, %v498
  %v502 = vmul.f32 %v371, %v498
  %v503 = vmul.f32 %v374, %v498
  %v504 = vpack.c.bf16 %v501, %v500
  %v505 = vpack.c.bf16 %v503, %v502
  %v506 = vpack.c.bf16 %v493, %v492
  %v507 = vpack.c.bf16 %v495, %v494
  %v508 = vmul.f32 %v363, %v285
  %v509 = vmul.f32 %v366, %v285
  %v510 = vmul.f32 %v371, %v285
  %v511 = vmul.f32 %v374, %v285
  %v512 = vpack.c.bf16 %v509, %v508
  %v513 = vpack.c.bf16 %v511, %v510
  %v515 = vsel %vm83, %v512, 0
  %v518 = vsel %vm83, %v513, 0
  %520 = vmatprep.subr.bf16.mxu0 0
  %521 = vmatpush1.bf16.xpose.msra.mxu0 0
  %522 = vmatprep.subr.bf16.mxu0 0
  %523 = vmatpush1.bf16.xpose.msra.mxu0 0
  %524 = vmatprep.subr.bf16.mxu0 0
  %525 = vmatpush1.bf16.xpose.msra.mxu0 0
  %526 = vmatprep.subr.bf16.mxu0 0
  %527 = vmatpush1.bf16.xpose.msra.mxu0 0
  %528 = vmatprep.subr.bf16.mxu0 0
  %529 = vmatpush1.bf16.xpose.msra.mxu0 0
  %530 = vmatprep.subr.bf16.mxu0 0
  %531 = vmatpush1.bf16.xpose.msra.mxu0 0
  %532 = vmatprep.subr.bf16.mxu0 0
  %533 = vmatpush1.bf16.xpose.msra.mxu0 %v401
  %534 = vmatprep.subr.bf16.mxu0 0
  %535 = vmatpush1.bf16.xpose.msra.mxu0 %v398
  %536 = vmatprep.subr.bf16.mxu0 0
  %537 = vmatpush2.bf16.xpose.msra.mxu0 0
  %538 = vmatprep.subr.bf16.mxu0 0
  %539 = vmatpush2.bf16.xpose.msra.mxu0 0
  %540 = vmatprep.subr.bf16.mxu0 0
  %541 = vmatpush2.bf16.xpose.msra.mxu0 0
  %542 = vmatprep.subr.bf16.mxu0 0
  %543 = vmatpush2.bf16.xpose.msra.mxu0 0
  %544 = vmatprep.subr.bf16.mxu0 0
  %545 = vmatpush2.bf16.xpose.msra.mxu0 0
  %546 = vmatprep.subr.bf16.mxu0 0
  %547 = vmatpush2.bf16.xpose.msra.mxu0 0
  %548 = vmatprep.subr.bf16.mxu0 0
  %549 = vmatpush2.bf16.xpose.msra.mxu0 0
  %550 = vmatprep.subr.bf16.mxu0 0
  %551 = vmatpush2.bf16.xpose.msra.mxu0 0
  %552 = vmatprep.mubr.bf16.mxu0 0
  %553 = vmatmul.mubr.bf16.gmra.mxu0 %v515
  %v554 = vpop.f32.mrf.mxu0
  %v555 = vadd.f32 %v276, %v554
  %v556 = vpop.f32.mrf.mxu0
  %v557 = vpop.f32.mrf.mxu0
  %v558 = vadd.f32 %v277, %v557
  %v559 = vpop.f32.mrf.mxu0
  %560 = vmatprep.mubr.bf16.mxu0 0
  %561 = vmatmul.mubr.bf16.gmra.mxu0 %v518
  %v562 = vpop.f32.mrf.mxu0
  %v563 = vadd.f32 %v278, %v562
  %v564 = vpop.f32.mrf.mxu0
  %v565 = vpop.f32.mrf.mxu0
  %v566 = vadd.f32 %v279, %v565
  %v567 = vpop.f32.mrf.mxu0
  %568 = vdwg.mxu0
  %v569 = vsel %vm83, %v555, -inf
  %570 = vmax.xlane.f32.xlu0 %v569
  %v571 = vpop.xlane.xlu0 %570
  %v572 = vsel %vm83, %v558, -inf
  %573 = vmax.xlane.f32.xlu0 %v572
  %v574 = vpop.xlane.xlu0 %573
  %v575 = vsel %vm83, %v563, -inf
  %576 = vmax.xlane.f32.xlu0 %v575
  %v577 = vpop.xlane.xlu0 %576
  %v578 = vsel %vm83, %v566, -inf
  %579 = vmax.xlane.f32.xlu0 %v578
  %v580 = vpop.xlane.xlu0 %579
  %v581 = vsub.f32 %v555, %v571
  %v582 = vsub.f32 %v558, %v574
  %v583 = vsub.f32 %v563, %v577
  %v584 = vsub.f32 %v566, %v580
  %v585 = vmul.f32 %v581, 1.442695
  %v586 = vpow.pop %v585
  %v587 = vmul.f32 %v582, 1.442695
  %v588 = vpow.pop %v587
  %v589 = vmul.f32 %v583, 1.442695
  %v590 = vpow.pop %v589
  %v591 = vmul.f32 %v584, 1.442695
  %v592 = vpow.pop %v591
  %v593 = vsel %vm83, %v586, 0.0
  %594 = vadd.xlane.f32.xlu0 %v593
  %v595 = vpop.xlane.xlu0 %594
  %v596 = vsel %vm83, %v588, 0.0
  %597 = vadd.xlane.f32.xlu0 %v596
  %v598 = vpop.xlane.xlu0 %597
  %v599 = vsel %vm83, %v590, 0.0
  %600 = vadd.xlane.f32.xlu0 %v599
  %v601 = vpop.xlane.xlu0 %600
  %v602 = vsel %vm83, %v592, 0.0
  %603 = vadd.xlane.f32.xlu0 %v602
  %v604 = vpop.xlane.xlu0 %603
  %v605 = vrcp.pop %v595
  %v606 = vrcp.pop %v598
  %v607 = vrcp.pop %v601
  %v608 = vrcp.pop %v604
  %v609 = vmul.f32 %v586, %v605
  %v610 = vmul.f32 %v588, %v606
  %v611 = vmul.f32 %v590, %v607
  %v612 = vmul.f32 %v592, %v608
  %614 = vrot.lane.b32.xlu0 %v285, 64
  %v615 = vpop.permute.xlu0 %614
  %v617 = vmul.f32 %v363, %v615
  %v618 = vmul.f32 %v366, %v615
  %v619 = vmul.f32 %v371, %v615
  %v620 = vmul.f32 %v374, %v615
  %v621 = vpack.c.bf16 %v618, %v617
  %v622 = vpack.c.bf16 %v620, %v619
  %v623 = vpack.c.bf16 %v610, %v609
  %v624 = vpack.c.bf16 %v612, %v611
  %627 = vrot.lane.b32.xlu0 %v621, 64
  %v628 = vpop.permute.xlu0 %627
  %629 = vrot.lane.b32.xlu0 %v622, 64
  %v630 = vpop.permute.xlu0 %629
  %v634 = vsel %vm83, %v623, 0
  %v637 = vsel %vm83, %v624, 0
  %639 = vmatprep.subr.bf16.mxu0 0
  %640 = vmatpush1.bf16.msra.mxu0 0
  %641 = vmatprep.subr.bf16.mxu0 0
  %642 = vmatpush1.bf16.msra.mxu0 0
  %643 = vmatprep.subr.bf16.mxu0 0
  %644 = vmatpush1.bf16.msra.mxu0 0
  %645 = vmatprep.subr.bf16.mxu0 0
  %646 = vmatpush1.bf16.msra.mxu0 0
  %647 = vmatprep.subr.bf16.mxu0 0
  %648 = vmatpush1.bf16.msra.mxu0 0
  %649 = vmatprep.subr.bf16.mxu0 0
  %650 = vmatpush1.bf16.msra.mxu0 0
  %651 = vmatprep.subr.bf16.mxu0 0
  %652 = vmatpush1.bf16.msra.mxu0 %v630
  %653 = vmatprep.subr.bf16.mxu0 0
  %654 = vmatpush1.bf16.msra.mxu0 %v628
  %655 = vmatprep.subr.bf16.mxu0 0
  %656 = vmatpush2.bf16.msra.mxu0 0
  %657 = vmatprep.subr.bf16.mxu0 0
  %658 = vmatpush2.bf16.msra.mxu0 0
  %659 = vmatprep.subr.bf16.mxu0 0
  %660 = vmatpush2.bf16.msra.mxu0 0
  %661 = vmatprep.subr.bf16.mxu0 0
  %662 = vmatpush2.bf16.msra.mxu0 0
  %663 = vmatprep.subr.bf16.mxu0 0
  %664 = vmatpush2.bf16.msra.mxu0 0
  %665 = vmatprep.subr.bf16.mxu0 0
  %666 = vmatpush2.bf16.msra.mxu0 0
  %667 = vmatprep.subr.bf16.mxu0 0
  %668 = vmatpush2.bf16.msra.mxu0 0
  %669 = vmatprep.subr.bf16.mxu0 0
  %670 = vmatpush2.bf16.msra.mxu0 0
  %671 = vmatprep.mubr.bf16.mxu0 0
  %672 = vmatmul.mubr.bf16.gmra.mxu0 %v634
  %v673 = vpop.f32.mrf.mxu0
  %v674 = vadd.f32 0.0, %v673
  %v675 = vpop.f32.mrf.mxu0
  %v676 = vpop.f32.mrf.mxu0
  %v677 = vadd.f32 0.0, %v676
  %v678 = vpop.f32.mrf.mxu0
  %679 = vmatprep.mubr.bf16.mxu0 0
  %680 = vmatmul.mubr.bf16.gmra.mxu0 %v637
  %v681 = vpop.f32.mrf.mxu0
  %v682 = vadd.f32 0.0, %v681
  %v683 = vpop.f32.mrf.mxu0
  %v684 = vpop.f32.mrf.mxu0
  %v685 = vadd.f32 0.0, %v684
  %v686 = vpop.f32.mrf.mxu0
  %687 = vdwg.mxu0
  %690 = vrot.lane.b32.xlu0 %v504, 64
  %v691 = vpop.permute.xlu0 %690
  %692 = vrot.lane.b32.xlu0 %v505, 64
  %v693 = vpop.permute.xlu0 %692
  %v697 = vsel %vm83, %v506, 0
  %v700 = vsel %vm83, %v507, 0
  %702 = vmatprep.subr.bf16.mxu0 0
  %703 = vmatpush1.bf16.msra.mxu0 0
  %704 = vmatprep.subr.bf16.mxu0 0
  %705 = vmatpush1.bf16.msra.mxu0 0
  %706 = vmatprep.subr.bf16.mxu0 0
  %707 = vmatpush1.bf16.msra.mxu0 0
  %708 = vmatprep.subr.bf16.mxu0 0
  %709 = vmatpush1.bf16.msra.mxu0 0
  %710 = vmatprep.subr.bf16.mxu0 0
  %711 = vmatpush1.bf16.msra.mxu0 0
  %712 = vmatprep.subr.bf16.mxu0 0
  %713 = vmatpush1.bf16.msra.mxu0 0
  %714 = vmatprep.subr.bf16.mxu0 0
  %715 = vmatpush1.bf16.msra.mxu0 %v693
  %716 = vmatprep.subr.bf16.mxu0 0
  %717 = vmatpush1.bf16.msra.mxu0 %v691
  %718 = vmatprep.subr.bf16.mxu0 0
  %719 = vmatpush2.bf16.msra.mxu0 0
  %720 = vmatprep.subr.bf16.mxu0 0
  %721 = vmatpush2.bf16.msra.mxu0 0
  %722 = vmatprep.subr.bf16.mxu0 0
  %723 = vmatpush2.bf16.msra.mxu0 0
  %724 = vmatprep.subr.bf16.mxu0 0
  %725 = vmatpush2.bf16.msra.mxu0 0
  %726 = vmatprep.subr.bf16.mxu0 0
  %727 = vmatpush2.bf16.msra.mxu0 0
  %728 = vmatprep.subr.bf16.mxu0 0
  %729 = vmatpush2.bf16.msra.mxu0 0
  %730 = vmatprep.subr.bf16.mxu0 0
  %731 = vmatpush2.bf16.msra.mxu0 0
  %732 = vmatprep.subr.bf16.mxu0 0
  %733 = vmatpush2.bf16.msra.mxu0 0
  %734 = vmatprep.mubr.bf16.mxu0 0
  %735 = vmatmul.mubr.bf16.gmra.mxu0 %v697
  %v736 = vpop.f32.mrf.mxu0
  %v737 = vadd.f32 %v674, %v736
  %v738 = vpop.f32.mrf.mxu0
  %v739 = vpop.f32.mrf.mxu0
  %v740 = vadd.f32 %v677, %v739
  %v741 = vpop.f32.mrf.mxu0
  %742 = vmatprep.mubr.bf16.mxu0 0
  %743 = vmatmul.mubr.bf16.gmra.mxu0 %v700
  %v744 = vpop.f32.mrf.mxu0
  %v745 = vadd.f32 %v682, %v744
  %v746 = vpop.f32.mrf.mxu0
  %v747 = vpop.f32.mrf.mxu0
  %v748 = vadd.f32 %v685, %v747
  %v749 = vpop.f32.mrf.mxu0
  %750 = vdwg.mxu0
  %v751 = vmul.f32 %v363, %v288
  %v752 = vmul.f32 %v366, %v288
  %v753 = vmul.f32 %v371, %v288
  %v754 = vmul.f32 %v374, %v288
  %v755 = vpack.c.bf16 %v752, %v751
  %v756 = vpack.c.bf16 %v754, %v753
  %v758 = vsel %vm83, %v755, 0
  %v761 = vsel %vm83, %v756, 0
  %763 = vmatprep.subr.bf16.mxu0 0
  %764 = vmatpush1.bf16.xpose.msra.mxu0 0
  %765 = vmatprep.subr.bf16.mxu0 0
  %766 = vmatpush1.bf16.xpose.msra.mxu0 0
  %767 = vmatprep.subr.bf16.mxu0 0
  %768 = vmatpush1.bf16.xpose.msra.mxu0 0
  %769 = vmatprep.subr.bf16.mxu0 0
  %770 = vmatpush1.bf16.xpose.msra.mxu0 0
  %771 = vmatprep.subr.bf16.mxu0 0
  %772 = vmatpush1.bf16.xpose.msra.mxu0 0
  %773 = vmatprep.subr.bf16.mxu0 0
  %774 = vmatpush1.bf16.xpose.msra.mxu0 0
  %775 = vmatprep.subr.bf16.mxu0 0
  %776 = vmatpush1.bf16.xpose.msra.mxu0 %v401
  %777 = vmatprep.subr.bf16.mxu0 0
  %778 = vmatpush1.bf16.xpose.msra.mxu0 %v398
  %779 = vmatprep.subr.bf16.mxu0 0
  %780 = vmatpush2.bf16.xpose.msra.mxu0 0
  %781 = vmatprep.subr.bf16.mxu0 0
  %782 = vmatpush2.bf16.xpose.msra.mxu0 0
  %783 = vmatprep.subr.bf16.mxu0 0
  %784 = vmatpush2.bf16.xpose.msra.mxu0 0
  %785 = vmatprep.subr.bf16.mxu0 0
  %786 = vmatpush2.bf16.xpose.msra.mxu0 0
  %787 = vmatprep.subr.bf16.mxu0 0
  %788 = vmatpush2.bf16.xpose.msra.mxu0 0
  %789 = vmatprep.subr.bf16.mxu0 0
  %790 = vmatpush2.bf16.xpose.msra.mxu0 0
  %791 = vmatprep.subr.bf16.mxu0 0
  %792 = vmatpush2.bf16.xpose.msra.mxu0 0
  %793 = vmatprep.subr.bf16.mxu0 0
  %794 = vmatpush2.bf16.xpose.msra.mxu0 0
  %795 = vmatprep.mubr.bf16.mxu0 0
  %796 = vmatmul.mubr.bf16.gmra.mxu0 %v758
  %v797 = vpop.f32.mrf.mxu0
  %v798 = vadd.f32 %v276, %v797
  %v799 = vpop.f32.mrf.mxu0
  %v800 = vpop.f32.mrf.mxu0
  %v801 = vadd.f32 %v277, %v800
  %v802 = vpop.f32.mrf.mxu0
  %803 = vmatprep.mubr.bf16.mxu0 0
  %804 = vmatmul.mubr.bf16.gmra.mxu0 %v761
  %v805 = vpop.f32.mrf.mxu0
  %v806 = vadd.f32 %v278, %v805
  %v807 = vpop.f32.mrf.mxu0
  %v808 = vpop.f32.mrf.mxu0
  %v809 = vadd.f32 %v279, %v808
  %v810 = vpop.f32.mrf.mxu0
  %811 = vdwg.mxu0
  %v812 = vsel %vm83, %v798, -inf
  %813 = vmax.xlane.f32.xlu0 %v812
  %v814 = vpop.xlane.xlu0 %813
  %v815 = vsel %vm83, %v801, -inf
  %816 = vmax.xlane.f32.xlu0 %v815
  %v817 = vpop.xlane.xlu0 %816
  %v818 = vsel %vm83, %v806, -inf
  %819 = vmax.xlane.f32.xlu0 %v818
  %v820 = vpop.xlane.xlu0 %819
  %v821 = vsel %vm83, %v809, -inf
  %822 = vmax.xlane.f32.xlu0 %v821
  %v823 = vpop.xlane.xlu0 %822
  %v824 = vsub.f32 %v798, %v814
  %v825 = vsub.f32 %v801, %v817
  %v826 = vsub.f32 %v806, %v820
  %v827 = vsub.f32 %v809, %v823
  %v828 = vmul.f32 %v824, 1.442695
  %v829 = vpow.pop %v828
  %v830 = vmul.f32 %v825, 1.442695
  %v831 = vpow.pop %v830
  %v832 = vmul.f32 %v826, 1.442695
  %v833 = vpow.pop %v832
  %v834 = vmul.f32 %v827, 1.442695
  %v835 = vpow.pop %v834
  %v836 = vsel %vm83, %v829, 0.0
  %837 = vadd.xlane.f32.xlu0 %v836
  %v838 = vpop.xlane.xlu0 %837
  %v839 = vsel %vm83, %v831, 0.0
  %840 = vadd.xlane.f32.xlu0 %v839
  %v841 = vpop.xlane.xlu0 %840
  %v842 = vsel %vm83, %v833, 0.0
  %843 = vadd.xlane.f32.xlu0 %v842
  %v844 = vpop.xlane.xlu0 %843
  %v845 = vsel %vm83, %v835, 0.0
  %846 = vadd.xlane.f32.xlu0 %v845
  %v847 = vpop.xlane.xlu0 %846
  %v848 = vrcp.pop %v838
  %v849 = vrcp.pop %v841
  %v850 = vrcp.pop %v844
  %v851 = vrcp.pop %v847
  %v852 = vmul.f32 %v829, %v848
  %v853 = vmul.f32 %v831, %v849
  %v854 = vmul.f32 %v833, %v850
  %v855 = vmul.f32 %v835, %v851
  %857 = vrot.lane.b32.xlu0 %v288, 64
  %v858 = vpop.permute.xlu0 %857
  %v860 = vmul.f32 %v363, %v858
  %v861 = vmul.f32 %v366, %v858
  %v862 = vmul.f32 %v371, %v858
  %v863 = vmul.f32 %v374, %v858
  %v864 = vpack.c.bf16 %v861, %v860
  %v865 = vpack.c.bf16 %v863, %v862
  %v866 = vpack.c.bf16 %v853, %v852
  %v867 = vpack.c.bf16 %v855, %v854
  %870 = vrot.lane.b32.xlu0 %v864, 64
  %v871 = vpop.permute.xlu0 %870
  %872 = vrot.lane.b32.xlu0 %v865, 64
  %v873 = vpop.permute.xlu0 %872
  %v877 = vsel %vm83, %v866, 0
  %v880 = vsel %vm83, %v867, 0
  %882 = vmatprep.subr.bf16.mxu0 0
  %883 = vmatpush1.bf16.msra.mxu0 0
  %884 = vmatprep.subr.bf16.mxu0 0
  %885 = vmatpush1.bf16.msra.mxu0 0
  %886 = vmatprep.subr.bf16.mxu0 0
  %887 = vmatpush1.bf16.msra.mxu0 0
  %888 = vmatprep.subr.bf16.mxu0 0
  %889 = vmatpush1.bf16.msra.mxu0 0
  %890 = vmatprep.subr.bf16.mxu0 0
  %891 = vmatpush1.bf16.msra.mxu0 0
  %892 = vmatprep.subr.bf16.mxu0 0
  %893 = vmatpush1.bf16.msra.mxu0 0
  %894 = vmatprep.subr.bf16.mxu0 0
  %895 = vmatpush1.bf16.msra.mxu0 %v873
  %896 = vmatprep.subr.bf16.mxu0 0
  %897 = vmatpush1.bf16.msra.mxu0 %v871
  %898 = vmatprep.subr.bf16.mxu0 0
  %899 = vmatpush2.bf16.msra.mxu0 0
  %900 = vmatprep.subr.bf16.mxu0 0
  %901 = vmatpush2.bf16.msra.mxu0 0
  %902 = vmatprep.subr.bf16.mxu0 0
  %903 = vmatpush2.bf16.msra.mxu0 0
  %904 = vmatprep.subr.bf16.mxu0 0
  %905 = vmatpush2.bf16.msra.mxu0 0
  %906 = vmatprep.subr.bf16.mxu0 0
  %907 = vmatpush2.bf16.msra.mxu0 0
  %908 = vmatprep.subr.bf16.mxu0 0
  %909 = vmatpush2.bf16.msra.mxu0 0
  %910 = vmatprep.subr.bf16.mxu0 0
  %911 = vmatpush2.bf16.msra.mxu0 0
  %912 = vmatprep.subr.bf16.mxu0 0
  %913 = vmatpush2.bf16.msra.mxu0 0
  %914 = vmatprep.mubr.bf16.mxu0 0
  %915 = vmatmul.mubr.bf16.gmra.mxu0 %v877
  %v916 = vpop.f32.mrf.mxu0
  %v917 = vadd.f32 0.0, %v916
  %v918 = vpop.f32.mrf.mxu0
  %v919 = vpop.f32.mrf.mxu0
  %v920 = vadd.f32 0.0, %v919
  %v921 = vpop.f32.mrf.mxu0
  %922 = vmatprep.mubr.bf16.mxu0 0
  %923 = vmatmul.mubr.bf16.gmra.mxu0 %v880
  %v924 = vpop.f32.mrf.mxu0
  %v925 = vadd.f32 0.0, %v924
  %v926 = vpop.f32.mrf.mxu0
  %v927 = vpop.f32.mrf.mxu0
  %v928 = vadd.f32 0.0, %v927
  %v929 = vpop.f32.mrf.mxu0
  %930 = vdwg.mxu0
  %v931 = vadd.f32 %v737, %v917
  %v932 = vadd.f32 %v740, %v920
  %v933 = vadd.f32 %v745, %v925
  %v934 = vadd.f32 %v748, %v928
  %v935 = vmul.f32 %v363, %v291
  %v936 = vmul.f32 %v366, %v291
  %v937 = vmul.f32 %v371, %v291
  %v938 = vmul.f32 %v374, %v291
  %v939 = vpack.c.bf16 %v936, %v935
  %v940 = vpack.c.bf16 %v938, %v937
  %v942 = vsel %vm83, %v939, 0
  %v945 = vsel %vm83, %v940, 0
  %947 = vmatprep.subr.bf16.mxu0 0
  %948 = vmatpush1.bf16.xpose.msra.mxu0 0
  %949 = vmatprep.subr.bf16.mxu0 0
  %950 = vmatpush1.bf16.xpose.msra.mxu0 0
  %951 = vmatprep.subr.bf16.mxu0 0
  %952 = vmatpush1.bf16.xpose.msra.mxu0 0
  %953 = vmatprep.subr.bf16.mxu0 0
  %954 = vmatpush1.bf16.xpose.msra.mxu0 0
  %955 = vmatprep.subr.bf16.mxu0 0
  %956 = vmatpush1.bf16.xpose.msra.mxu0 0
  %957 = vmatprep.subr.bf16.mxu0 0
  %958 = vmatpush1.bf16.xpose.msra.mxu0 0
  %959 = vmatprep.subr.bf16.mxu0 0
  %960 = vmatpush1.bf16.xpose.msra.mxu0 %v401
  %961 = vmatprep.subr.bf16.mxu0 0
  %962 = vmatpush1.bf16.xpose.msra.mxu0 %v398
  %963 = vmatprep.subr.bf16.mxu0 0
  %964 = vmatpush2.bf16.xpose.msra.mxu0 0
  %965 = vmatprep.subr.bf16.mxu0 0
  %966 = vmatpush2.bf16.xpose.msra.mxu0 0
  %967 = vmatprep.subr.bf16.mxu0 0
  %968 = vmatpush2.bf16.xpose.msra.mxu0 0
  %969 = vmatprep.subr.bf16.mxu0 0
  %970 = vmatpush2.bf16.xpose.msra.mxu0 0
  %971 = vmatprep.subr.bf16.mxu0 0
  %972 = vmatpush2.bf16.xpose.msra.mxu0 0
  %973 = vmatprep.subr.bf16.mxu0 0
  %974 = vmatpush2.bf16.xpose.msra.mxu0 0
  %975 = vmatprep.subr.bf16.mxu0 0
  %976 = vmatpush2.bf16.xpose.msra.mxu0 0
  %977 = vmatprep.subr.bf16.mxu0 0
  %978 = vmatpush2.bf16.xpose.msra.mxu0 0
  %979 = vmatprep.mubr.bf16.mxu0 0
  %980 = vmatmul.mubr.bf16.gmra.mxu0 %v942
  %v981 = vpop.f32.mrf.mxu0
  %v982 = vadd.f32 %v276, %v981
  %v983 = vpop.f32.mrf.mxu0
  %v984 = vpop.f32.mrf.mxu0
  %v985 = vadd.f32 %v277, %v984
  %v986 = vpop.f32.mrf.mxu0
  %987 = vmatprep.mubr.bf16.mxu0 0
  %988 = vmatmul.mubr.bf16.gmra.mxu0 %v945
  %v989 = vpop.f32.mrf.mxu0
  %v990 = vadd.f32 %v278, %v989
  %v991 = vpop.f32.mrf.mxu0
  %v992 = vpop.f32.mrf.mxu0
  %v993 = vadd.f32 %v279, %v992
  %v994 = vpop.f32.mrf.mxu0
  %995 = vdwg.mxu0
  %v996 = vsel %vm83, %v982, -inf
  %997 = vmax.xlane.f32.xlu0 %v996
  %v998 = vpop.xlane.xlu0 %997
  %v999 = vsel %vm83, %v985, -inf
  %1000 = vmax.xlane.f32.xlu0 %v999
  %v1001 = vpop.xlane.xlu0 %1000
  %v1002 = vsel %vm83, %v990, -inf
  %1003 = vmax.xlane.f32.xlu0 %v1002
  %v1004 = vpop.xlane.xlu0 %1003
  %v1005 = vsel %vm83, %v993, -inf
  %1006 = vmax.xlane.f32.xlu0 %v1005
  %v1007 = vpop.xlane.xlu0 %1006
  %v1008 = vsub.f32 %v982, %v998
  %v1009 = vsub.f32 %v985, %v1001
  %v1010 = vsub.f32 %v990, %v1004
  %v1011 = vsub.f32 %v993, %v1007
  %v1012 = vmul.f32 %v1008, 1.442695
  %v1013 = vpow.pop %v1012
  %v1014 = vmul.f32 %v1009, 1.442695
  %v1015 = vpow.pop %v1014
  %v1016 = vmul.f32 %v1010, 1.442695
  %v1017 = vpow.pop %v1016
  %v1018 = vmul.f32 %v1011, 1.442695
  %v1019 = vpow.pop %v1018
  %v1020 = vsel %vm83, %v1013, 0.0
  %1021 = vadd.xlane.f32.xlu0 %v1020
  %v1022 = vpop.xlane.xlu0 %1021
  %v1023 = vsel %vm83, %v1015, 0.0
  %1024 = vadd.xlane.f32.xlu0 %v1023
  %v1025 = vpop.xlane.xlu0 %1024
  %v1026 = vsel %vm83, %v1017, 0.0
  %1027 = vadd.xlane.f32.xlu0 %v1026
  %v1028 = vpop.xlane.xlu0 %1027
  %v1029 = vsel %vm83, %v1019, 0.0
  %1030 = vadd.xlane.f32.xlu0 %v1029
  %v1031 = vpop.xlane.xlu0 %1030
  %v1032 = vrcp.pop %v1022
  %v1033 = vrcp.pop %v1025
  %v1034 = vrcp.pop %v1028
  %v1035 = vrcp.pop %v1031
  %v1036 = vmul.f32 %v1013, %v1032
  %v1037 = vmul.f32 %v1015, %v1033
  %v1038 = vmul.f32 %v1017, %v1034
  %v1039 = vmul.f32 %v1019, %v1035
  %1041 = vrot.lane.b32.xlu0 %v291, 64
  %v1042 = vpop.permute.xlu0 %1041
  %v1044 = vmul.f32 %v363, %v1042
  %v1045 = vmul.f32 %v366, %v1042
  %v1046 = vmul.f32 %v371, %v1042
  %v1047 = vmul.f32 %v374, %v1042
  %v1048 = vpack.c.bf16 %v1045, %v1044
  %v1049 = vpack.c.bf16 %v1047, %v1046
  %v1050 = vpack.c.bf16 %v1037, %v1036
  %v1051 = vpack.c.bf16 %v1039, %v1038
  %1054 = vrot.lane.b32.xlu0 %v1048, 64
  %v1055 = vpop.permute.xlu0 %1054
  %1056 = vrot.lane.b32.xlu0 %v1049, 64
  %v1057 = vpop.permute.xlu0 %1056
  %v1061 = vsel %vm83, %v1050, 0
  %v1064 = vsel %vm83, %v1051, 0
  %1066 = vmatprep.subr.bf16.mxu0 0
  %1067 = vmatpush1.bf16.msra.mxu0 0
  %1068 = vmatprep.subr.bf16.mxu0 0
  %1069 = vmatpush1.bf16.msra.mxu0 0
  %1070 = vmatprep.subr.bf16.mxu0 0
  %1071 = vmatpush1.bf16.msra.mxu0 0
  %1072 = vmatprep.subr.bf16.mxu0 0
  %1073 = vmatpush1.bf16.msra.mxu0 0
  %1074 = vmatprep.subr.bf16.mxu0 0
  %1075 = vmatpush1.bf16.msra.mxu0 0
  %1076 = vmatprep.subr.bf16.mxu0 0
  %1077 = vmatpush1.bf16.msra.mxu0 0
  %1078 = vmatprep.subr.bf16.mxu0 0
  %1079 = vmatpush1.bf16.msra.mxu0 %v1057
  %1080 = vmatprep.subr.bf16.mxu0 0
  %1081 = vmatpush1.bf16.msra.mxu0 %v1055
  %1082 = vmatprep.subr.bf16.mxu0 0
  %1083 = vmatpush2.bf16.msra.mxu0 0
  %1084 = vmatprep.subr.bf16.mxu0 0
  %1085 = vmatpush2.bf16.msra.mxu0 0
  %1086 = vmatprep.subr.bf16.mxu0 0
  %1087 = vmatpush2.bf16.msra.mxu0 0
  %1088 = vmatprep.subr.bf16.mxu0 0
  %1089 = vmatpush2.bf16.msra.mxu0 0
  %1090 = vmatprep.subr.bf16.mxu0 0
  %1091 = vmatpush2.bf16.msra.mxu0 0
  %1092 = vmatprep.subr.bf16.mxu0 0
  %1093 = vmatpush2.bf16.msra.mxu0 0
  %1094 = vmatprep.subr.bf16.mxu0 0
  %1095 = vmatpush2.bf16.msra.mxu0 0
  %1096 = vmatprep.subr.bf16.mxu0 0
  %1097 = vmatpush2.bf16.msra.mxu0 0
  %1098 = vmatprep.mubr.bf16.mxu0 0
  %1099 = vmatmul.mubr.bf16.gmra.mxu0 %v1061
  %v1100 = vpop.f32.mrf.mxu0
  %v1101 = vadd.f32 0.0, %v1100
  %v1102 = vpop.f32.mrf.mxu0
  %v1103 = vpop.f32.mrf.mxu0
  %v1104 = vadd.f32 0.0, %v1103
  %v1105 = vpop.f32.mrf.mxu0
  %1106 = vmatprep.mubr.bf16.mxu0 0
  %1107 = vmatmul.mubr.bf16.gmra.mxu0 %v1064
  %v1108 = vpop.f32.mrf.mxu0
  %v1109 = vadd.f32 0.0, %v1108
  %v1110 = vpop.f32.mrf.mxu0
  %v1111 = vpop.f32.mrf.mxu0
  %v1112 = vadd.f32 0.0, %v1111
  %v1113 = vpop.f32.mrf.mxu0
  %1114 = vdwg.mxu0
  %v1115 = vadd.f32 %v931, %v1101
  %v1116 = vadd.f32 %v932, %v1104
  %v1117 = vadd.f32 %v933, %v1109
  %v1118 = vadd.f32 %v934, %v1112
  %v1119 = vld [vmem:[%s8] sm:$0xf]
  %v1120 = vld [vmem:[%s8 + $0x4] sm:$0xf]
  %v1121 = vld [vmem:[%s8 + $0x8] sm:$0xf]
  %v1122 = vld [vmem:[%s8 + $0xc] sm:$0xf]
  %v1123 = vpack.c.bf16 %v1116, %v1115
  %v1124 = vpack.c.bf16 %v1118, %v1117
  %v1125 = vld [vmem:[%s9] sm:$0x1]
  %v1127 = vlaneseq
  %v1128 = vshrl.u32 %v1127, 7
  %v1129 = vsub.s32 0, %v1128
  %v1130 = vrot.slane %v1125, %v1129
  %v1136 = vunpack.c.l.b16 %v1119
  %v1137 = vunpack.c.l.b16 %v1120
  %v1138 = vunpack.c.l.b16 %v1121
  %v1139 = vunpack.c.l.b16 %v1122
  %v1140 = vpack.c.b16 %v1137, %v1136
  %v1141 = vpack.c.b16 %v1139, %v1138
  %v1145 = vsel %vm83, %v1123, 0
  %v1148 = vsel %vm83, %v1124, 0
  %1150 = vmatprep.subr.bf16.mxu0 0
  %1151 = vmatpush1.bf16.msra.mxu0 0
  %1152 = vmatprep.subr.bf16.mxu0 0
  %1153 = vmatpush1.bf16.msra.mxu0 0
  %1154 = vmatprep.subr.bf16.mxu0 0
  %1155 = vmatpush1.bf16.msra.mxu0 0
  %1156 = vmatprep.subr.bf16.mxu0 0
  %1157 = vmatpush1.bf16.msra.mxu0 0
  %1158 = vmatprep.subr.bf16.mxu0 0
  %1159 = vmatpush1.bf16.msra.mxu0 0
  %1160 = vmatprep.subr.bf16.mxu0 0
  %1161 = vmatpush1.bf16.msra.mxu0 0
  %1162 = vmatprep.subr.bf16.mxu0 0
  %1163 = vmatpush1.bf16.msra.mxu0 %v1141
  %1164 = vmatprep.subr.bf16.mxu0 0
  %1165 = vmatpush1.bf16.msra.mxu0 %v1140
  %1166 = vmatprep.subr.bf16.mxu0 0
  %1167 = vmatpush2.bf16.msra.mxu0 0
  %1168 = vmatprep.subr.bf16.mxu0 0
  %1169 = vmatpush2.bf16.msra.mxu0 0
  %1170 = vmatprep.subr.bf16.mxu0 0
  %1171 = vmatpush2.bf16.msra.mxu0 0
  %1172 = vmatprep.subr.bf16.mxu0 0
  %1173 = vmatpush2.bf16.msra.mxu0 0
  %1174 = vmatprep.subr.bf16.mxu0 0
  %1175 = vmatpush2.bf16.msra.mxu0 0
  %1176 = vmatprep.subr.bf16.mxu0 0
  %1177 = vmatpush2.bf16.msra.mxu0 0
  %1178 = vmatprep.subr.bf16.mxu0 0
  %1179 = vmatpush2.bf16.msra.mxu0 0
  %1180 = vmatprep.subr.bf16.mxu0 0
  %1181 = vmatpush2.bf16.msra.mxu0 0
  %1182 = vmatprep.mubr.bf16.mxu0 0
  %1183 = vmatmul.mubr.bf16.gmra.mxu0 %v1145
  %v1184 = vpop.f32.mrf.mxu0
  %v1185 = vadd.f32 %v1130, %v1184
  %v1186 = vpop.f32.mrf.mxu0
  %v1187 = vpop.f32.mrf.mxu0
  %v1188 = vadd.f32 %v1130, %v1187
  %v1189 = vpop.f32.mrf.mxu0
  %1190 = vmatprep.mubr.bf16.mxu0 0
  %1191 = vmatmul.mubr.bf16.gmra.mxu0 %v1148
  %v1192 = vpop.f32.mrf.mxu0
  %v1193 = vadd.f32 %v1130, %v1192
  %v1194 = vpop.f32.mrf.mxu0
  %v1195 = vpop.f32.mrf.mxu0
  %v1196 = vadd.f32 %v1130, %v1195
  %v1197 = vpop.f32.mrf.mxu0
  %1198 = vdwg.mxu0
  %v1199 = vadd.f32 %v1185, %v153
  %v1200 = vadd.f32 %v1188, %v154
  %v1201 = vadd.f32 %v1193, %v155
  %v1202 = vadd.f32 %v1196, %v156
  %v1203 = vld [vmem:[%s10] sm:$0x1]
  %v1204 = vld [vmem:[%s11] sm:$0x1]
  %v1205 = vsel %vm83, %v1199, 0.0
  %1206 = vadd.xlane.f32.xlu0 %v1205
  %v1207 = vpop.xlane.xlu0 %1206
  %v1208 = vsel %vm83, %v1200, 0.0
  %1209 = vadd.xlane.f32.xlu0 %v1208
  %v1210 = vpop.xlane.xlu0 %1209
  %v1211 = vsel %vm83, %v1201, 0.0
  %1212 = vadd.xlane.f32.xlu0 %v1211
  %v1213 = vpop.xlane.xlu0 %1212
  %v1214 = vsel %vm83, %v1202, 0.0
  %1215 = vadd.xlane.f32.xlu0 %v1214
  %v1216 = vpop.xlane.xlu0 %1215
  %v1217 = vmul.f32 %v1207, %v96
  %v1218 = vmul.f32 %v1210, %v96
  %v1219 = vmul.f32 %v1213, %v96
  %v1220 = vmul.f32 %v1216, %v96
  %v1221 = vsub.f32 %v1199, %v1217
  %v1222 = vsub.f32 %v1200, %v1218
  %v1223 = vsub.f32 %v1201, %v1219
  %v1224 = vsub.f32 %v1202, %v1220
  %v1225 = vmul.f32 %v1221, %v1221
  %v1226 = vmul.f32 %v1222, %v1222
  %v1227 = vmul.f32 %v1223, %v1223
  %v1228 = vmul.f32 %v1224, %v1224
  %v1229 = vsel %vm83, %v1225, 0.0
  %1230 = vadd.xlane.f32.xlu0 %v1229
  %v1231 = vpop.xlane.xlu0 %1230
  %v1232 = vsel %vm83, %v1226, 0.0
  %1233 = vadd.xlane.f32.xlu0 %v1232
  %v1234 = vpop.xlane.xlu0 %1233
  %v1235 = vsel %vm83, %v1227, 0.0
  %1236 = vadd.xlane.f32.xlu0 %v1235
  %v1237 = vpop.xlane.xlu0 %1236
  %v1238 = vsel %vm83, %v1228, 0.0
  %1239 = vadd.xlane.f32.xlu0 %v1238
  %v1240 = vpop.xlane.xlu0 %1239
  %v1241 = vmul.f32 %v1231, %v96
  %v1242 = vmul.f32 %v1234, %v96
  %v1243 = vmul.f32 %v1237, %v96
  %v1244 = vmul.f32 %v1240, %v96
  %v1245 = vadd.f32 %v1241, 1e-12
  %v1246 = vadd.f32 %v1242, 1e-12
  %v1247 = vadd.f32 %v1243, 1e-12
  %v1248 = vadd.f32 %v1244, 1e-12
  %v1249 = vrsqrt.pop %v1245
  %v1250 = vrsqrt.pop %v1246
  %v1251 = vrsqrt.pop %v1247
  %v1252 = vrsqrt.pop %v1248
  %v1253 = vmul.f32 %v1221, %v1249
  %v1254 = vmul.f32 %v1222, %v1250
  %v1255 = vmul.f32 %v1223, %v1251
  %v1256 = vmul.f32 %v1224, %v1252
  %v1258 = vlaneseq
  %v1259 = vshrl.u32 %v1258, 7
  %v1260 = vsub.s32 0, %v1259
  %v1261 = vrot.slane %v1203, %v1260
  %v1263 = vmul.f32 %v1253, %v1261
  %v1264 = vmul.f32 %v1254, %v1261
  %v1265 = vmul.f32 %v1255, %v1261
  %v1266 = vmul.f32 %v1256, %v1261
  %v1268 = vlaneseq
  %v1269 = vshrl.u32 %v1268, 7
  %v1270 = vsub.s32 0, %v1269
  %v1271 = vrot.slane %v1204, %v1270
  %v1273 = vadd.f32 %v1263, %v1271
  %v1274 = vadd.f32 %v1264, %v1271
  %v1275 = vadd.f32 %v1265, %v1271
  %v1276 = vadd.f32 %v1266, %v1271
  %v1277 = vld [vmem:[%s12] sm:$0xf]
  %v1278 = vld [vmem:[%s12 + $0x4] sm:$0xf]
  %v1279 = vld [vmem:[%s12 + $0x8] sm:$0xf]
  %v1280 = vld [vmem:[%s12 + $0xc] sm:$0xf]
  %v1281 = vpack.c.bf16 %v1274, %v1273
  %v1282 = vpack.c.bf16 %v1276, %v1275
  %v1283 = vld [vmem:[%s13] sm:$0x1]
  %v1285 = vlaneseq
  %v1286 = vshrl.u32 %v1285, 7
  %v1287 = vsub.s32 0, %v1286
  %v1288 = vrot.slane %v1283, %v1287
  %v1294 = vunpack.c.l.b16 %v1277
  %v1295 = vunpack.c.l.b16 %v1278
  %v1296 = vunpack.c.l.b16 %v1279
  %v1297 = vunpack.c.l.b16 %v1280
  %v1298 = vpack.c.b16 %v1295, %v1294
  %v1299 = vpack.c.b16 %v1297, %v1296
  %v1303 = vsel %vm83, %v1281, 0
  %v1306 = vsel %vm83, %v1282, 0
  %1308 = vmatprep.subr.bf16.mxu0 0
  %1309 = vmatpush1.bf16.msra.mxu0 0
  %1310 = vmatprep.subr.bf16.mxu0 0
  %1311 = vmatpush1.bf16.msra.mxu0 0
  %1312 = vmatprep.subr.bf16.mxu0 0
  %1313 = vmatpush1.bf16.msra.mxu0 0
  %1314 = vmatprep.subr.bf16.mxu0 0
  %1315 = vmatpush1.bf16.msra.mxu0 0
  %1316 = vmatprep.subr.bf16.mxu0 0
  %1317 = vmatpush1.bf16.msra.mxu0 0
  %1318 = vmatprep.subr.bf16.mxu0 0
  %1319 = vmatpush1.bf16.msra.mxu0 0
  %1320 = vmatprep.subr.bf16.mxu0 0
  %1321 = vmatpush1.bf16.msra.mxu0 %v1299
  %1322 = vmatprep.subr.bf16.mxu0 0
  %1323 = vmatpush1.bf16.msra.mxu0 %v1298
  %1324 = vmatprep.subr.bf16.mxu0 0
  %1325 = vmatpush2.bf16.msra.mxu0 0
  %1326 = vmatprep.subr.bf16.mxu0 0
  %1327 = vmatpush2.bf16.msra.mxu0 0
  %1328 = vmatprep.subr.bf16.mxu0 0
  %1329 = vmatpush2.bf16.msra.mxu0 0
  %1330 = vmatprep.subr.bf16.mxu0 0
  %1331 = vmatpush2.bf16.msra.mxu0 0
  %1332 = vmatprep.subr.bf16.mxu0 0
  %1333 = vmatpush2.bf16.msra.mxu0 0
  %1334 = vmatprep.subr.bf16.mxu0 0
  %1335 = vmatpush2.bf16.msra.mxu0 0
  %1336 = vmatprep.subr.bf16.mxu0 0
  %1337 = vmatpush2.bf16.msra.mxu0 0
  %1338 = vmatprep.subr.bf16.mxu0 0
  %1339 = vmatpush2.bf16.msra.mxu0 0
  %1340 = vmatprep.mubr.bf16.mxu0 0
  %1341 = vmatmul.mubr.bf16.gmra.mxu0 %v1303
  %v1342 = vpop.f32.mrf.mxu0
  %v1343 = vadd.f32 %v1288, %v1342
  %v1344 = vpop.f32.mrf.mxu0
  %v1345 = vpop.f32.mrf.mxu0
  %v1346 = vadd.f32 %v1288, %v1345
  %v1347 = vpop.f32.mrf.mxu0
  %1348 = vmatprep.mubr.bf16.mxu0 0
  %1349 = vmatmul.mubr.bf16.gmra.mxu0 %v1306
  %v1350 = vpop.f32.mrf.mxu0
  %v1351 = vadd.f32 %v1288, %v1350
  %v1352 = vpop.f32.mrf.mxu0
  %v1353 = vpop.f32.mrf.mxu0
  %v1354 = vadd.f32 %v1288, %v1353
  %v1355 = vpop.f32.mrf.mxu0
  %1356 = vdwg.mxu0
  %v1357 = vmul.f32 %v1343, 0.5
  %v1358 = vmul.f32 %v1346, 0.5
  %v1359 = vmul.f32 %v1351, 0.5
  %v1360 = vmul.f32 %v1354, 0.5
  %v1361 = vmul.f32 %v1343, 0.70710677
  %v1362 = vmul.f32 %v1346, 0.70710677
  %v1363 = vmul.f32 %v1351, 0.70710677
  %v1364 = vmul.f32 %v1354, 0.70710677
  %v1365 = verf.f32.pop %v1361
  %v1366 = verf.f32.pop %v1362
  %v1367 = verf.f32.pop %v1363
  %v1368 = verf.f32.pop %v1364
  %v1369 = vadd.f32 %v1365, 1.0
  %v1370 = vadd.f32 %v1366, 1.0
  %v1371 = vadd.f32 %v1367, 1.0
  %v1372 = vadd.f32 %v1368, 1.0
  %v1373 = vmul.f32 %v1357, %v1369
  %v1374 = vmul.f32 %v1358, %v1370
  %v1375 = vmul.f32 %v1359, %v1371
  %v1376 = vmul.f32 %v1360, %v1372
  %v1377 = vld [vmem:[%s14] sm:$0xf]
  %v1378 = vld [vmem:[%s14 + $0x4] sm:$0xf]
  %v1379 = vld [vmem:[%s14 + $0x8] sm:$0xf]
  %v1380 = vld [vmem:[%s14 + $0xc] sm:$0xf]
  %v1381 = vld [vmem:[%s14 + $0x10] sm:$0xf]
  %v1382 = vld [vmem:[%s14 + $0x14] sm:$0xf]
  %v1383 = vld [vmem:[%s14 + $0x18] sm:$0xf]
  %v1384 = vld [vmem:[%s14 + $0x1c] sm:$0xf]
  %v1385 = vpack.c.bf16 %v1374, %v1373
  %v1386 = vpack.c.bf16 %v1376, %v1375
  %v1387 = vld [vmem:[%s15] sm:$0x1]
  %v1389 = vlaneseq
  %v1390 = vshrl.u32 %v1389, 7
  %v1391 = vsub.s32 0, %v1390
  %v1392 = vrot.slane %v1387, %v1391
  %v1402 = vunpack.c.l.b16 %v1377
  %v1403 = vunpack.c.l.b16 %v1378
  %v1404 = vunpack.c.l.b16 %v1379
  %v1405 = vunpack.c.l.b16 %v1380
  %v1406 = vunpack.c.l.b16 %v1381
  %v1407 = vunpack.c.l.b16 %v1382
  %v1408 = vunpack.c.l.b16 %v1383
  %v1409 = vunpack.c.l.b16 %v1384
  %v1410 = vpack.c.b16 %v1403, %v1402
  %v1411 = vpack.c.b16 %v1405, %v1404
  %v1412 = vpack.c.b16 %v1407, %v1406
  %v1413 = vpack.c.b16 %v1409, %v1408
  %vm1418 = vcmask 523264
  %v1420 = vsel %vm1418, %v1385, 0
  %v1423 = vsel %vm1418, %v1386, 0
  %1425 = vmatprep.subr.bf16.mxu0 0
  %1426 = vmatpush1.bf16.msra.mxu0 0
  %1427 = vmatprep.subr.bf16.mxu0 0
  %1428 = vmatpush1.bf16.msra.mxu0 0
  %1429 = vmatprep.subr.bf16.mxu0 0
  %1430 = vmatpush1.bf16.msra.mxu0 0
  %1431 = vmatprep.subr.bf16.mxu0 0
  %1432 = vmatpush1.bf16.msra.mxu0 0
  %1433 = vmatprep.subr.bf16.mxu0 0
  %1434 = vmatpush1.bf16.msra.mxu0 %v1413
  %1435 = vmatprep.subr.bf16.mxu0 0
  %1436 = vmatpush1.bf16.msra.mxu0 %v1412
  %1437 = vmatprep.subr.bf16.mxu0 0
  %1438 = vmatpush1.bf16.msra.mxu0 %v1411
  %1439 = vmatprep.subr.bf16.mxu0 0
  %1440 = vmatpush1.bf16.msra.mxu0 %v1410
  %1441 = vmatprep.subr.bf16.mxu0 0
  %1442 = vmatpush2.bf16.msra.mxu0 0
  %1443 = vmatprep.subr.bf16.mxu0 0
  %1444 = vmatpush2.bf16.msra.mxu0 0
  %1445 = vmatprep.subr.bf16.mxu0 0
  %1446 = vmatpush2.bf16.msra.mxu0 0
  %1447 = vmatprep.subr.bf16.mxu0 0
  %1448 = vmatpush2.bf16.msra.mxu0 0
  %1449 = vmatprep.subr.bf16.mxu0 0
  %1450 = vmatpush2.bf16.msra.mxu0 0
  %1451 = vmatprep.subr.bf16.mxu0 0
  %1452 = vmatpush2.bf16.msra.mxu0 0
  %1453 = vmatprep.subr.bf16.mxu0 0
  %1454 = vmatpush2.bf16.msra.mxu0 0
  %1455 = vmatprep.subr.bf16.mxu0 0
  %1456 = vmatpush2.bf16.msra.mxu0 0
  %1457 = vmatprep.mubr.bf16.mxu0 0
  %1458 = vmatmul.mubr.bf16.gmra.mxu0 %v1420
  %v1459 = vpop.f32.mrf.mxu0
  %v1460 = vadd.f32 %v1392, %v1459
  %v1461 = vpop.f32.mrf.mxu0
  %v1462 = vpop.f32.mrf.mxu0
  %v1463 = vadd.f32 %v1392, %v1462
  %v1464 = vpop.f32.mrf.mxu0
  %1465 = vmatprep.mubr.bf16.mxu0 0
  %1466 = vmatmul.mubr.bf16.gmra.mxu0 %v1423
  %v1467 = vpop.f32.mrf.mxu0
  %v1468 = vadd.f32 %v1392, %v1467
  %v1469 = vpop.f32.mrf.mxu0
  %v1470 = vpop.f32.mrf.mxu0
  %v1471 = vadd.f32 %v1392, %v1470
  %v1472 = vpop.f32.mrf.mxu0
  %1473 = vdwg.mxu0
  %v1474 = vadd.f32 %v1460, %v1273
  %v1475 = vadd.f32 %v1463, %v1274
  %v1476 = vadd.f32 %v1468, %v1275
  %v1477 = vadd.f32 %v1471, %v1276
  %v1478 = vld [vmem:[%s16] sm:$0x1]
  %v1479 = vld [vmem:[%s17] sm:$0x1]
  %v1480 = vsel %vm83, %v1474, 0.0
  %1481 = vadd.xlane.f32.xlu0 %v1480
  %v1482 = vpop.xlane.xlu0 %1481
  %v1483 = vsel %vm83, %v1475, 0.0
  %1484 = vadd.xlane.f32.xlu0 %v1483
  %v1485 = vpop.xlane.xlu0 %1484
  %v1486 = vsel %vm83, %v1476, 0.0
  %1487 = vadd.xlane.f32.xlu0 %v1486
  %v1488 = vpop.xlane.xlu0 %1487
  %v1489 = vsel %vm83, %v1477, 0.0
  %1490 = vadd.xlane.f32.xlu0 %v1489
  %v1491 = vpop.xlane.xlu0 %1490
  %v1492 = vmul.f32 %v1482, %v96
  %v1493 = vmul.f32 %v1485, %v96
  %v1494 = vmul.f32 %v1488, %v96
  %v1495 = vmul.f32 %v1491, %v96
  %v1496 = vsub.f32 %v1474, %v1492
  %v1497 = vsub.f32 %v1475, %v1493
  %v1498 = vsub.f32 %v1476, %v1494
  %v1499 = vsub.f32 %v1477, %v1495
  %v1500 = vmul.f32 %v1496, %v1496
  %v1501 = vmul.f32 %v1497, %v1497
  %v1502 = vmul.f32 %v1498, %v1498
  %v1503 = vmul.f32 %v1499, %v1499
  %v1504 = vsel %vm83, %v1500, 0.0
  %1505 = vadd.xlane.f32.xlu0 %v1504
  %v1506 = vpop.xlane.xlu0 %1505
  %v1507 = vsel %vm83, %v1501, 0.0
  %1508 = vadd.xlane.f32.xlu0 %v1507
  %v1509 = vpop.xlane.xlu0 %1508
  %v1510 = vsel %vm83, %v1502, 0.0
  %1511 = vadd.xlane.f32.xlu0 %v1510
  %v1512 = vpop.xlane.xlu0 %1511
  %v1513 = vsel %vm83, %v1503, 0.0
  %1514 = vadd.xlane.f32.xlu0 %v1513
  %v1515 = vpop.xlane.xlu0 %1514
  %v1516 = vmul.f32 %v1506, %v96
  %v1517 = vmul.f32 %v1509, %v96
  %v1518 = vmul.f32 %v1512, %v96
  %v1519 = vmul.f32 %v1515, %v96
  %v1520 = vadd.f32 %v1516, 1e-12
  %v1521 = vadd.f32 %v1517, 1e-12
  %v1522 = vadd.f32 %v1518, 1e-12
  %v1523 = vadd.f32 %v1519, 1e-12
  %v1524 = vrsqrt.pop %v1520
  %v1525 = vrsqrt.pop %v1521
  %v1526 = vrsqrt.pop %v1522
  %v1527 = vrsqrt.pop %v1523
  %v1528 = vmul.f32 %v1496, %v1524
  %v1529 = vmul.f32 %v1497, %v1525
  %v1530 = vmul.f32 %v1498, %v1526
  %v1531 = vmul.f32 %v1499, %v1527
  %v1533 = vlaneseq
  %v1534 = vshrl.u32 %v1533, 7
  %v1535 = vsub.s32 0, %v1534
  %v1536 = vrot.slane %v1478, %v1535
  %v1538 = vmul.f32 %v1528, %v1536
  %v1539 = vmul.f32 %v1529, %v1536
  %v1540 = vmul.f32 %v1530, %v1536
  %v1541 = vmul.f32 %v1531, %v1536
  %v1543 = vlaneseq
  %v1544 = vshrl.u32 %v1543, 7
  %v1545 = vsub.s32 0, %v1544
  %v1546 = vrot.slane %v1479, %v1545
  %v1548 = vadd.f32 %v1538, %v1546
  %v1549 = vadd.f32 %v1539, %v1546
  %v1550 = vadd.f32 %v1540, %v1546
  %v1551 = vadd.f32 %v1541, %v1546
  %s1552 = scalar_lea.vmem %s6, 16
  %v1553 = vld [vmem:[%s1552] sm:$0xf]
  %v1554 = vld [vmem:[%s1552 + $0x4] sm:$0xf]
  %v1555 = vld [vmem:[%s1552 + $0x8] sm:$0xf]
  %v1556 = vld [vmem:[%s1552 + $0xc] sm:$0xf]
  %v1557 = vpack.c.bf16 %v1549, %v1548
  %v1558 = vpack.c.bf16 %v1551, %v1550
  %s1559 = scalar_lea.vmem %s7, 1
  %v1560 = vld [vmem:[%s1559] sm:$0x1]
  %v1562 = vlaneseq
  %v1563 = vshrl.u32 %v1562, 7
  %v1564 = vsub.s32 0, %v1563
  %v1565 = vrot.slane %v1560, %v1564
  %v1571 = vunpack.c.l.b16 %v1553
  %v1572 = vunpack.c.l.b16 %v1554
  %v1573 = vunpack.c.l.b16 %v1555
  %v1574 = vunpack.c.l.b16 %v1556
  %v1575 = vpack.c.b16 %v1572, %v1571
  %v1576 = vpack.c.b16 %v1574, %v1573
  %v1580 = vsel %vm83, %v1557, 0
  %v1583 = vsel %vm83, %v1558, 0
  %1585 = vmatprep.subr.bf16.mxu0 0
  %1586 = vmatpush1.bf16.msra.mxu0 0
  %1587 = vmatprep.subr.bf16.mxu0 0
  %1588 = vmatpush1.bf16.msra.mxu0 0
  %1589 = vmatprep.subr.bf16.mxu0 0
  %1590 = vmatpush1.bf16.msra.mxu0 0
  %1591 = vmatprep.subr.bf16.mxu0 0
  %1592 = vmatpush1.bf16.msra.mxu0 0
  %1593 = vmatprep.subr.bf16.mxu0 0
  %1594 = vmatpush1.bf16.msra.mxu0 0
  %1595 = vmatprep.subr.bf16.mxu0 0
  %1596 = vmatpush1.bf16.msra.mxu0 0
  %1597 = vmatprep.subr.bf16.mxu0 0
  %1598 = vmatpush1.bf16.msra.mxu0 %v1576
  %1599 = vmatprep.subr.bf16.mxu0 0
  %1600 = vmatpush1.bf16.msra.mxu0 %v1575
  %1601 = vmatprep.subr.bf16.mxu0 0
  %1602 = vmatpush2.bf16.msra.mxu0 0
  %1603 = vmatprep.subr.bf16.mxu0 0
  %1604 = vmatpush2.bf16.msra.mxu0 0
  %1605 = vmatprep.subr.bf16.mxu0 0
  %1606 = vmatpush2.bf16.msra.mxu0 0
  %1607 = vmatprep.subr.bf16.mxu0 0
  %1608 = vmatpush2.bf16.msra.mxu0 0
  %1609 = vmatprep.subr.bf16.mxu0 0
  %1610 = vmatpush2.bf16.msra.mxu0 0
  %1611 = vmatprep.subr.bf16.mxu0 0
  %1612 = vmatpush2.bf16.msra.mxu0 0
  %1613 = vmatprep.subr.bf16.mxu0 0
  %1614 = vmatpush2.bf16.msra.mxu0 0
  %1615 = vmatprep.subr.bf16.mxu0 0
  %1616 = vmatpush2.bf16.msra.mxu0 0
  %1617 = vmatprep.mubr.bf16.mxu0 0
  %1618 = vmatmul.mubr.bf16.gmra.mxu0 %v1580
  %v1619 = vpop.f32.mrf.mxu0
  %v1620 = vadd.f32 %v1565, %v1619
  %v1621 = vpop.f32.mrf.mxu0
  %v1622 = vpop.f32.mrf.mxu0
  %v1623 = vadd.f32 %v1565, %v1622
  %v1624 = vpop.f32.mrf.mxu0
  %1625 = vmatprep.mubr.bf16.mxu0 0
  %1626 = vmatmul.mubr.bf16.gmra.mxu0 %v1583
  %v1627 = vpop.f32.mrf.mxu0
  %v1628 = vadd.f32 %v1565, %v1627
  %v1629 = vpop.f32.mrf.mxu0
  %v1630 = vpop.f32.mrf.mxu0
  %v1631 = vadd.f32 %v1565, %v1630
  %v1632 = vpop.f32.mrf.mxu0
  %1633 = vdwg.mxu0
  %v1634 = vpack.c.bf16 %v1623, %v1620
  %v1635 = vpack.c.bf16 %v1631, %v1628
  %v1636 = vmul.f32 %v1620, %v282
  %v1637 = vmul.f32 %v1623, %v282
  %v1638 = vmul.f32 %v1628, %v282
  %v1639 = vmul.f32 %v1631, %v282
  %v1640 = vpack.c.bf16 %v1637, %v1636
  %v1641 = vpack.c.bf16 %v1639, %v1638
  %1644 = vrot.lane.b32.xlu0 %v1634, 96
  %v1645 = vpop.permute.xlu0 %1644
  %1646 = vrot.lane.b32.xlu0 %v1635, 96
  %v1647 = vpop.permute.xlu0 %1646
  %v1649 = vsel %vm83, %v1640, 0
  %v1652 = vsel %vm83, %v1641, 0
  %v1655 = vsel %vm83, %v1645, 0
  %v1658 = vsel %vm83, %v1647, 0
  %1660 = vmatprep.subr.bf16.mxu0 0
  %1661 = vmatpush1.bf16.xpose.msra.mxu0 0
  %1662 = vmatprep.subr.bf16.mxu0 0
  %1663 = vmatpush1.bf16.xpose.msra.mxu0 0
  %1664 = vmatprep.subr.bf16.mxu0 0
  %1665 = vmatpush1.bf16.xpose.msra.mxu0 0
  %1666 = vmatprep.subr.bf16.mxu0 0
  %1667 = vmatpush1.bf16.xpose.msra.mxu0 0
  %1668 = vmatprep.subr.bf16.mxu0 0
  %1669 = vmatpush1.bf16.xpose.msra.mxu0 0
  %1670 = vmatprep.subr.bf16.mxu0 0
  %1671 = vmatpush1.bf16.xpose.msra.mxu0 0
  %1672 = vmatprep.subr.bf16.mxu0 0
  %1673 = vmatpush1.bf16.xpose.msra.mxu0 %v1658
  %1674 = vmatprep.subr.bf16.mxu0 0
  %1675 = vmatpush1.bf16.xpose.msra.mxu0 %v1655
  %1676 = vmatprep.subr.bf16.mxu0 0
  %1677 = vmatpush2.bf16.xpose.msra.mxu0 0
  %1678 = vmatprep.subr.bf16.mxu0 0
  %1679 = vmatpush2.bf16.xpose.msra.mxu0 0
  %1680 = vmatprep.subr.bf16.mxu0 0
  %1681 = vmatpush2.bf16.xpose.msra.mxu0 0
  %1682 = vmatprep.subr.bf16.mxu0 0
  %1683 = vmatpush2.bf16.xpose.msra.mxu0 0
  %1684 = vmatprep.subr.bf16.mxu0 0
  %1685 = vmatpush2.bf16.xpose.msra.mxu0 0
  %1686 = vmatprep.subr.bf16.mxu0 0
  %1687 = vmatpush2.bf16.xpose.msra.mxu0 0
  %1688 = vmatprep.subr.bf16.mxu0 0
  %1689 = vmatpush2.bf16.xpose.msra.mxu0 0
  %1690 = vmatprep.subr.bf16.mxu0 0
  %1691 = vmatpush2.bf16.xpose.msra.mxu0 0
  %1692 = vmatprep.mubr.bf16.mxu0 0
  %1693 = vmatmul.mubr.bf16.gmra.mxu0 %v1649
  %v1694 = vpop.f32.mrf.mxu0
  %v1695 = vadd.f32 %v276, %v1694
  %v1696 = vpop.f32.mrf.mxu0
  %v1697 = vpop.f32.mrf.mxu0
  %v1698 = vadd.f32 %v277, %v1697
  %v1699 = vpop.f32.mrf.mxu0
  %1700 = vmatprep.mubr.bf16.mxu0 0
  %1701 = vmatmul.mubr.bf16.gmra.mxu0 %v1652
  %v1702 = vpop.f32.mrf.mxu0
  %v1703 = vadd.f32 %v278, %v1702
  %v1704 = vpop.f32.mrf.mxu0
  %v1705 = vpop.f32.mrf.mxu0
  %v1706 = vadd.f32 %v279, %v1705
  %v1707 = vpop.f32.mrf.mxu0
  %1708 = vdwg.mxu0
  %v1709 = vsel %vm83, %v1695, -inf
  %1710 = vmax.xlane.f32.xlu0 %v1709
  %v1711 = vpop.xlane.xlu0 %1710
  %v1712 = vsel %vm83, %v1698, -inf
  %1713 = vmax.xlane.f32.xlu0 %v1712
  %v1714 = vpop.xlane.xlu0 %1713
  %v1715 = vsel %vm83, %v1703, -inf
  %1716 = vmax.xlane.f32.xlu0 %v1715
  %v1717 = vpop.xlane.xlu0 %1716
  %v1718 = vsel %vm83, %v1706, -inf
  %1719 = vmax.xlane.f32.xlu0 %v1718
  %v1720 = vpop.xlane.xlu0 %1719
  %v1721 = vsub.f32 %v1695, %v1711
  %v1722 = vsub.f32 %v1698, %v1714
  %v1723 = vsub.f32 %v1703, %v1717
  %v1724 = vsub.f32 %v1706, %v1720
  %v1725 = vmul.f32 %v1721, 1.442695
  %v1726 = vpow.pop %v1725
  %v1727 = vmul.f32 %v1722, 1.442695
  %v1728 = vpow.pop %v1727
  %v1729 = vmul.f32 %v1723, 1.442695
  %v1730 = vpow.pop %v1729
  %v1731 = vmul.f32 %v1724, 1.442695
  %v1732 = vpow.pop %v1731
  %v1733 = vsel %vm83, %v1726, 0.0
  %1734 = vadd.xlane.f32.xlu0 %v1733
  %v1735 = vpop.xlane.xlu0 %1734
  %v1736 = vsel %vm83, %v1728, 0.0
  %1737 = vadd.xlane.f32.xlu0 %v1736
  %v1738 = vpop.xlane.xlu0 %1737
  %v1739 = vsel %vm83, %v1730, 0.0
  %1740 = vadd.xlane.f32.xlu0 %v1739
  %v1741 = vpop.xlane.xlu0 %1740
  %v1742 = vsel %vm83, %v1732, 0.0
  %1743 = vadd.xlane.f32.xlu0 %v1742
  %v1744 = vpop.xlane.xlu0 %1743
  %v1745 = vrcp.pop %v1735
  %v1746 = vrcp.pop %v1738
  %v1747 = vrcp.pop %v1741
  %v1748 = vrcp.pop %v1744
  %v1749 = vmul.f32 %v1726, %v1745
  %v1750 = vmul.f32 %v1728, %v1746
  %v1751 = vmul.f32 %v1730, %v1747
  %v1752 = vmul.f32 %v1732, %v1748
  %v1753 = vmul.f32 %v1620, %v498
  %v1754 = vmul.f32 %v1623, %v498
  %v1755 = vmul.f32 %v1628, %v498
  %v1756 = vmul.f32 %v1631, %v498
  %v1757 = vpack.c.bf16 %v1754, %v1753
  %v1758 = vpack.c.bf16 %v1756, %v1755
  %v1759 = vpack.c.bf16 %v1750, %v1749
  %v1760 = vpack.c.bf16 %v1752, %v1751
  %v1761 = vmul.f32 %v1620, %v285
  %v1762 = vmul.f32 %v1623, %v285
  %v1763 = vmul.f32 %v1628, %v285
  %v1764 = vmul.f32 %v1631, %v285
  %v1765 = vpack.c.bf16 %v1762, %v1761
  %v1766 = vpack.c.bf16 %v1764, %v1763
  %v1768 = vsel %vm83, %v1765, 0
  %v1771 = vsel %vm83, %v1766, 0
  %1773 = vmatprep.subr.bf16.mxu0 0
  %1774 = vmatpush1.bf16.xpose.msra.mxu0 0
  %1775 = vmatprep.subr.bf16.mxu0 0
  %1776 = vmatpush1.bf16.xpose.msra.mxu0 0
  %1777 = vmatprep.subr.bf16.mxu0 0
  %1778 = vmatpush1.bf16.xpose.msra.mxu0 0
  %1779 = vmatprep.subr.bf16.mxu0 0
  %1780 = vmatpush1.bf16.xpose.msra.mxu0 0
  %1781 = vmatprep.subr.bf16.mxu0 0
  %1782 = vmatpush1.bf16.xpose.msra.mxu0 0
  %1783 = vmatprep.subr.bf16.mxu0 0
  %1784 = vmatpush1.bf16.xpose.msra.mxu0 0
  %1785 = vmatprep.subr.bf16.mxu0 0
  %1786 = vmatpush1.bf16.xpose.msra.mxu0 %v1658
  %1787 = vmatprep.subr.bf16.mxu0 0
  %1788 = vmatpush1.bf16.xpose.msra.mxu0 %v1655
  %1789 = vmatprep.subr.bf16.mxu0 0
  %1790 = vmatpush2.bf16.xpose.msra.mxu0 0
  %1791 = vmatprep.subr.bf16.mxu0 0
  %1792 = vmatpush2.bf16.xpose.msra.mxu0 0
  %1793 = vmatprep.subr.bf16.mxu0 0
  %1794 = vmatpush2.bf16.xpose.msra.mxu0 0
  %1795 = vmatprep.subr.bf16.mxu0 0
  %1796 = vmatpush2.bf16.xpose.msra.mxu0 0
  %1797 = vmatprep.subr.bf16.mxu0 0
  %1798 = vmatpush2.bf16.xpose.msra.mxu0 0
  %1799 = vmatprep.subr.bf16.mxu0 0
  %1800 = vmatpush2.bf16.xpose.msra.mxu0 0
  %1801 = vmatprep.subr.bf16.mxu0 0
  %1802 = vmatpush2.bf16.xpose.msra.mxu0 0
  %1803 = vmatprep.subr.bf16.mxu0 0
  %1804 = vmatpush2.bf16.xpose.msra.mxu0 0
  %1805 = vmatprep.mubr.bf16.mxu0 0
  %1806 = vmatmul.mubr.bf16.gmra.mxu0 %v1768
  %v1807 = vpop.f32.mrf.mxu0
  %v1808 = vadd.f32 %v276, %v1807
  %v1809 = vpop.f32.mrf.mxu0
  %v1810 = vpop.f32.mrf.mxu0
  %v1811 = vadd.f32 %v277, %v1810
  %v1812 = vpop.f32.mrf.mxu0
  %1813 = vmatprep.mubr.bf16.mxu0 0
  %1814 = vmatmul.mubr.bf16.gmra.mxu0 %v1771
  %v1815 = vpop.f32.mrf.mxu0
  %v1816 = vadd.f32 %v278, %v1815
  %v1817 = vpop.f32.mrf.mxu0
  %v1818 = vpop.f32.mrf.mxu0
  %v1819 = vadd.f32 %v279, %v1818
  %v1820 = vpop.f32.mrf.mxu0
  %1821 = vdwg.mxu0
  %v1822 = vsel %vm83, %v1808, -inf
  %1823 = vmax.xlane.f32.xlu0 %v1822
  %v1824 = vpop.xlane.xlu0 %1823
  %v1825 = vsel %vm83, %v1811, -inf
  %1826 = vmax.xlane.f32.xlu0 %v1825
  %v1827 = vpop.xlane.xlu0 %1826
  %v1828 = vsel %vm83, %v1816, -inf
  %1829 = vmax.xlane.f32.xlu0 %v1828
  %v1830 = vpop.xlane.xlu0 %1829
  %v1831 = vsel %vm83, %v1819, -inf
  %1832 = vmax.xlane.f32.xlu0 %v1831
  %v1833 = vpop.xlane.xlu0 %1832
  %v1834 = vsub.f32 %v1808, %v1824
  %v1835 = vsub.f32 %v1811, %v1827
  %v1836 = vsub.f32 %v1816, %v1830
  %v1837 = vsub.f32 %v1819, %v1833
  %v1838 = vmul.f32 %v1834, 1.442695
  %v1839 = vpow.pop %v1838
  %v1840 = vmul.f32 %v1835, 1.442695
  %v1841 = vpow.pop %v1840
  %v1842 = vmul.f32 %v1836, 1.442695
  %v1843 = vpow.pop %v1842
  %v1844 = vmul.f32 %v1837, 1.442695
  %v1845 = vpow.pop %v1844
  %v1846 = vsel %vm83, %v1839, 0.0
  %1847 = vadd.xlane.f32.xlu0 %v1846
  %v1848 = vpop.xlane.xlu0 %1847
  %v1849 = vsel %vm83, %v1841, 0.0
  %1850 = vadd.xlane.f32.xlu0 %v1849
  %v1851 = vpop.xlane.xlu0 %1850
  %v1852 = vsel %vm83, %v1843, 0.0
  %1853 = vadd.xlane.f32.xlu0 %v1852
  %v1854 = vpop.xlane.xlu0 %1853
  %v1855 = vsel %vm83, %v1845, 0.0
  %1856 = vadd.xlane.f32.xlu0 %v1855
  %v1857 = vpop.xlane.xlu0 %1856
  %v1858 = vrcp.pop %v1848
  %v1859 = vrcp.pop %v1851
  %v1860 = vrcp.pop %v1854
  %v1861 = vrcp.pop %v1857
  %v1862 = vmul.f32 %v1839, %v1858
  %v1863 = vmul.f32 %v1841, %v1859
  %v1864 = vmul.f32 %v1843, %v1860
  %v1865 = vmul.f32 %v1845, %v1861
  %v1866 = vmul.f32 %v1620, %v615
  %v1867 = vmul.f32 %v1623, %v615
  %v1868 = vmul.f32 %v1628, %v615
  %v1869 = vmul.f32 %v1631, %v615
  %v1870 = vpack.c.bf16 %v1867, %v1866
  %v1871 = vpack.c.bf16 %v1869, %v1868
  %v1872 = vpack.c.bf16 %v1863, %v1862
  %v1873 = vpack.c.bf16 %v1865, %v1864
  %1876 = vrot.lane.b32.xlu0 %v1870, 64
  %v1877 = vpop.permute.xlu0 %1876
  %1878 = vrot.lane.b32.xlu0 %v1871, 64
  %v1879 = vpop.permute.xlu0 %1878
  %v1883 = vsel %vm83, %v1872, 0
  %v1886 = vsel %vm83, %v1873, 0
  %1888 = vmatprep.subr.bf16.mxu0 0
  %1889 = vmatpush1.bf16.msra.mxu0 0
  %1890 = vmatprep.subr.bf16.mxu0 0
  %1891 = vmatpush1.bf16.msra.mxu0 0
  %1892 = vmatprep.subr.bf16.mxu0 0
  %1893 = vmatpush1.bf16.msra.mxu0 0
  %1894 = vmatprep.subr.bf16.mxu0 0
  %1895 = vmatpush1.bf16.msra.mxu0 0
  %1896 = vmatprep.subr.bf16.mxu0 0
  %1897 = vmatpush1.bf16.msra.mxu0 0
  %1898 = vmatprep.subr.bf16.mxu0 0
  %1899 = vmatpush1.bf16.msra.mxu0 0
  %1900 = vmatprep.subr.bf16.mxu0 0
  %1901 = vmatpush1.bf16.msra.mxu0 %v1879
  %1902 = vmatprep.subr.bf16.mxu0 0
  %1903 = vmatpush1.bf16.msra.mxu0 %v1877
  %1904 = vmatprep.subr.bf16.mxu0 0
  %1905 = vmatpush2.bf16.msra.mxu0 0
  %1906 = vmatprep.subr.bf16.mxu0 0
  %1907 = vmatpush2.bf16.msra.mxu0 0
  %1908 = vmatprep.subr.bf16.mxu0 0
  %1909 = vmatpush2.bf16.msra.mxu0 0
  %1910 = vmatprep.subr.bf16.mxu0 0
  %1911 = vmatpush2.bf16.msra.mxu0 0
  %1912 = vmatprep.subr.bf16.mxu0 0
  %1913 = vmatpush2.bf16.msra.mxu0 0
  %1914 = vmatprep.subr.bf16.mxu0 0
  %1915 = vmatpush2.bf16.msra.mxu0 0
  %1916 = vmatprep.subr.bf16.mxu0 0
  %1917 = vmatpush2.bf16.msra.mxu0 0
  %1918 = vmatprep.subr.bf16.mxu0 0
  %1919 = vmatpush2.bf16.msra.mxu0 0
  %1920 = vmatprep.mubr.bf16.mxu0 0
  %1921 = vmatmul.mubr.bf16.gmra.mxu0 %v1883
  %v1922 = vpop.f32.mrf.mxu0
  %v1923 = vadd.f32 0.0, %v1922
  %v1924 = vpop.f32.mrf.mxu0
  %v1925 = vpop.f32.mrf.mxu0
  %v1926 = vadd.f32 0.0, %v1925
  %v1927 = vpop.f32.mrf.mxu0
  %1928 = vmatprep.mubr.bf16.mxu0 0
  %1929 = vmatmul.mubr.bf16.gmra.mxu0 %v1886
  %v1930 = vpop.f32.mrf.mxu0
  %v1931 = vadd.f32 0.0, %v1930
  %v1932 = vpop.f32.mrf.mxu0
  %v1933 = vpop.f32.mrf.mxu0
  %v1934 = vadd.f32 0.0, %v1933
  %v1935 = vpop.f32.mrf.mxu0
  %1936 = vdwg.mxu0
  %1939 = vrot.lane.b32.xlu0 %v1757, 64
  %v1940 = vpop.permute.xlu0 %1939
  %1941 = vrot.lane.b32.xlu0 %v1758, 64
  %v1942 = vpop.permute.xlu0 %1941
  %v1946 = vsel %vm83, %v1759, 0
  %v1949 = vsel %vm83, %v1760, 0
  %1951 = vmatprep.subr.bf16.mxu0 0
  %1952 = vmatpush1.bf16.msra.mxu0 0
  %1953 = vmatprep.subr.bf16.mxu0 0
  %1954 = vmatpush1.bf16.msra.mxu0 0
  %1955 = vmatprep.subr.bf16.mxu0 0
  %1956 = vmatpush1.bf16.msra.mxu0 0
  %1957 = vmatprep.subr.bf16.mxu0 0
  %1958 = vmatpush1.bf16.msra.mxu0 0
  %1959 = vmatprep.subr.bf16.mxu0 0
  %1960 = vmatpush1.bf16.msra.mxu0 0
  %1961 = vmatprep.subr.bf16.mxu0 0
  %1962 = vmatpush1.bf16.msra.mxu0 0
  %1963 = vmatprep.subr.bf16.mxu0 0
  %1964 = vmatpush1.bf16.msra.mxu0 %v1942
  %1965 = vmatprep.subr.bf16.mxu0 0
  %1966 = vmatpush1.bf16.msra.mxu0 %v1940
  %1967 = vmatprep.subr.bf16.mxu0 0
  %1968 = vmatpush2.bf16.msra.mxu0 0
  %1969 = vmatprep.subr.bf16.mxu0 0
  %1970 = vmatpush2.bf16.msra.mxu0 0
  %1971 = vmatprep.subr.bf16.mxu0 0
  %1972 = vmatpush2.bf16.msra.mxu0 0
  %1973 = vmatprep.subr.bf16.mxu0 0
  %1974 = vmatpush2.bf16.msra.mxu0 0
  %1975 = vmatprep.subr.bf16.mxu0 0
  %1976 = vmatpush2.bf16.msra.mxu0 0
  %1977 = vmatprep.subr.bf16.mxu0 0
  %1978 = vmatpush2.bf16.msra.mxu0 0
  %1979 = vmatprep.subr.bf16.mxu0 0
  %1980 = vmatpush2.bf16.msra.mxu0 0
  %1981 = vmatprep.subr.bf16.mxu0 0
  %1982 = vmatpush2.bf16.msra.mxu0 0
  %1983 = vmatprep.mubr.bf16.mxu0 0
  %1984 = vmatmul.mubr.bf16.gmra.mxu0 %v1946
  %v1985 = vpop.f32.mrf.mxu0
  %v1986 = vadd.f32 %v1923, %v1985
  %v1987 = vpop.f32.mrf.mxu0
  %v1988 = vpop.f32.mrf.mxu0
  %v1989 = vadd.f32 %v1926, %v1988
  %v1990 = vpop.f32.mrf.mxu0
  %1991 = vmatprep.mubr.bf16.mxu0 0
  %1992 = vmatmul.mubr.bf16.gmra.mxu0 %v1949
  %v1993 = vpop.f32.mrf.mxu0
  %v1994 = vadd.f32 %v1931, %v1993
  %v1995 = vpop.f32.mrf.mxu0
  %v1996 = vpop.f32.mrf.mxu0
  %v1997 = vadd.f32 %v1934, %v1996
  %v1998 = vpop.f32.mrf.mxu0
  %1999 = vdwg.mxu0
  %v2000 = vmul.f32 %v1620, %v288
  %v2001 = vmul.f32 %v1623, %v288
  %v2002 = vmul.f32 %v1628, %v288
  %v2003 = vmul.f32 %v1631, %v288
  %v2004 = vpack.c.bf16 %v2001, %v2000
  %v2005 = vpack.c.bf16 %v2003, %v2002
  %v2007 = vsel %vm83, %v2004, 0
  %v2010 = vsel %vm83, %v2005, 0
  %2012 = vmatprep.subr.bf16.mxu0 0
  %2013 = vmatpush1.bf16.xpose.msra.mxu0 0
  %2014 = vmatprep.subr.bf16.mxu0 0
  %2015 = vmatpush1.bf16.xpose.msra.mxu0 0
  %2016 = vmatprep.subr.bf16.mxu0 0
  %2017 = vmatpush1.bf16.xpose.msra.mxu0 0
  %2018 = vmatprep.subr.bf16.mxu0 0
  %2019 = vmatpush1.bf16.xpose.msra.mxu0 0
  %2020 = vmatprep.subr.bf16.mxu0 0
  %2021 = vmatpush1.bf16.xpose.msra.mxu0 0
  %2022 = vmatprep.subr.bf16.mxu0 0
  %2023 = vmatpush1.bf16.xpose.msra.mxu0 0
  %2024 = vmatprep.subr.bf16.mxu0 0
  %2025 = vmatpush1.bf16.xpose.msra.mxu0 %v1658
  %2026 = vmatprep.subr.bf16.mxu0 0
  %2027 = vmatpush1.bf16.xpose.msra.mxu0 %v1655
  %2028 = vmatprep.subr.bf16.mxu0 0
  %2029 = vmatpush2.bf16.xpose.msra.mxu0 0
  %2030 = vmatprep.subr.bf16.mxu0 0
  %2031 = vmatpush2.bf16.xpose.msra.mxu0 0
  %2032 = vmatprep.subr.bf16.mxu0 0
  %2033 = vmatpush2.bf16.xpose.msra.mxu0 0
  %2034 = vmatprep.subr.bf16.mxu0 0
  %2035 = vmatpush2.bf16.xpose.msra.mxu0 0
  %2036 = vmatprep.subr.bf16.mxu0 0
  %2037 = vmatpush2.bf16.xpose.msra.mxu0 0
  %2038 = vmatprep.subr.bf16.mxu0 0
  %2039 = vmatpush2.bf16.xpose.msra.mxu0 0
  %2040 = vmatprep.subr.bf16.mxu0 0
  %2041 = vmatpush2.bf16.xpose.msra.mxu0 0
  %2042 = vmatprep.subr.bf16.mxu0 0
  %2043 = vmatpush2.bf16.xpose.msra.mxu0 0
  %2044 = vmatprep.mubr.bf16.mxu0 0
  %2045 = vmatmul.mubr.bf16.gmra.mxu0 %v2007
  %v2046 = vpop.f32.mrf.mxu0
  %v2047 = vadd.f32 %v276, %v2046
  %v2048 = vpop.f32.mrf.mxu0
  %v2049 = vpop.f32.mrf.mxu0
  %v2050 = vadd.f32 %v277, %v2049
  %v2051 = vpop.f32.mrf.mxu0
  %2052 = vmatprep.mubr.bf16.mxu0 0
  %2053 = vmatmul.mubr.bf16.gmra.mxu0 %v2010
  %v2054 = vpop.f32.mrf.mxu0
  %v2055 = vadd.f32 %v278, %v2054
  %v2056 = vpop.f32.mrf.mxu0
  %v2057 = vpop.f32.mrf.mxu0
  %v2058 = vadd.f32 %v279, %v2057
  %v2059 = vpop.f32.mrf.mxu0
  %2060 = vdwg.mxu0
  %v2061 = vsel %vm83, %v2047, -inf
  %2062 = vmax.xlane.f32.xlu0 %v2061
  %v2063 = vpop.xlane.xlu0 %2062
  %v2064 = vsel %vm83, %v2050, -inf
  %2065 = vmax.xlane.f32.xlu0 %v2064
  %v2066 = vpop.xlane.xlu0 %2065
  %v2067 = vsel %vm83, %v2055, -inf
  %2068 = vmax.xlane.f32.xlu0 %v2067
  %v2069 = vpop.xlane.xlu0 %2068
  %v2070 = vsel %vm83, %v2058, -inf
  %2071 = vmax.xlane.f32.xlu0 %v2070
  %v2072 = vpop.xlane.xlu0 %2071
  %v2073 = vsub.f32 %v2047, %v2063
  %v2074 = vsub.f32 %v2050, %v2066
  %v2075 = vsub.f32 %v2055, %v2069
  %v2076 = vsub.f32 %v2058, %v2072
  %v2077 = vmul.f32 %v2073, 1.442695
  %v2078 = vpow.pop %v2077
  %v2079 = vmul.f32 %v2074, 1.442695
  %v2080 = vpow.pop %v2079
  %v2081 = vmul.f32 %v2075, 1.442695
  %v2082 = vpow.pop %v2081
  %v2083 = vmul.f32 %v2076, 1.442695
  %v2084 = vpow.pop %v2083
  %v2085 = vsel %vm83, %v2078, 0.0
  %2086 = vadd.xlane.f32.xlu0 %v2085
  %v2087 = vpop.xlane.xlu0 %2086
  %v2088 = vsel %vm83, %v2080, 0.0
  %2089 = vadd.xlane.f32.xlu0 %v2088
  %v2090 = vpop.xlane.xlu0 %2089
  %v2091 = vsel %vm83, %v2082, 0.0
  %2092 = vadd.xlane.f32.xlu0 %v2091
  %v2093 = vpop.xlane.xlu0 %2092
  %v2094 = vsel %vm83, %v2084, 0.0
  %2095 = vadd.xlane.f32.xlu0 %v2094
  %v2096 = vpop.xlane.xlu0 %2095
  %v2097 = vrcp.pop %v2087
  %v2098 = vrcp.pop %v2090
  %v2099 = vrcp.pop %v2093
  %v2100 = vrcp.pop %v2096
  %v2101 = vmul.f32 %v2078, %v2097
  %v2102 = vmul.f32 %v2080, %v2098
  %v2103 = vmul.f32 %v2082, %v2099
  %v2104 = vmul.f32 %v2084, %v2100
  %v2105 = vmul.f32 %v1620, %v858
  %v2106 = vmul.f32 %v1623, %v858
  %v2107 = vmul.f32 %v1628, %v858
  %v2108 = vmul.f32 %v1631, %v858
  %v2109 = vpack.c.bf16 %v2106, %v2105
  %v2110 = vpack.c.bf16 %v2108, %v2107
  %v2111 = vpack.c.bf16 %v2102, %v2101
  %v2112 = vpack.c.bf16 %v2104, %v2103
  %2115 = vrot.lane.b32.xlu0 %v2109, 64
  %v2116 = vpop.permute.xlu0 %2115
  %2117 = vrot.lane.b32.xlu0 %v2110, 64
  %v2118 = vpop.permute.xlu0 %2117
  %v2122 = vsel %vm83, %v2111, 0
  %v2125 = vsel %vm83, %v2112, 0
  %2127 = vmatprep.subr.bf16.mxu0 0
  %2128 = vmatpush1.bf16.msra.mxu0 0
  %2129 = vmatprep.subr.bf16.mxu0 0
  %2130 = vmatpush1.bf16.msra.mxu0 0
  %2131 = vmatprep.subr.bf16.mxu0 0
  %2132 = vmatpush1.bf16.msra.mxu0 0
  %2133 = vmatprep.subr.bf16.mxu0 0
  %2134 = vmatpush1.bf16.msra.mxu0 0
  %2135 = vmatprep.subr.bf16.mxu0 0
  %2136 = vmatpush1.bf16.msra.mxu0 0
  %2137 = vmatprep.subr.bf16.mxu0 0
  %2138 = vmatpush1.bf16.msra.mxu0 0
  %2139 = vmatprep.subr.bf16.mxu0 0
  %2140 = vmatpush1.bf16.msra.mxu0 %v2118
  %2141 = vmatprep.subr.bf16.mxu0 0
  %2142 = vmatpush1.bf16.msra.mxu0 %v2116
  %2143 = vmatprep.subr.bf16.mxu0 0
  %2144 = vmatpush2.bf16.msra.mxu0 0
  %2145 = vmatprep.subr.bf16.mxu0 0
  %2146 = vmatpush2.bf16.msra.mxu0 0
  %2147 = vmatprep.subr.bf16.mxu0 0
  %2148 = vmatpush2.bf16.msra.mxu0 0
  %2149 = vmatprep.subr.bf16.mxu0 0
  %2150 = vmatpush2.bf16.msra.mxu0 0
  %2151 = vmatprep.subr.bf16.mxu0 0
  %2152 = vmatpush2.bf16.msra.mxu0 0
  %2153 = vmatprep.subr.bf16.mxu0 0
  %2154 = vmatpush2.bf16.msra.mxu0 0
  %2155 = vmatprep.subr.bf16.mxu0 0
  %2156 = vmatpush2.bf16.msra.mxu0 0
  %2157 = vmatprep.subr.bf16.mxu0 0
  %2158 = vmatpush2.bf16.msra.mxu0 0
  %2159 = vmatprep.mubr.bf16.mxu0 0
  %2160 = vmatmul.mubr.bf16.gmra.mxu0 %v2122
  %v2161 = vpop.f32.mrf.mxu0
  %v2162 = vadd.f32 0.0, %v2161
  %v2163 = vpop.f32.mrf.mxu0
  %v2164 = vpop.f32.mrf.mxu0
  %v2165 = vadd.f32 0.0, %v2164
  %v2166 = vpop.f32.mrf.mxu0
  %2167 = vmatprep.mubr.bf16.mxu0 0
  %2168 = vmatmul.mubr.bf16.gmra.mxu0 %v2125
  %v2169 = vpop.f32.mrf.mxu0
  %v2170 = vadd.f32 0.0, %v2169
  %v2171 = vpop.f32.mrf.mxu0
  %v2172 = vpop.f32.mrf.mxu0
  %v2173 = vadd.f32 0.0, %v2172
  %v2174 = vpop.f32.mrf.mxu0
  %2175 = vdwg.mxu0
  %v2176 = vadd.f32 %v1986, %v2162
  %v2177 = vadd.f32 %v1989, %v2165
  %v2178 = vadd.f32 %v1994, %v2170
  %v2179 = vadd.f32 %v1997, %v2173
  %v2180 = vmul.f32 %v1620, %v291
  %v2181 = vmul.f32 %v1623, %v291
  %v2182 = vmul.f32 %v1628, %v291
  %v2183 = vmul.f32 %v1631, %v291
  %v2184 = vpack.c.bf16 %v2181, %v2180
  %v2185 = vpack.c.bf16 %v2183, %v2182
  %v2187 = vsel %vm83, %v2184, 0
  %v2190 = vsel %vm83, %v2185, 0
  %2192 = vmatprep.subr.bf16.mxu0 0
  %2193 = vmatpush1.bf16.xpose.msra.mxu0 0
  %2194 = vmatprep.subr.bf16.mxu0 0
  %2195 = vmatpush1.bf16.xpose.msra.mxu0 0
  %2196 = vmatprep.subr.bf16.mxu0 0
  %2197 = vmatpush1.bf16.xpose.msra.mxu0 0
  %2198 = vmatprep.subr.bf16.mxu0 0
  %2199 = vmatpush1.bf16.xpose.msra.mxu0 0
  %2200 = vmatprep.subr.bf16.mxu0 0
  %2201 = vmatpush1.bf16.xpose.msra.mxu0 0
  %2202 = vmatprep.subr.bf16.mxu0 0
  %2203 = vmatpush1.bf16.xpose.msra.mxu0 0
  %2204 = vmatprep.subr.bf16.mxu0 0
  %2205 = vmatpush1.bf16.xpose.msra.mxu0 %v1658
  %2206 = vmatprep.subr.bf16.mxu0 0
  %2207 = vmatpush1.bf16.xpose.msra.mxu0 %v1655
  %2208 = vmatprep.subr.bf16.mxu0 0
  %2209 = vmatpush2.bf16.xpose.msra.mxu0 0
  %2210 = vmatprep.subr.bf16.mxu0 0
  %2211 = vmatpush2.bf16.xpose.msra.mxu0 0
  %2212 = vmatprep.subr.bf16.mxu0 0
  %2213 = vmatpush2.bf16.xpose.msra.mxu0 0
  %2214 = vmatprep.subr.bf16.mxu0 0
  %2215 = vmatpush2.bf16.xpose.msra.mxu0 0
  %2216 = vmatprep.subr.bf16.mxu0 0
  %2217 = vmatpush2.bf16.xpose.msra.mxu0 0
  %2218 = vmatprep.subr.bf16.mxu0 0
  %2219 = vmatpush2.bf16.xpose.msra.mxu0 0
  %2220 = vmatprep.subr.bf16.mxu0 0
  %2221 = vmatpush2.bf16.xpose.msra.mxu0 0
  %2222 = vmatprep.subr.bf16.mxu0 0
  %2223 = vmatpush2.bf16.xpose.msra.mxu0 0
  %2224 = vmatprep.mubr.bf16.mxu0 0
  %2225 = vmatmul.mubr.bf16.gmra.mxu0 %v2187
  %v2226 = vpop.f32.mrf.mxu0
  %v2227 = vadd.f32 %v276, %v2226
  %v2228 = vpop.f32.mrf.mxu0
  %v2229 = vpop.f32.mrf.mxu0
  %v2230 = vadd.f32 %v277, %v2229
  %v2231 = vpop.f32.mrf.mxu0
  %2232 = vmatprep.mubr.bf16.mxu0 0
  %2233 = vmatmul.mubr.bf16.gmra.mxu0 %v2190
  %v2234 = vpop.f32.mrf.mxu0
  %v2235 = vadd.f32 %v278, %v2234
  %v2236 = vpop.f32.mrf.mxu0
  %v2237 = vpop.f32.mrf.mxu0
  %v2238 = vadd.f32 %v279, %v2237
  %v2239 = vpop.f32.mrf.mxu0
  %2240 = vdwg.mxu0
  %v2241 = vsel %vm83, %v2227, -inf
  %2242 = vmax.xlane.f32.xlu0 %v2241
  %v2243 = vpop.xlane.xlu0 %2242
  %v2244 = vsel %vm83, %v2230, -inf
  %2245 = vmax.xlane.f32.xlu0 %v2244
  %v2246 = vpop.xlane.xlu0 %2245
  %v2247 = vsel %vm83, %v2235, -inf
  %2248 = vmax.xlane.f32.xlu0 %v2247
  %v2249 = vpop.xlane.xlu0 %2248
  %v2250 = vsel %vm83, %v2238, -inf
  %2251 = vmax.xlane.f32.xlu0 %v2250
  %v2252 = vpop.xlane.xlu0 %2251
  %v2253 = vsub.f32 %v2227, %v2243
  %v2254 = vsub.f32 %v2230, %v2246
  %v2255 = vsub.f32 %v2235, %v2249
  %v2256 = vsub.f32 %v2238, %v2252
  %v2257 = vmul.f32 %v2253, 1.442695
  %v2258 = vpow.pop %v2257
  %v2259 = vmul.f32 %v2254, 1.442695
  %v2260 = vpow.pop %v2259
  %v2261 = vmul.f32 %v2255, 1.442695
  %v2262 = vpow.pop %v2261
  %v2263 = vmul.f32 %v2256, 1.442695
  %v2264 = vpow.pop %v2263
  %v2265 = vsel %vm83, %v2258, 0.0
  %2266 = vadd.xlane.f32.xlu0 %v2265
  %v2267 = vpop.xlane.xlu0 %2266
  %v2268 = vsel %vm83, %v2260, 0.0
  %2269 = vadd.xlane.f32.xlu0 %v2268
  %v2270 = vpop.xlane.xlu0 %2269
  %v2271 = vsel %vm83, %v2262, 0.0
  %2272 = vadd.xlane.f32.xlu0 %v2271
  %v2273 = vpop.xlane.xlu0 %2272
  %v2274 = vsel %vm83, %v2264, 0.0
  %2275 = vadd.xlane.f32.xlu0 %v2274
  %v2276 = vpop.xlane.xlu0 %2275
  %v2277 = vrcp.pop %v2267
  %v2278 = vrcp.pop %v2270
  %v2279 = vrcp.pop %v2273
  %v2280 = vrcp.pop %v2276
  %v2281 = vmul.f32 %v2258, %v2277
  %v2282 = vmul.f32 %v2260, %v2278
  %v2283 = vmul.f32 %v2262, %v2279
  %v2284 = vmul.f32 %v2264, %v2280
  %v2285 = vmul.f32 %v1620, %v1042
  %v2286 = vmul.f32 %v1623, %v1042
  %v2287 = vmul.f32 %v1628, %v1042
  %v2288 = vmul.f32 %v1631, %v1042
  %v2289 = vpack.c.bf16 %v2286, %v2285
  %v2290 = vpack.c.bf16 %v2288, %v2287
  %v2291 = vpack.c.bf16 %v2282, %v2281
  %v2292 = vpack.c.bf16 %v2284, %v2283
  %2295 = vrot.lane.b32.xlu0 %v2289, 64
  %v2296 = vpop.permute.xlu0 %2295
  %2297 = vrot.lane.b32.xlu0 %v2290, 64
  %v2298 = vpop.permute.xlu0 %2297
  %v2302 = vsel %vm83, %v2291, 0
  %v2305 = vsel %vm83, %v2292, 0
  %2307 = vmatprep.subr.bf16.mxu0 0
  %2308 = vmatpush1.bf16.msra.mxu0 0
  %2309 = vmatprep.subr.bf16.mxu0 0
  %2310 = vmatpush1.bf16.msra.mxu0 0
  %2311 = vmatprep.subr.bf16.mxu0 0
  %2312 = vmatpush1.bf16.msra.mxu0 0
  %2313 = vmatprep.subr.bf16.mxu0 0
  %2314 = vmatpush1.bf16.msra.mxu0 0
  %2315 = vmatprep.subr.bf16.mxu0 0
  %2316 = vmatpush1.bf16.msra.mxu0 0
  %2317 = vmatprep.subr.bf16.mxu0 0
  %2318 = vmatpush1.bf16.msra.mxu0 0
  %2319 = vmatprep.subr.bf16.mxu0 0
  %2320 = vmatpush1.bf16.msra.mxu0 %v2298
  %2321 = vmatprep.subr.bf16.mxu0 0
  %2322 = vmatpush1.bf16.msra.mxu0 %v2296
  %2323 = vmatprep.subr.bf16.mxu0 0
  %2324 = vmatpush2.bf16.msra.mxu0 0
  %2325 = vmatprep.subr.bf16.mxu0 0
  %2326 = vmatpush2.bf16.msra.mxu0 0
  %2327 = vmatprep.subr.bf16.mxu0 0
  %2328 = vmatpush2.bf16.msra.mxu0 0
  %2329 = vmatprep.subr.bf16.mxu0 0
  %2330 = vmatpush2.bf16.msra.mxu0 0
  %2331 = vmatprep.subr.bf16.mxu0 0
  %2332 = vmatpush2.bf16.msra.mxu0 0
  %2333 = vmatprep.subr.bf16.mxu0 0
  %2334 = vmatpush2.bf16.msra.mxu0 0
  %2335 = vmatprep.subr.bf16.mxu0 0
  %2336 = vmatpush2.bf16.msra.mxu0 0
  %2337 = vmatprep.subr.bf16.mxu0 0
  %2338 = vmatpush2.bf16.msra.mxu0 0
  %2339 = vmatprep.mubr.bf16.mxu0 0
  %2340 = vmatmul.mubr.bf16.gmra.mxu0 %v2302
  %v2341 = vpop.f32.mrf.mxu0
  %v2342 = vadd.f32 0.0, %v2341
  %v2343 = vpop.f32.mrf.mxu0
  %v2344 = vpop.f32.mrf.mxu0
  %v2345 = vadd.f32 0.0, %v2344
  %v2346 = vpop.f32.mrf.mxu0
  %2347 = vmatprep.mubr.bf16.mxu0 0
  %2348 = vmatmul.mubr.bf16.gmra.mxu0 %v2305
  %v2349 = vpop.f32.mrf.mxu0
  %v2350 = vadd.f32 0.0, %v2349
  %v2351 = vpop.f32.mrf.mxu0
  %v2352 = vpop.f32.mrf.mxu0
  %v2353 = vadd.f32 0.0, %v2352
  %v2354 = vpop.f32.mrf.mxu0
  %2355 = vdwg.mxu0
  %v2356 = vadd.f32 %v2176, %v2342
  %v2357 = vadd.f32 %v2177, %v2345
  %v2358 = vadd.f32 %v2178, %v2350
  %v2359 = vadd.f32 %v2179, %v2353
  %s2360 = scalar_lea.vmem %s8, 16
  %v2361 = vld [vmem:[%s2360] sm:$0xf]
  %v2362 = vld [vmem:[%s2360 + $0x4] sm:$0xf]
  %v2363 = vld [vmem:[%s2360 + $0x8] sm:$0xf]
  %v2364 = vld [vmem:[%s2360 + $0xc] sm:$0xf]
  %v2365 = vpack.c.bf16 %v2357, %v2356
  %v2366 = vpack.c.bf16 %v2359, %v2358
  %s2367 = scalar_lea.vmem %s9, 1
  %v2368 = vld [vmem:[%s2367] sm:$0x1]
  %v2370 = vlaneseq
  %v2371 = vshrl.u32 %v2370, 7
  %v2372 = vsub.s32 0, %v2371
  %v2373 = vrot.slane %v2368, %v2372
  %v2379 = vunpack.c.l.b16 %v2361
  %v2380 = vunpack.c.l.b16 %v2362
  %v2381 = vunpack.c.l.b16 %v2363
  %v2382 = vunpack.c.l.b16 %v2364
  %v2383 = vpack.c.b16 %v2380, %v2379
  %v2384 = vpack.c.b16 %v2382, %v2381
  %v2388 = vsel %vm83, %v2365, 0
  %v2391 = vsel %vm83, %v2366, 0
  %2393 = vmatprep.subr.bf16.mxu0 0
  %2394 = vmatpush1.bf16.msra.mxu0 0
  %2395 = vmatprep.subr.bf16.mxu0 0
  %2396 = vmatpush1.bf16.msra.mxu0 0
  %2397 = vmatprep.subr.bf16.mxu0 0
  %2398 = vmatpush1.bf16.msra.mxu0 0
  %2399 = vmatprep.subr.bf16.mxu0 0
  %2400 = vmatpush1.bf16.msra.mxu0 0
  %2401 = vmatprep.subr.bf16.mxu0 0
  %2402 = vmatpush1.bf16.msra.mxu0 0
  %2403 = vmatprep.subr.bf16.mxu0 0
  %2404 = vmatpush1.bf16.msra.mxu0 0
  %2405 = vmatprep.subr.bf16.mxu0 0
  %2406 = vmatpush1.bf16.msra.mxu0 %v2384
  %2407 = vmatprep.subr.bf16.mxu0 0
  %2408 = vmatpush1.bf16.msra.mxu0 %v2383
  %2409 = vmatprep.subr.bf16.mxu0 0
  %2410 = vmatpush2.bf16.msra.mxu0 0
  %2411 = vmatprep.subr.bf16.mxu0 0
  %2412 = vmatpush2.bf16.msra.mxu0 0
  %2413 = vmatprep.subr.bf16.mxu0 0
  %2414 = vmatpush2.bf16.msra.mxu0 0
  %2415 = vmatprep.subr.bf16.mxu0 0
  %2416 = vmatpush2.bf16.msra.mxu0 0
  %2417 = vmatprep.subr.bf16.mxu0 0
  %2418 = vmatpush2.bf16.msra.mxu0 0
  %2419 = vmatprep.subr.bf16.mxu0 0
  %2420 = vmatpush2.bf16.msra.mxu0 0
  %2421 = vmatprep.subr.bf16.mxu0 0
  %2422 = vmatpush2.bf16.msra.mxu0 0
  %2423 = vmatprep.subr.bf16.mxu0 0
  %2424 = vmatpush2.bf16.msra.mxu0 0
  %2425 = vmatprep.mubr.bf16.mxu0 0
  %2426 = vmatmul.mubr.bf16.gmra.mxu0 %v2388
  %v2427 = vpop.f32.mrf.mxu0
  %v2428 = vadd.f32 %v2373, %v2427
  %v2429 = vpop.f32.mrf.mxu0
  %v2430 = vpop.f32.mrf.mxu0
  %v2431 = vadd.f32 %v2373, %v2430
  %v2432 = vpop.f32.mrf.mxu0
  %2433 = vmatprep.mubr.bf16.mxu0 0
  %2434 = vmatmul.mubr.bf16.gmra.mxu0 %v2391
  %v2435 = vpop.f32.mrf.mxu0
  %v2436 = vadd.f32 %v2373, %v2435
  %v2437 = vpop.f32.mrf.mxu0
  %v2438 = vpop.f32.mrf.mxu0
  %v2439 = vadd.f32 %v2373, %v2438
  %v2440 = vpop.f32.mrf.mxu0
  %2441 = vdwg.mxu0
  %v2442 = vadd.f32 %v2428, %v1548
  %v2443 = vadd.f32 %v2431, %v1549
  %v2444 = vadd.f32 %v2436, %v1550
  %v2445 = vadd.f32 %v2439, %v1551
  %s2446 = scalar_lea.vmem %s10, 1
  %v2447 = vld [vmem:[%s2446] sm:$0x1]
  %s2448 = scalar_lea.vmem %s11, 1
  %v2449 = vld [vmem:[%s2448] sm:$0x1]
  %v2450 = vsel %vm83, %v2442, 0.0
  %2451 = vadd.xlane.f32.xlu0 %v2450
  %v2452 = vpop.xlane.xlu0 %2451
  %v2453 = vsel %vm83, %v2443, 0.0
  %2454 = vadd.xlane.f32.xlu0 %v2453
  %v2455 = vpop.xlane.xlu0 %2454
  %v2456 = vsel %vm83, %v2444, 0.0
  %2457 = vadd.xlane.f32.xlu0 %v2456
  %v2458 = vpop.xlane.xlu0 %2457
  %v2459 = vsel %vm83, %v2445, 0.0
  %2460 = vadd.xlane.f32.xlu0 %v2459
  %v2461 = vpop.xlane.xlu0 %2460
  %v2462 = vmul.f32 %v2452, %v96
  %v2463 = vmul.f32 %v2455, %v96
  %v2464 = vmul.f32 %v2458, %v96
  %v2465 = vmul.f32 %v2461, %v96
  %v2466 = vsub.f32 %v2442, %v2462
  %v2467 = vsub.f32 %v2443, %v2463
  %v2468 = vsub.f32 %v2444, %v2464
  %v2469 = vsub.f32 %v2445, %v2465
  %v2470 = vmul.f32 %v2466, %v2466
  %v2471 = vmul.f32 %v2467, %v2467
  %v2472 = vmul.f32 %v2468, %v2468
  %v2473 = vmul.f32 %v2469, %v2469
  %v2474 = vsel %vm83, %v2470, 0.0
  %2475 = vadd.xlane.f32.xlu0 %v2474
  %v2476 = vpop.xlane.xlu0 %2475
  %v2477 = vsel %vm83, %v2471, 0.0
  %2478 = vadd.xlane.f32.xlu0 %v2477
  %v2479 = vpop.xlane.xlu0 %2478
  %v2480 = vsel %vm83, %v2472, 0.0
  %2481 = vadd.xlane.f32.xlu0 %v2480
  %v2482 = vpop.xlane.xlu0 %2481
  %v2483 = vsel %vm83, %v2473, 0.0
  %2484 = vadd.xlane.f32.xlu0 %v2483
  %v2485 = vpop.xlane.xlu0 %2484
  %v2486 = vmul.f32 %v2476, %v96
  %v2487 = vmul.f32 %v2479, %v96
  %v2488 = vmul.f32 %v2482, %v96
  %v2489 = vmul.f32 %v2485, %v96
  %v2490 = vadd.f32 %v2486, 1e-12
  %v2491 = vadd.f32 %v2487, 1e-12
  %v2492 = vadd.f32 %v2488, 1e-12
  %v2493 = vadd.f32 %v2489, 1e-12
  %v2494 = vrsqrt.pop %v2490
  %v2495 = vrsqrt.pop %v2491
  %v2496 = vrsqrt.pop %v2492
  %v2497 = vrsqrt.pop %v2493
  %v2498 = vmul.f32 %v2466, %v2494
  %v2499 = vmul.f32 %v2467, %v2495
  %v2500 = vmul.f32 %v2468, %v2496
  %v2501 = vmul.f32 %v2469, %v2497
  %v2503 = vlaneseq
  %v2504 = vshrl.u32 %v2503, 7
  %v2505 = vsub.s32 0, %v2504
  %v2506 = vrot.slane %v2447, %v2505
  %v2508 = vmul.f32 %v2498, %v2506
  %v2509 = vmul.f32 %v2499, %v2506
  %v2510 = vmul.f32 %v2500, %v2506
  %v2511 = vmul.f32 %v2501, %v2506
  %v2513 = vlaneseq
  %v2514 = vshrl.u32 %v2513, 7
  %v2515 = vsub.s32 0, %v2514
  %v2516 = vrot.slane %v2449, %v2515
  %v2518 = vadd.f32 %v2508, %v2516
  %v2519 = vadd.f32 %v2509, %v2516
  %v2520 = vadd.f32 %v2510, %v2516
  %v2521 = vadd.f32 %v2511, %v2516
  %s2522 = scalar_lea.vmem %s12, 16
  %v2523 = vld [vmem:[%s2522] sm:$0xf]
  %v2524 = vld [vmem:[%s2522 + $0x4] sm:$0xf]
  %v2525 = vld [vmem:[%s2522 + $0x8] sm:$0xf]
  %v2526 = vld [vmem:[%s2522 + $0xc] sm:$0xf]
  %v2527 = vpack.c.bf16 %v2519, %v2518
  %v2528 = vpack.c.bf16 %v2521, %v2520
  %s2529 = scalar_lea.vmem %s13, 1
  %v2530 = vld [vmem:[%s2529] sm:$0x1]
  %v2532 = vlaneseq
  %v2533 = vshrl.u32 %v2532, 7
  %v2534 = vsub.s32 0, %v2533
  %v2535 = vrot.slane %v2530, %v2534
  %v2541 = vunpack.c.l.b16 %v2523
  %v2542 = vunpack.c.l.b16 %v2524
  %v2543 = vunpack.c.l.b16 %v2525
  %v2544 = vunpack.c.l.b16 %v2526
  %v2545 = vpack.c.b16 %v2542, %v2541
  %v2546 = vpack.c.b16 %v2544, %v2543
  %v2550 = vsel %vm83, %v2527, 0
  %v2553 = vsel %vm83, %v2528, 0
  %2555 = vmatprep.subr.bf16.mxu0 0
  %2556 = vmatpush1.bf16.msra.mxu0 0
  %2557 = vmatprep.subr.bf16.mxu0 0
  %2558 = vmatpush1.bf16.msra.mxu0 0
  %2559 = vmatprep.subr.bf16.mxu0 0
  %2560 = vmatpush1.bf16.msra.mxu0 0
  %2561 = vmatprep.subr.bf16.mxu0 0
  %2562 = vmatpush1.bf16.msra.mxu0 0
  %2563 = vmatprep.subr.bf16.mxu0 0
  %2564 = vmatpush1.bf16.msra.mxu0 0
  %2565 = vmatprep.subr.bf16.mxu0 0
  %2566 = vmatpush1.bf16.msra.mxu0 0
  %2567 = vmatprep.subr.bf16.mxu0 0
  %2568 = vmatpush1.bf16.msra.mxu0 %v2546
  %2569 = vmatprep.subr.bf16.mxu0 0
  %2570 = vmatpush1.bf16.msra.mxu0 %v2545
  %2571 = vmatprep.subr.bf16.mxu0 0
  %2572 = vmatpush2.bf16.msra.mxu0 0
  %2573 = vmatprep.subr.bf16.mxu0 0
  %2574 = vmatpush2.bf16.msra.mxu0 0
  %2575 = vmatprep.subr.bf16.mxu0 0
  %2576 = vmatpush2.bf16.msra.mxu0 0
  %2577 = vmatprep.subr.bf16.mxu0 0
  %2578 = vmatpush2.bf16.msra.mxu0 0
  %2579 = vmatprep.subr.bf16.mxu0 0
  %2580 = vmatpush2.bf16.msra.mxu0 0
  %2581 = vmatprep.subr.bf16.mxu0 0
  %2582 = vmatpush2.bf16.msra.mxu0 0
  %2583 = vmatprep.subr.bf16.mxu0 0
  %2584 = vmatpush2.bf16.msra.mxu0 0
  %2585 = vmatprep.subr.bf16.mxu0 0
  %2586 = vmatpush2.bf16.msra.mxu0 0
  %2587 = vmatprep.mubr.bf16.mxu0 0
  %2588 = vmatmul.mubr.bf16.gmra.mxu0 %v2550
  %v2589 = vpop.f32.mrf.mxu0
  %v2590 = vadd.f32 %v2535, %v2589
  %v2591 = vpop.f32.mrf.mxu0
  %v2592 = vpop.f32.mrf.mxu0
  %v2593 = vadd.f32 %v2535, %v2592
  %v2594 = vpop.f32.mrf.mxu0
  %2595 = vmatprep.mubr.bf16.mxu0 0
  %2596 = vmatmul.mubr.bf16.gmra.mxu0 %v2553
  %v2597 = vpop.f32.mrf.mxu0
  %v2598 = vadd.f32 %v2535, %v2597
  %v2599 = vpop.f32.mrf.mxu0
  %v2600 = vpop.f32.mrf.mxu0
  %v2601 = vadd.f32 %v2535, %v2600
  %v2602 = vpop.f32.mrf.mxu0
  %2603 = vdwg.mxu0
  %v2604 = vmul.f32 %v2590, 0.5
  %v2605 = vmul.f32 %v2593, 0.5
  %v2606 = vmul.f32 %v2598, 0.5
  %v2607 = vmul.f32 %v2601, 0.5
  %v2608 = vmul.f32 %v2590, 0.70710677
  %v2609 = vmul.f32 %v2593, 0.70710677
  %v2610 = vmul.f32 %v2598, 0.70710677
  %v2611 = vmul.f32 %v2601, 0.70710677
  %v2612 = verf.f32.pop %v2608
  %v2613 = verf.f32.pop %v2609
  %v2614 = verf.f32.pop %v2610
  %v2615 = verf.f32.pop %v2611
  %v2616 = vadd.f32 %v2612, 1.0
  %v2617 = vadd.f32 %v2613, 1.0
  %v2618 = vadd.f32 %v2614, 1.0
  %v2619 = vadd.f32 %v2615, 1.0
  %v2620 = vmul.f32 %v2604, %v2616
  %v2621 = vmul.f32 %v2605, %v2617
  %v2622 = vmul.f32 %v2606, %v2618
  %v2623 = vmul.f32 %v2607, %v2619
  %s2624 = scalar_lea.vmem %s14, 32
  %v2625 = vld [vmem:[%s2624] sm:$0xf]
  %v2626 = vld [vmem:[%s2624 + $0x4] sm:$0xf]
  %v2627 = vld [vmem:[%s2624 + $0x8] sm:$0xf]
  %v2628 = vld [vmem:[%s2624 + $0xc] sm:$0xf]
  %v2629 = vld [vmem:[%s2624 + $0x10] sm:$0xf]
  %v2630 = vld [vmem:[%s2624 + $0x14] sm:$0xf]
  %v2631 = vld [vmem:[%s2624 + $0x18] sm:$0xf]
  %v2632 = vld [vmem:[%s2624 + $0x1c] sm:$0xf]
  %v2633 = vpack.c.bf16 %v2621, %v2620
  %v2634 = vpack.c.bf16 %v2623, %v2622
  %s2635 = scalar_lea.vmem %s15, 1
  %v2636 = vld [vmem:[%s2635] sm:$0x1]
  %v2638 = vlaneseq
  %v2639 = vshrl.u32 %v2638, 7
  %v2640 = vsub.s32 0, %v2639
  %v2641 = vrot.slane %v2636, %v2640
  %v2651 = vunpack.c.l.b16 %v2625
  %v2652 = vunpack.c.l.b16 %v2626
  %v2653 = vunpack.c.l.b16 %v2627
  %v2654 = vunpack.c.l.b16 %v2628
  %v2655 = vunpack.c.l.b16 %v2629
  %v2656 = vunpack.c.l.b16 %v2630
  %v2657 = vunpack.c.l.b16 %v2631
  %v2658 = vunpack.c.l.b16 %v2632
  %v2659 = vpack.c.b16 %v2652, %v2651
  %v2660 = vpack.c.b16 %v2654, %v2653
  %v2661 = vpack.c.b16 %v2656, %v2655
  %v2662 = vpack.c.b16 %v2658, %v2657
  %v2668 = vsel %vm1418, %v2633, 0
  %v2671 = vsel %vm1418, %v2634, 0
  %2673 = vmatprep.subr.bf16.mxu0 0
  %2674 = vmatpush1.bf16.msra.mxu0 0
  %2675 = vmatprep.subr.bf16.mxu0 0
  %2676 = vmatpush1.bf16.msra.mxu0 0
  %2677 = vmatprep.subr.bf16.mxu0 0
  %2678 = vmatpush1.bf16.msra.mxu0 0
  %2679 = vmatprep.subr.bf16.mxu0 0
  %2680 = vmatpush1.bf16.msra.mxu0 0
  %2681 = vmatprep.subr.bf16.mxu0 0
  %2682 = vmatpush1.bf16.msra.mxu0 %v2662
  %2683 = vmatprep.subr.bf16.mxu0 0
  %2684 = vmatpush1.bf16.msra.mxu0 %v2661
  %2685 = vmatprep.subr.bf16.mxu0 0
  %2686 = vmatpush1.bf16.msra.mxu0 %v2660
  %2687 = vmatprep.subr.bf16.mxu0 0
  %2688 = vmatpush1.bf16.msra.mxu0 %v2659
  %2689 = vmatprep.subr.bf16.mxu0 0
  %2690 = vmatpush2.bf16.msra.mxu0 0
  %2691 = vmatprep.subr.bf16.mxu0 0
  %2692 = vmatpush2.bf16.msra.mxu0 0
  %2693 = vmatprep.subr.bf16.mxu0 0
  %2694 = vmatpush2.bf16.msra.mxu0 0
  %2695 = vmatprep.subr.bf16.mxu0 0
  %2696 = vmatpush2.bf16.msra.mxu0 0
  %2697 = vmatprep.subr.bf16.mxu0 0
  %2698 = vmatpush2.bf16.msra.mxu0 0
  %2699 = vmatprep.subr.bf16.mxu0 0
  %2700 = vmatpush2.bf16.msra.mxu0 0
  %2701 = vmatprep.subr.bf16.mxu0 0
  %2702 = vmatpush2.bf16.msra.mxu0 0
  %2703 = vmatprep.subr.bf16.mxu0 0
  %2704 = vmatpush2.bf16.msra.mxu0 0
  %2705 = vmatprep.mubr.bf16.mxu0 0
  %2706 = vmatmul.mubr.bf16.gmra.mxu0 %v2668
  %v2707 = vpop.f32.mrf.mxu0
  %v2708 = vadd.f32 %v2641, %v2707
  %v2709 = vpop.f32.mrf.mxu0
  %v2710 = vpop.f32.mrf.mxu0
  %v2711 = vadd.f32 %v2641, %v2710
  %v2712 = vpop.f32.mrf.mxu0
  %2713 = vmatprep.mubr.bf16.mxu0 0
  %2714 = vmatmul.mubr.bf16.gmra.mxu0 %v2671
  %v2715 = vpop.f32.mrf.mxu0
  %v2716 = vadd.f32 %v2641, %v2715
  %v2717 = vpop.f32.mrf.mxu0
  %v2718 = vpop.f32.mrf.mxu0
  %v2719 = vadd.f32 %v2641, %v2718
  %v2720 = vpop.f32.mrf.mxu0
  %2721 = vdwg.mxu0
  %v2722 = vadd.f32 %v2708, %v2518
  %v2723 = vadd.f32 %v2711, %v2519
  %v2724 = vadd.f32 %v2716, %v2520
  %v2725 = vadd.f32 %v2719, %v2521
  %s2726 = scalar_lea.vmem %s16, 1
  %v2727 = vld [vmem:[%s2726] sm:$0x1]
  %s2728 = scalar_lea.vmem %s17, 1
  %v2729 = vld [vmem:[%s2728] sm:$0x1]
  %v2730 = vsel %vm83, %v2722, 0.0
  %2731 = vadd.xlane.f32.xlu0 %v2730
  %v2732 = vpop.xlane.xlu0 %2731
  %v2733 = vsel %vm83, %v2723, 0.0
  %2734 = vadd.xlane.f32.xlu0 %v2733
  %v2735 = vpop.xlane.xlu0 %2734
  %v2736 = vsel %vm83, %v2724, 0.0
  %2737 = vadd.xlane.f32.xlu0 %v2736
  %v2738 = vpop.xlane.xlu0 %2737
  %v2739 = vsel %vm83, %v2725, 0.0
  %2740 = vadd.xlane.f32.xlu0 %v2739
  %v2741 = vpop.xlane.xlu0 %2740
  %v2742 = vmul.f32 %v2732, %v96
  %v2743 = vmul.f32 %v2735, %v96
  %v2744 = vmul.f32 %v2738, %v96
  %v2745 = vmul.f32 %v2741, %v96
  %v2746 = vsub.f32 %v2722, %v2742
  %v2747 = vsub.f32 %v2723, %v2743
  %v2748 = vsub.f32 %v2724, %v2744
  %v2749 = vsub.f32 %v2725, %v2745
  %v2750 = vmul.f32 %v2746, %v2746
  %v2751 = vmul.f32 %v2747, %v2747
  %v2752 = vmul.f32 %v2748, %v2748
  %v2753 = vmul.f32 %v2749, %v2749
  %v2754 = vsel %vm83, %v2750, 0.0
  %2755 = vadd.xlane.f32.xlu0 %v2754
  %v2756 = vpop.xlane.xlu0 %2755
  %v2757 = vsel %vm83, %v2751, 0.0
  %2758 = vadd.xlane.f32.xlu0 %v2757
  %v2759 = vpop.xlane.xlu0 %2758
  %v2760 = vsel %vm83, %v2752, 0.0
  %2761 = vadd.xlane.f32.xlu0 %v2760
  %v2762 = vpop.xlane.xlu0 %2761
  %v2763 = vsel %vm83, %v2753, 0.0
  %2764 = vadd.xlane.f32.xlu0 %v2763
  %v2765 = vpop.xlane.xlu0 %2764
  %v2766 = vmul.f32 %v2756, %v96
  %v2767 = vmul.f32 %v2759, %v96
  %v2768 = vmul.f32 %v2762, %v96
  %v2769 = vmul.f32 %v2765, %v96
  %v2770 = vadd.f32 %v2766, 1e-12
  %v2771 = vadd.f32 %v2767, 1e-12
  %v2772 = vadd.f32 %v2768, 1e-12
  %v2773 = vadd.f32 %v2769, 1e-12
  %v2774 = vrsqrt.pop %v2770
  %v2775 = vrsqrt.pop %v2771
  %v2776 = vrsqrt.pop %v2772
  %v2777 = vrsqrt.pop %v2773
  %v2778 = vmul.f32 %v2746, %v2774
  %v2779 = vmul.f32 %v2747, %v2775
  %v2780 = vmul.f32 %v2748, %v2776
  %v2781 = vmul.f32 %v2749, %v2777
  %v2783 = vlaneseq
  %v2784 = vshrl.u32 %v2783, 7
  %v2785 = vsub.s32 0, %v2784
  %v2786 = vrot.slane %v2727, %v2785
  %v2788 = vmul.f32 %v2778, %v2786
  %v2789 = vmul.f32 %v2779, %v2786
  %v2790 = vmul.f32 %v2780, %v2786
  %v2791 = vmul.f32 %v2781, %v2786
  %v2793 = vlaneseq
  %v2794 = vshrl.u32 %v2793, 7
  %v2795 = vsub.s32 0, %v2794
  %v2796 = vrot.slane %v2729, %v2795
  %v2798 = vadd.f32 %v2788, %v2796
  %v2799 = vadd.f32 %v2789, %v2796
  %v2800 = vadd.f32 %v2790, %v2796
  %v2801 = vadd.f32 %v2791, %v2796
  %v2802 = vpack.c.bf16 %v2799, %v2798
  %v2803 = vpack.c.bf16 %v2801, %v2800
  %v2805 = vsel %vm83, %v296, 0
  %2807 = vmatprep.subr.bf16.mxu0 0
  %2808 = vmatpush1.bf16.msra.mxu0 0
  %2809 = vmatprep.subr.bf16.mxu0 0
  %2810 = vmatpush1.bf16.msra.mxu0 0
  %2811 = vmatprep.subr.bf16.mxu0 0
  %2812 = vmatpush1.bf16.msra.mxu0 0
  %2813 = vmatprep.subr.bf16.mxu0 0
  %2814 = vmatpush1.bf16.msra.mxu0 0
  %2815 = vmatprep.subr.bf16.mxu0 0
  %2816 = vmatpush1.bf16.msra.mxu0 0
  %2817 = vmatprep.subr.bf16.mxu0 0
  %2818 = vmatpush1.bf16.msra.mxu0 0
  %2819 = vmatprep.subr.bf16.mxu0 0
  %2820 = vmatpush1.bf16.msra.mxu0 %v2803
  %2821 = vmatprep.subr.bf16.mxu0 0
  %2822 = vmatpush1.bf16.msra.mxu0 %v2802
  %2823 = vmatprep.subr.bf16.mxu0 0
  %2824 = vmatpush2.bf16.msra.mxu0 0
  %2825 = vmatprep.subr.bf16.mxu0 0
  %2826 = vmatpush2.bf16.msra.mxu0 0
  %2827 = vmatprep.subr.bf16.mxu0 0
  %2828 = vmatpush2.bf16.msra.mxu0 0
  %2829 = vmatprep.subr.bf16.mxu0 0
  %2830 = vmatpush2.bf16.msra.mxu0 0
  %2831 = vmatprep.subr.bf16.mxu0 0
  %2832 = vmatpush2.bf16.msra.mxu0 0
  %2833 = vmatprep.subr.bf16.mxu0 0
  %2834 = vmatpush2.bf16.msra.mxu0 0
  %2835 = vmatprep.subr.bf16.mxu0 0
  %2836 = vmatpush2.bf16.msra.mxu0 0
  %2837 = vmatprep.subr.bf16.mxu0 0
  %2838 = vmatpush2.bf16.msra.mxu0 0
  %2839 = vmatprep.mubr.bf16.mxu0 0
  %2840 = vmatmul.mubr.bf16.gmra.mxu0 %v2805
  %v2841 = vpop.f32.mrf.mxu0
  %v2842 = vadd.f32 0.0, %v2841
  %v2843 = vpop.f32.mrf.mxu0
  %v2844 = vpop.f32.mrf.mxu0
  %v2845 = vpop.f32.mrf.mxu0
  %2846 = vdwg.mxu0
  %v2847 = vld [vmem:[%s18] sm:$0xf]
  %v2848 = vld [vmem:[%s18 + $0x4] sm:$0xf]
  %v2849 = vld [vmem:[%s18 + $0x8] sm:$0xf]
  %v2850 = vld [vmem:[%s18 + $0xc] sm:$0xf]
  %v2851 = vpack.c.bf16 %v2842, %v2842
  %v2852 = vld [vmem:[%s19] sm:$0x1]
  %v2854 = vlaneseq
  %v2855 = vshrl.u32 %v2854, 7
  %v2856 = vsub.s32 0, %v2855
  %v2857 = vrot.slane %v2852, %v2856
  %v2863 = vunpack.c.l.b16 %v2847
  %v2864 = vunpack.c.l.b16 %v2848
  %v2865 = vunpack.c.l.b16 %v2849
  %v2866 = vunpack.c.l.b16 %v2850
  %v2867 = vpack.c.b16 %v2864, %v2863
  %v2868 = vpack.c.b16 %v2866, %v2865
  %v2872 = vsel %vm83, %v2851, 0
  %2874 = vmatprep.subr.bf16.mxu0 0
  %2875 = vmatpush1.bf16.msra.mxu0 0
  %2876 = vmatprep.subr.bf16.mxu0 0
  %2877 = vmatpush1.bf16.msra.mxu0 0
  %2878 = vmatprep.subr.bf16.mxu0 0
  %2879 = vmatpush1.bf16.msra.mxu0 0
  %2880 = vmatprep.subr.bf16.mxu0 0
  %2881 = vmatpush1.bf16.msra.mxu0 0
  %2882 = vmatprep.subr.bf16.mxu0 0
  %2883 = vmatpush1.bf16.msra.mxu0 0
  %2884 = vmatprep.subr.bf16.mxu0 0
  %2885 = vmatpush1.bf16.msra.mxu0 0
  %2886 = vmatprep.subr.bf16.mxu0 0
  %2887 = vmatpush1.bf16.msra.mxu0 %v2868
  %2888 = vmatprep.subr.bf16.mxu0 0
  %2889 = vmatpush1.bf16.msra.mxu0 %v2867
  %2890 = vmatprep.subr.bf16.mxu0 0
  %2891 = vmatpush2.bf16.msra.mxu0 0
  %2892 = vmatprep.subr.bf16.mxu0 0
  %2893 = vmatpush2.bf16.msra.mxu0 0
  %2894 = vmatprep.subr.bf16.mxu0 0
  %2895 = vmatpush2.bf16.msra.mxu0 0
  %2896 = vmatprep.subr.bf16.mxu0 0
  %2897 = vmatpush2.bf16.msra.mxu0 0
  %2898 = vmatprep.subr.bf16.mxu0 0
  %2899 = vmatpush2.bf16.msra.mxu0 0
  %2900 = vmatprep.subr.bf16.mxu0 0
  %2901 = vmatpush2.bf16.msra.mxu0 0
  %2902 = vmatprep.subr.bf16.mxu0 0
  %2903 = vmatpush2.bf16.msra.mxu0 0
  %2904 = vmatprep.subr.bf16.mxu0 0
  %2905 = vmatpush2.bf16.msra.mxu0 0
  %2906 = vmatprep.mubr.bf16.mxu0 0
  %2907 = vmatmul.mubr.bf16.gmra.mxu0 %v2872
  %v2908 = vpop.f32.mrf.mxu0
  %v2909 = vadd.f32 %v2857, %v2908
  %v2910 = vpop.f32.mrf.mxu0
  %v2911 = vpop.f32.mrf.mxu0
  %v2912 = vpop.f32.mrf.mxu0
  %2913 = vdwg.mxu0
  %2914 = vst [vmem:[%s20] sm:$0xf] %v2909
  // Predicated region
  $region82: #{query_doc_model.1} parent=0 // pred_check
    _
  $region83: #{query_doc_model.1} parent=0 // pred_check_branch
    %2916 = sbr.rel (0) target = $region85
  $region84: #{query_doc_model.1} parent=0 // pred_region
    _
  $region85: #{query_doc_model.1} parent=0 // pred_fallthru
    _
  // Predicated region
  $region86: #{query_doc_model.1} parent=0 // pred_check
    _
  $region87: #{query_doc_model.1} parent=0 // pred_check_branch
    %2918 = sbr.rel (0) target = $region89
  $region88: #{query_doc_model.1} parent=0 // pred_region
    _
  $region89: #{query_doc_model.1} parent=0 // pred_fallthru
    _

</llo_original>
